<compile_context>
chip_gen: v6e
topology: v6e:2x2x1
jax: 0.10.0
libtpu: 0.0.40
codegen_flags: <defaults>
</compile_context>

<pallas_src>
import functools

import jax
import jax.numpy as jnp
import numpy as np
from jax.experimental import pallas as pl
from jax.experimental.pallas import tpu as pltpu

# Conservative everywhere: <= scoped default on v6e/v7x, far below physical VMEM.
VMEM_LIMIT_BYTES = 32 * 1024 * 1024


def _round_up(x, m):
    return (x + m - 1) // m * m


# ----------------------------------------------------------------------------
# Pallas kernels
# ----------------------------------------------------------------------------
def _mxu_matmul_bias_act_kernel(x_ref, w_ref, b_ref, o_ref, *, apply_relu):
    # x_ref: (TM, K) bf16, w_ref: (K, N) bf16, b_ref: (1, N) f32 -> o_ref: (TM, N) f32
    acc = jnp.dot(x_ref[...], w_ref[...], preferred_element_type=jnp.float32)
    acc = acc + b_ref[...]
    if apply_relu:
        acc = jnp.maximum(acc, 0.0)
    o_ref[...] = acc


def _vpu_small_k_matmul_kernel(x_ref, w_ref, b_ref, o_ref, *, apply_relu):
    # Tiny contraction (K <= 16, conv1): keep it off the MXU; K broadcast-MACs on VPU.
    p = x_ref[...]                               # (TM, K) f32
    w = w_ref[...]                               # (K, N)  f32
    acc = b_ref[...] + p[:, 0:1] * w[0:1, :]     # (TM, N) f32
    for j in range(1, p.shape[1]):               # static unroll (K is static)
        acc = acc + p[:, j:j + 1] * w[j:j + 1, :]
    if apply_relu:
        acc = jnp.maximum(acc, 0.0)
    o_ref[...] = acc


def _fused_fc_kernel(x_ref, w1_ref, b1_ref, w2_ref, b2_ref, o_ref):
    # fc1 (bf16 MXU, f32 acc) + ReLU + fc2 (tiny f32 matmul, lane-dense 128-wide out).
    h = jnp.dot(x_ref[...], w1_ref[...], preferred_element_type=jnp.float32)
    h = jnp.maximum(h + b1_ref[...], 0.0)
    o_ref[...] = jnp.dot(h, w2_ref[...], preferred_element_type=jnp.float32) + b2_ref[...]


# ----------------------------------------------------------------------------
# Row-tiled pallas_call wrapper (x and out tiled over M, everything else resident)
# ----------------------------------------------------------------------------
def _call_row_tiled(kernel, x, others, n_out, *, tm_cap):
    M, K = x.shape
    tm = min(tm_cap, _round_up(M, 16))           # 16-row alignment (bf16-safe)
    Mp = _round_up(M, tm)
    if Mp != M:
        x = jnp.pad(x, ((0, Mp - M), (0, 0)))

    in_specs = [pl.BlockSpec((tm, K), lambda i: (i, 0))]
    for o in others:
        in_specs.append(pl.BlockSpec(o.shape, lambda i, nd=o.ndim: (0,) * nd))

    out = pl.pallas_call(
        kernel,
        out_shape=jax.ShapeDtypeStruct((Mp, n_out), jnp.float32),
        grid=(pl.cdiv(Mp, tm),),
        in_specs=in_specs,
        out_specs=pl.BlockSpec((tm, n_out), lambda i: (i, 0)),
        compiler_params=pltpu.CompilerParams(
            dimension_semantics=("parallel",),
            vmem_limit_bytes=VMEM_LIMIT_BYTES),
    )(x, *others)
    return out[:M] if Mp != M else out


def matmul_bias_act(x, w, b, *, apply_relu, tm_cap=512):
    """y = act(x @ w + b).  Tiny-K contractions -> VPU kernel; otherwise bf16 MXU."""
    K, N = w.shape
    if K <= 16:
        kernel = functools.partial(_vpu_small_k_matmul_kernel, apply_relu=apply_relu)
        return _call_row_tiled(kernel, x.astype(jnp.float32),
                               (w.astype(jnp.float32), b), N, tm_cap=tm_cap)
    kernel = functools.partial(_mxu_matmul_bias_act_kernel, apply_relu=apply_relu)
    return _call_row_tiled(kernel, x.astype(jnp.bfloat16),
                           (w.astype(jnp.bfloat16), b), N, tm_cap=tm_cap)


def fused_fc(x, w1, b1, w2, b2, *, tm_cap=256):
    """relu(x @ w1 + b1) @ w2 + b2 in one pallas_call; w2/b2 pre-padded to N=128."""
    return _call_row_tiled(_fused_fc_kernel, x.astype(jnp.bfloat16),
                           (w1, b1, w2, b2), w2.shape[1], tm_cap=tm_cap)


# ----------------------------------------------------------------------------
# im2col glue (NHWC, no transposes; just pad + strided slice + concat)
# ----------------------------------------------------------------------------
def im2col_nhwc(x, k, stride, pad, dtype):
    """x: (B, H, W, C) -> patches (B*Ho*Wo, k*k*C) with column order (kh, kw, C)."""
    B, H, W, C = x.shape
    xp = jnp.pad(x.astype(dtype), ((0, 0), (pad, pad), (pad, pad), (0, 0)))
    Ho = (H + 2 * pad - k) // stride + 1
    Wo = (W + 2 * pad - k) // stride + 1
    cols = []
    for ki in range(k):
        for kj in range(k):
            cols.append(xp[:, ki:ki + stride * Ho:stride, kj:kj + stride * Wo:stride, :])
    patches = jnp.concatenate(cols, axis=-1)             # (B, Ho, Wo, k*k*C)
    return patches.reshape(B * Ho * Wo, k * k * C), Ho, Wo


def conv2d_nhwc(x, w_mat, b_row, *, k, stride, pad, apply_relu=True, tm_cap=512):
    """PyTorch Conv2d semantics in NHWC. w_mat: (k*k*Cin, Cout), b_row: (1, Cout)."""
    B = x.shape[0]
    in_dtype = jnp.float32 if w_mat.shape[0] <= 16 else jnp.bfloat16
    patches, Ho, Wo = im2col_nhwc(x, k, stride, pad, in_dtype)
    y = matmul_bias_act(patches, w_mat, b_row, apply_relu=apply_relu, tm_cap=tm_cap)
    return y.reshape(B, Ho, Wo, w_mat.shape[1])


# ----------------------------------------------------------------------------
# Parameters (PyTorch layout) and one-time conversion to kernel-friendly layout
# ----------------------------------------------------------------------------
def init_params(key):
    ks = jax.random.split(key, 10)

    def w(k, shape, fan_in):
        bound = 1.0 / np.sqrt(fan_in)
        return jax.random.uniform(k, shape, jnp.float32, -bound, bound)

    return {
        "conv1_w": w(ks[0], (32, 1, 3, 3), 1 * 9),
        "conv1_b": w(ks[1], (32,), 1 * 9),
        "conv2_w": w(ks[2], (64, 32, 3, 3), 32 * 9),
        "conv2_b": w(ks[3], (64,), 32 * 9),
        "conv3_w": w(ks[4], (128, 64, 3, 3), 64 * 9),
        "conv3_b": w(ks[5], (128,), 64 * 9),
        "fc1_w": w(ks[6], (128, 2048), 2048),
        "fc1_b": w(ks[7], (128,), 2048),
        "fc2_w": w(ks[8], (10, 128), 128),
        "fc2_b": w(ks[9], (10,), 128),
    }


def prepare_params(p):
    """One-time conversion of PyTorch-layout params to kernel layouts (NHWC / matmul)."""
    def conv_w(w, dtype):  # (Cout, Cin, kh, kw) -> (kh*kw*Cin, Cout), cols (kh,kw,Cin)
        cout, cin, kh, kw = w.shape
        return w.transpose(2, 3, 1, 0).reshape(kh * kw * cin, cout).astype(dtype)

    kp = {
        "conv1_w": conv_w(p["conv1_w"], jnp.float32),      # (9, 32)   VPU path
        "conv1_b": p["conv1_b"].reshape(1, -1),
        "conv2_w": conv_w(p["conv2_w"], jnp.bfloat16),     # (288, 64) MXU path
        "conv2_b": p["conv2_b"].reshape(1, -1),
        "conv3_w": conv_w(p["conv3_w"], jnp.bfloat16),     # (576, 128)
        "conv3_b": p["conv3_b"].reshape(1, -1),
    }
    # fc1: absorb PyTorch's (C,H,W) flatten order into the weight columns so the
    # NHWC activation can be flattened directly in (H,W,C) order.
    w1 = p["fc1_w"].reshape(128, 128, 4, 4).transpose(0, 2, 3, 1).reshape(128, 2048)
    kp["fc1_w"] = w1.T.astype(jnp.bfloat16)                # (2048, 128)
    kp["fc1_b"] = p["fc1_b"].reshape(1, -1)
    # fc2: zero-pad N 10 -> 128 so the fused kernel writes a lane-dense output.
    kp["fc2_w"] = jnp.zeros((128, 128), jnp.float32).at[:, :10].set(p["fc2_w"].T)
    kp["fc2_b"] = jnp.zeros((1, 128), jnp.float32).at[:, :10].set(p["fc2_b"])
    return kp


# ----------------------------------------------------------------------------
# Net_eNTK forward
# ----------------------------------------------------------------------------
def net_entk_forward(kp, x):
    """x: (B, 1, 28, 28) f32 NCHW (as in PyTorch). Returns (B, 10) f32 logits."""
    B = x.shape[0]
    h = x.reshape(B, 28, 28, 1)      # NHWC; exact because Cin == 1
    h = conv2d_nhwc(h, kp["conv1_w"], kp["conv1_b"], k=3, stride=2, pad=1)  # (B,14,14,32)
    h = conv2d_nhwc(h, kp["conv2_w"], kp["conv2_b"], k=3, stride=2, pad=1)  # (B,7,7,64)
    h = conv2d_nhwc(h, kp["conv3_w"], kp["conv3_b"], k=3, stride=2, pad=1)  # (B,4,4,128)
    h = h.reshape(B, 2048)           # NHWC flatten; fc1_w columns were pre-permuted
    out = fused_fc(h, kp["fc1_w"], kp["fc1_b"], kp["fc2_w"], kp["fc2_b"])   # (B,128)
    return out[:, :10]


# ----------------------------------------------------------------------------
# References for correctness checking
# ----------------------------------------------------------------------------
def _ref_forward_f32(p, x):
    """Full-f32 PyTorch-semantics reference."""
    def conv(x, w, b, stride):
        y = jax.lax.conv_general_dilated(
            x, w, window_strides=(stride, stride), padding=((1, 1), (1, 1)),
            dimension_numbers=("NCHW", "OIHW", "NCHW"))
        return y + b[None, :, None, None]
    x = jax.nn.relu(conv(x, p["conv1_w"], p["conv1_b"], 2))
    x = jax.nn.relu(conv(x, p["conv2_w"], p["conv2_b"], 2))
    x = jax.nn.relu(conv(x, p["conv3_w"], p["conv3_b"], 2))
    x = x.reshape(x.shape[0], -1)
    x = jax.nn.relu(x @ p["fc1_w"].T + p["fc1_b"])
    return x @ p["fc2_w"].T + p["fc2_b"]


def _ref_forward_matched(p, x):
    """Reference with the same precision choices as the kernels (bf16 in, f32 acc)."""
    def conv(x, w, b, stride, dtype):
        y = jax.lax.conv_general_dilated(
            x.astype(dtype), w.astype(dtype),
            window_strides=(stride, stride), padding=((1, 1), (1, 1)),
            dimension_numbers=("NCHW", "OIHW", "NCHW"),
            preferred_element_type=jnp.float32)
        return y + b[None, :, None, None]
    x = jax.nn.relu(conv(x, p["conv1_w"], p["conv1_b"], 2, jnp.float32))
    x = jax.nn.relu(conv(x, p["conv2_w"], p["conv2_b"], 2, jnp.bfloat16))
    x = jax.nn.relu(conv(x, p["conv3_w"], p["conv3_b"], 2, jnp.bfloat16))
    x = x.reshape(x.shape[0], -1)
    h = jnp.dot(x.astype(jnp.bfloat16), p["fc1_w"].T.astype(jnp.bfloat16),
                preferred_element_type=jnp.float32)
    h = jax.nn.relu(h + p["fc1_b"])
    return h @ p["fc2_w"].T + p["fc2_b"]


if __name__ == "__main__":
    key = jax.random.PRNGKey(0)
    pkey, xkey = jax.random.split(key)
    params = init_params(pkey)
    kparams = prepare_params(params)
    # MNIST-shaped input: 28x28, 1 channel is required so the flatten is 2048.
    x = jax.random.normal(xkey, (2, 1, 28, 28), jnp.float32)

    fwd = jax.jit(net_entk_forward)
    out = jax.block_until_ready(fwd(kparams, x))
    assert out.shape == (2, 10) and out.dtype == jnp.float32

    # Tight check vs a precision-matched reference (same bf16 cast points, f32 acc).
    ref_m = jax.block_until_ready(_ref_forward_matched(params, x))
    np.testing.assert_allclose(np.asarray(out), np.asarray(ref_m), rtol=2e-3, atol=2e-3)
    # Loose check vs the full-f32 PyTorch-semantics reference (bf16 MXU inputs).
    ref_f = jax.block_until_ready(_ref_forward_f32(params, x))
    np.testing.assert_allclose(np.asarray(out), np.asarray(ref_f), rtol=5e-2, atol=5e-2)

    print("KERNEL_OK")
</pallas_src>

<mosaic_0001>
module attributes {stable_mosaic.version = 11 : i64} {
  func.func @_vpu_small_k_matmul_kernel(%arg0: i32, %arg1: memref<400x9xf32, #tpu.memory_space<vmem>>, %arg2: memref<9x32xf32, #tpu.memory_space<vmem>>, %arg3: memref<1x32xf32, #tpu.memory_space<vmem>>, %arg4: memref<400x32xf32, #tpu.memory_space<vmem>>) attributes {dimension_semantics = [#tpu.dimension_semantics<parallel>], iteration_bounds = array<i64: 1>, scalar_prefetch = 0 : i64, scratch_operands = 0 : i64, tpu.core_type = #tpu.core_type<tc>, window_params = [{transform_indices = @transform_0, window_bounds = array<i64: 400, 9>}, {pipeline_mode = #tpu.pipeline_mode<synchronous>, transform_indices = @transform_1, window_bounds = array<i64: 9, 32>}, {pipeline_mode = #tpu.pipeline_mode<synchronous>, transform_indices = @transform_2, window_bounds = array<i64: 1, 32>}, {transform_indices = @transform_3, window_bounds = array<i64: 400, 32>}]} {
    %c0 = arith.constant 0 : index
    %c0_0 = arith.constant 0 : index
    %0 = vector.load %arg1[%c0, %c0_0] : memref<400x9xf32, #tpu.memory_space<vmem>>, vector<400x9xf32>
    %c0_1 = arith.constant 0 : index
    %c0_2 = arith.constant 0 : index
    %1 = vector.load %arg2[%c0_1, %c0_2] : memref<9x32xf32, #tpu.memory_space<vmem>>, vector<9x32xf32>
    %c0_3 = arith.constant 0 : index
    %c0_4 = arith.constant 0 : index
    %2 = vector.load %arg3[%c0_3, %c0_4] : memref<1x32xf32, #tpu.memory_space<vmem>>, vector<1x32xf32>
    %3 = vector.extract_strided_slice %0 {offsets = [0, 0], sizes = [400, 1], strides = [1, 1]} : vector<400x9xf32> to vector<400x1xf32>
    %4 = vector.extract_strided_slice %1 {offsets = [0, 0], sizes = [1, 32], strides = [1, 1]} : vector<9x32xf32> to vector<1x32xf32>
    %5 = vector.broadcast %3 : vector<400x1xf32> to vector<400x32xf32>
    %6 = vector.broadcast %4 : vector<1x32xf32> to vector<400x32xf32>
    %7 = arith.mulf %5, %6 : vector<400x32xf32>
    %8 = vector.broadcast %2 : vector<1x32xf32> to vector<400x32xf32>
    %9 = arith.addf %8, %7 : vector<400x32xf32>
    %10 = vector.extract_strided_slice %0 {offsets = [0, 1], sizes = [400, 1], strides = [1, 1]} : vector<400x9xf32> to vector<400x1xf32>
    %11 = vector.extract_strided_slice %1 {offsets = [1, 0], sizes = [1, 32], strides = [1, 1]} : vector<9x32xf32> to vector<1x32xf32>
    %12 = vector.broadcast %10 : vector<400x1xf32> to vector<400x32xf32>
    %13 = vector.broadcast %11 : vector<1x32xf32> to vector<400x32xf32>
    %14 = arith.mulf %12, %13 : vector<400x32xf32>
    %15 = arith.addf %9, %14 : vector<400x32xf32>
    %16 = vector.extract_strided_slice %0 {offsets = [0, 2], sizes = [400, 1], strides = [1, 1]} : vector<400x9xf32> to vector<400x1xf32>
    %17 = vector.extract_strided_slice %1 {offsets = [2, 0], sizes = [1, 32], strides = [1, 1]} : vector<9x32xf32> to vector<1x32xf32>
    %18 = vector.broadcast %16 : vector<400x1xf32> to vector<400x32xf32>
    %19 = vector.broadcast %17 : vector<1x32xf32> to vector<400x32xf32>
    %20 = arith.mulf %18, %19 : vector<400x32xf32>
    %21 = arith.addf %15, %20 : vector<400x32xf32>
    %22 = vector.extract_strided_slice %0 {offsets = [0, 3], sizes = [400, 1], strides = [1, 1]} : vector<400x9xf32> to vector<400x1xf32>
    %23 = vector.extract_strided_slice %1 {offsets = [3, 0], sizes = [1, 32], strides = [1, 1]} : vector<9x32xf32> to vector<1x32xf32>
    %24 = vector.broadcast %22 : vector<400x1xf32> to vector<400x32xf32>
    %25 = vector.broadcast %23 : vector<1x32xf32> to vector<400x32xf32>
    %26 = arith.mulf %24, %25 : vector<400x32xf32>
    %27 = arith.addf %21, %26 : vector<400x32xf32>
    %28 = vector.extract_strided_slice %0 {offsets = [0, 4], sizes = [400, 1], strides = [1, 1]} : vector<400x9xf32> to vector<400x1xf32>
    %29 = vector.extract_strided_slice %1 {offsets = [4, 0], sizes = [1, 32], strides = [1, 1]} : vector<9x32xf32> to vector<1x32xf32>
    %30 = vector.broadcast %28 : vector<400x1xf32> to vector<400x32xf32>
    %31 = vector.broadcast %29 : vector<1x32xf32> to vector<400x32xf32>
    %32 = arith.mulf %30, %31 : vector<400x32xf32>
    %33 = arith.addf %27, %32 : vector<400x32xf32>
    %34 = vector.extract_strided_slice %0 {offsets = [0, 5], sizes = [400, 1], strides = [1, 1]} : vector<400x9xf32> to vector<400x1xf32>
    %35 = vector.extract_strided_slice %1 {offsets = [5, 0], sizes = [1, 32], strides = [1, 1]} : vector<9x32xf32> to vector<1x32xf32>
    %36 = vector.broadcast %34 : vector<400x1xf32> to vector<400x32xf32>
    %37 = vector.broadcast %35 : vector<1x32xf32> to vector<400x32xf32>
    %38 = arith.mulf %36, %37 : vector<400x32xf32>
    %39 = arith.addf %33, %38 : vector<400x32xf32>
    %40 = vector.extract_strided_slice %0 {offsets = [0, 6], sizes = [400, 1], strides = [1, 1]} : vector<400x9xf32> to vector<400x1xf32>
    %41 = vector.extract_strided_slice %1 {offsets = [6, 0], sizes = [1, 32], strides = [1, 1]} : vector<9x32xf32> to vector<1x32xf32>
    %42 = vector.broadcast %40 : vector<400x1xf32> to vector<400x32xf32>
    %43 = vector.broadcast %41 : vector<1x32xf32> to vector<400x32xf32>
    %44 = arith.mulf %42, %43 : vector<400x32xf32>
    %45 = arith.addf %39, %44 : vector<400x32xf32>
    %46 = vector.extract_strided_slice %0 {offsets = [0, 7], sizes = [400, 1], strides = [1, 1]} : vector<400x9xf32> to vector<400x1xf32>
    %47 = vector.extract_strided_slice %1 {offsets = [7, 0], sizes = [1, 32], strides = [1, 1]} : vector<9x32xf32> to vector<1x32xf32>
    %48 = vector.broadcast %46 : vector<400x1xf32> to vector<400x32xf32>
    %49 = vector.broadcast %47 : vector<1x32xf32> to vector<400x32xf32>
    %50 = arith.mulf %48, %49 : vector<400x32xf32>
    %51 = arith.addf %45, %50 : vector<400x32xf32>
    %52 = vector.extract_strided_slice %0 {offsets = [0, 8], sizes = [400, 1], strides = [1, 1]} : vector<400x9xf32> to vector<400x1xf32>
    %53 = vector.extract_strided_slice %1 {offsets = [8, 0], sizes = [1, 32], strides = [1, 1]} : vector<9x32xf32> to vector<1x32xf32>
    %54 = vector.broadcast %52 : vector<400x1xf32> to vector<400x32xf32>
    %55 = vector.broadcast %53 : vector<1x32xf32> to vector<400x32xf32>
    %56 = arith.mulf %54, %55 : vector<400x32xf32>
    %57 = arith.addf %51, %56 : vector<400x32xf32>
    %cst = arith.constant 0.000000e+00 : f32
    %58 = vector.broadcast %cst : f32 to vector<400x32xf32>
    %59 = arith.maximumf %57, %58 : vector<400x32xf32>
    %c0_5 = arith.constant 0 : index
    %c0_6 = arith.constant 0 : index
    %60 = vector.load %arg4[%c0_5, %c0_6] : memref<400x32xf32, #tpu.memory_space<vmem>>, vector<400x32xf32>
    tpu.vector_store %arg4[%c0_5, %c0_6], %59 {strides = array<i32>} : memref<400x32xf32, #tpu.memory_space<vmem>>, vector<400x32xf32>,
    return
  }
  func.func @transform_0(%arg0: i32) -> (i32, i32) {
    %c0_i32 = arith.constant 0 : i32
    %c0_i32_0 = arith.constant 0 : i32
    return %arg0, %c0_i32 : i32, i32
  }
  func.func @transform_1(%arg0: i32) -> (i32, i32) {
    %c0_i32 = arith.constant 0 : i32
    %c0_i32_0 = arith.constant 0 : i32
    %c0_i32_1 = arith.constant 0 : i32
    return %c0_i32, %c0_i32_0 : i32, i32
  }
  func.func @transform_2(%arg0: i32) -> (i32, i32) {
    %c0_i32 = arith.constant 0 : i32
    %c0_i32_0 = arith.constant 0 : i32
    %c0_i32_1 = arith.constant 0 : i32
    return %c0_i32, %c0_i32_0 : i32, i32
  }
  func.func @transform_3(%arg0: i32) -> (i32, i32) {
    %c0_i32 = arith.constant 0 : i32
    %c0_i32_0 = arith.constant 0 : i32
    return %arg0, %c0_i32 : i32, i32
  }
}

module attributes {stable_mosaic.version = 11 : i64} {
  func.func @_mxu_matmul_bias_act_kernel(%arg0: i32, %arg1: memref<112x288xbf16, #tpu.memory_space<vmem>>, %arg2: memref<288x64xbf16, #tpu.memory_space<vmem>>, %arg3: memref<1x64xf32, #tpu.memory_space<vmem>>, %arg4: memref<112x64xf32, #tpu.memory_space<vmem>>) attributes {dimension_semantics = [#tpu.dimension_semantics<parallel>], iteration_bounds = array<i64: 1>, scalar_prefetch = 0 : i64, scratch_operands = 0 : i64, tpu.core_type = #tpu.core_type<tc>, window_params = [{transform_indices = @transform_0, window_bounds = array<i64: 112, 288>}, {pipeline_mode = #tpu.pipeline_mode<synchronous>, transform_indices = @transform_1, window_bounds = array<i64: 288, 64>}, {pipeline_mode = #tpu.pipeline_mode<synchronous>, transform_indices = @transform_2, window_bounds = array<i64: 1, 64>}, {transform_indices = @transform_3, window_bounds = array<i64: 112, 64>}]} {
    %c0 = arith.constant 0 : index
    %c0_0 = arith.constant 0 : index
    %0 = vector.load %arg1[%c0, %c0_0] : memref<112x288xbf16, #tpu.memory_space<vmem>>, vector<112x288xbf16>
    %c0_1 = arith.constant 0 : index
    %c0_2 = arith.constant 0 : index
    %1 = vector.load %arg2[%c0_1, %c0_2] : memref<288x64xbf16, #tpu.memory_space<vmem>>, vector<288x64xbf16>
    %cst = arith.constant dense<0.000000e+00> : vector<112x64xf32>
    %2 = tpu.matmul %0, %1, %cst {dimension_numbers = #tpu.dot_dimension_numbers<[1], [0], [0], [1], [0, 0, 1, 1], [], []>} : vector<112x288xbf16>, vector<288x64xbf16>, vector<112x64xf32> -> vector<112x64xf32>
    %c0_3 = arith.constant 0 : index
    %c0_4 = arith.constant 0 : index
    %3 = vector.load %arg3[%c0_3, %c0_4] : memref<1x64xf32, #tpu.memory_space<vmem>>, vector<1x64xf32>
    %4 = vector.broadcast %3 : vector<1x64xf32> to vector<112x64xf32>
    %5 = arith.addf %2, %4 : vector<112x64xf32>
    %cst_5 = arith.constant 0.000000e+00 : f32
    %6 = vector.broadcast %cst_5 : f32 to vector<112x64xf32>
    %7 = arith.maximumf %5, %6 : vector<112x64xf32>
    %c0_6 = arith.constant 0 : index
    %c0_7 = arith.constant 0 : index
    %8 = vector.load %arg4[%c0_6, %c0_7] : memref<112x64xf32, #tpu.memory_space<vmem>>, vector<112x64xf32>
    tpu.vector_store %arg4[%c0_6, %c0_7], %7 {strides = array<i32>} : memref<112x64xf32, #tpu.memory_space<vmem>>, vector<112x64xf32>,
    return
  }
  func.func @transform_0(%arg0: i32) -> (i32, i32) {
    %c0_i32 = arith.constant 0 : i32
    %c0_i32_0 = arith.constant 0 : i32
    return %arg0, %c0_i32 : i32, i32
  }
  func.func @transform_1(%arg0: i32) -> (i32, i32) {
    %c0_i32 = arith.constant 0 : i32
    %c0_i32_0 = arith.constant 0 : i32
    %c0_i32_1 = arith.constant 0 : i32
    return %c0_i32, %c0_i32_0 : i32, i32
  }
  func.func @transform_2(%arg0: i32) -> (i32, i32) {
    %c0_i32 = arith.constant 0 : i32
    %c0_i32_0 = arith.constant 0 : i32
    %c0_i32_1 = arith.constant 0 : i32
    return %c0_i32, %c0_i32_0 : i32, i32
  }
  func.func @transform_3(%arg0: i32) -> (i32, i32) {
    %c0_i32 = arith.constant 0 : i32
    %c0_i32_0 = arith.constant 0 : i32
    return %arg0, %c0_i32 : i32, i32
  }
}

module attributes {stable_mosaic.version = 11 : i64} {
  func.func @_mxu_matmul_bias_act_kernel(%arg0: i32, %arg1: memref<32x576xbf16, #tpu.memory_space<vmem>>, %arg2: memref<576x128xbf16, #tpu.memory_space<vmem>>, %arg3: memref<1x128xf32, #tpu.memory_space<vmem>>, %arg4: memref<32x128xf32, #tpu.memory_space<vmem>>) attributes {dimension_semantics = [#tpu.dimension_semantics<parallel>], iteration_bounds = array<i64: 1>, scalar_prefetch = 0 : i64, scratch_operands = 0 : i64, tpu.core_type = #tpu.core_type<tc>, window_params = [{transform_indices = @transform_0, window_bounds = array<i64: 32, 576>}, {pipeline_mode = #tpu.pipeline_mode<synchronous>, transform_indices = @transform_1, window_bounds = array<i64: 576, 128>}, {pipeline_mode = #tpu.pipeline_mode<synchronous>, transform_indices = @transform_2, window_bounds = array<i64: 1, 128>}, {transform_indices = @transform_3, window_bounds = array<i64: 32, 128>}]} {
    %c0 = arith.constant 0 : index
    %c0_0 = arith.constant 0 : index
    %0 = vector.load %arg1[%c0, %c0_0] : memref<32x576xbf16, #tpu.memory_space<vmem>>, vector<32x576xbf16>
    %c0_1 = arith.constant 0 : index
    %c0_2 = arith.constant 0 : index
    %1 = vector.load %arg2[%c0_1, %c0_2] : memref<576x128xbf16, #tpu.memory_space<vmem>>, vector<576x128xbf16>
    %cst = arith.constant dense<0.000000e+00> : vector<32x128xf32>
    %2 = tpu.matmul %0, %1, %cst {dimension_numbers = #tpu.dot_dimension_numbers<[1], [0], [0], [1], [0, 0, 1, 1], [], []>} : vector<32x576xbf16>, vector<576x128xbf16>, vector<32x128xf32> -> vector<32x128xf32>
    %c0_3 = arith.constant 0 : index
    %c0_4 = arith.constant 0 : index
    %3 = vector.load %arg3[%c0_3, %c0_4] : memref<1x128xf32, #tpu.memory_space<vmem>>, vector<1x128xf32>
    %4 = vector.broadcast %3 : vector<1x128xf32> to vector<32x128xf32>
    %5 = arith.addf %2, %4 : vector<32x128xf32>
    %cst_5 = arith.constant 0.000000e+00 : f32
    %6 = vector.broadcast %cst_5 : f32 to vector<32x128xf32>
    %7 = arith.maximumf %5, %6 : vector<32x128xf32>
    %c0_6 = arith.constant 0 : index
    %c0_7 = arith.constant 0 : index
    %8 = vector.load %arg4[%c0_6, %c0_7] : memref<32x128xf32, #tpu.memory_space<vmem>>, vector<32x128xf32>
    tpu.vector_store %arg4[%c0_6, %c0_7], %7 {strides = array<i32>} : memref<32x128xf32, #tpu.memory_space<vmem>>, vector<32x128xf32>,
    return
  }
  func.func @transform_0(%arg0: i32) -> (i32, i32) {
    %c0_i32 = arith.constant 0 : i32
    %c0_i32_0 = arith.constant 0 : i32
    return %arg0, %c0_i32 : i32, i32
  }
  func.func @transform_1(%arg0: i32) -> (i32, i32) {
    %c0_i32 = arith.constant 0 : i32
    %c0_i32_0 = arith.constant 0 : i32
    %c0_i32_1 = arith.constant 0 : i32
    return %c0_i32, %c0_i32_0 : i32, i32
  }
  func.func @transform_2(%arg0: i32) -> (i32, i32) {
    %c0_i32 = arith.constant 0 : i32
    %c0_i32_0 = arith.constant 0 : i32
    %c0_i32_1 = arith.constant 0 : i32
    return %c0_i32, %c0_i32_0 : i32, i32
  }
  func.func @transform_3(%arg0: i32) -> (i32, i32) {
    %c0_i32 = arith.constant 0 : i32
    %c0_i32_0 = arith.constant 0 : i32
    return %arg0, %c0_i32 : i32, i32
  }
}

module attributes {stable_mosaic.version = 11 : i64} {
  func.func @_fused_fc_kernel(%arg0: i32, %arg1: memref<16x2048xbf16, #tpu.memory_space<vmem>>, %arg2: memref<2048x128xbf16, #tpu.memory_space<vmem>>, %arg3: memref<1x128xf32, #tpu.memory_space<vmem>>, %arg4: memref<128x128xf32, #tpu.memory_space<vmem>>, %arg5: memref<1x128xf32, #tpu.memory_space<vmem>>, %arg6: memref<16x128xf32, #tpu.memory_space<vmem>>) attributes {dimension_semantics = [#tpu.dimension_semantics<parallel>], iteration_bounds = array<i64: 1>, scalar_prefetch = 0 : i64, scratch_operands = 0 : i64, tpu.core_type = #tpu.core_type<tc>, window_params = [{transform_indices = @transform_0, window_bounds = array<i64: 16, 2048>}, {pipeline_mode = #tpu.pipeline_mode<synchronous>, transform_indices = @transform_1, window_bounds = array<i64: 2048, 128>}, {pipeline_mode = #tpu.pipeline_mode<synchronous>, transform_indices = @transform_2, window_bounds = array<i64: 1, 128>}, {pipeline_mode = #tpu.pipeline_mode<synchronous>, transform_indices = @transform_3, window_bounds = array<i64: 128, 128>}, {pipeline_mode = #tpu.pipeline_mode<synchronous>, transform_indices = @transform_4, window_bounds = array<i64: 1, 128>}, {transform_indices = @transform_5, window_bounds = array<i64: 16, 128>}]} {
    %c0 = arith.constant 0 : index
    %c0_0 = arith.constant 0 : index
    %0 = vector.load %arg1[%c0, %c0_0] : memref<16x2048xbf16, #tpu.memory_space<vmem>>, vector<16x2048xbf16>
    %c0_1 = arith.constant 0 : index
    %c0_2 = arith.constant 0 : index
    %1 = vector.load %arg2[%c0_1, %c0_2] : memref<2048x128xbf16, #tpu.memory_space<vmem>>, vector<2048x128xbf16>
    %cst = arith.constant dense<0.000000e+00> : vector<16x128xf32>
    %2 = tpu.matmul %0, %1, %cst {dimension_numbers = #tpu.dot_dimension_numbers<[1], [0], [0], [1], [0, 0, 1, 1], [], []>} : vector<16x2048xbf16>, vector<2048x128xbf16>, vector<16x128xf32> -> vector<16x128xf32>
    %c0_3 = arith.constant 0 : index
    %c0_4 = arith.constant 0 : index
    %3 = vector.load %arg3[%c0_3, %c0_4] : memref<1x128xf32, #tpu.memory_space<vmem>>, vector<1x128xf32>
    %4 = vector.broadcast %3 : vector<1x128xf32> to vector<16x128xf32>
    %5 = arith.addf %2, %4 : vector<16x128xf32>
    %cst_5 = arith.constant 0.000000e+00 : f32
    %6 = vector.broadcast %cst_5 : f32 to vector<16x128xf32>
    %7 = arith.maximumf %5, %6 : vector<16x128xf32>
    %c0_6 = arith.constant 0 : index
    %c0_7 = arith.constant 0 : index
    %8 = vector.load %arg4[%c0_6, %c0_7] : memref<128x128xf32, #tpu.memory_space<vmem>>, vector<128x128xf32>
    %cst_8 = arith.constant dense<0.000000e+00> : vector<16x128xf32>
    %9 = tpu.matmul %7, %8, %cst_8 {dimension_numbers = #tpu.dot_dimension_numbers<[1], [0], [0], [1], [0, 0, 1, 1], [], []>} : vector<16x128xf32>, vector<128x128xf32>, vector<16x128xf32> -> vector<16x128xf32>
    %c0_9 = arith.constant 0 : index
    %c0_10 = arith.constant 0 : index
    %10 = vector.load %arg5[%c0_9, %c0_10] : memref<1x128xf32, #tpu.memory_space<vmem>>, vector<1x128xf32>
    %11 = vector.broadcast %10 : vector<1x128xf32> to vector<16x128xf32>
    %12 = arith.addf %9, %11 : vector<16x128xf32>
    %c0_11 = arith.constant 0 : index
    %c0_12 = arith.constant 0 : index
    %13 = vector.load %arg6[%c0_11, %c0_12] : memref<16x128xf32, #tpu.memory_space<vmem>>, vector<16x128xf32>
    tpu.vector_store %arg6[%c0_11, %c0_12], %12 {strides = array<i32>} : memref<16x128xf32, #tpu.memory_space<vmem>>, vector<16x128xf32>,
    return
  }
  func.func @transform_0(%arg0: i32) -> (i32, i32) {
    %c0_i32 = arith.constant 0 : i32
    %c0_i32_0 = arith.constant 0 : i32
    return %arg0, %c0_i32 : i32, i32
  }
  func.func @transform_1(%arg0: i32) -> (i32, i32) {
    %c0_i32 = arith.constant 0 : i32
    %c0_i32_0 = arith.constant 0 : i32
    %c0_i32_1 = arith.constant 0 : i32
    return %c0_i32, %c0_i32_0 : i32, i32
  }
  func.func @transform_2(%arg0: i32) -> (i32, i32) {
    %c0_i32 = arith.constant 0 : i32
    %c0_i32_0 = arith.constant 0 : i32
    %c0_i32_1 = arith.constant 0 : i32
    return %c0_i32, %c0_i32_0 : i32, i32
  }
  func.func @transform_3(%arg0: i32) -> (i32, i32) {
    %c0_i32 = arith.constant 0 : i32
    %c0_i32_0 = arith.constant 0 : i32
    %c0_i32_1 = arith.constant 0 : i32
    return %c0_i32, %c0_i32_0 : i32, i32
  }
  func.func @transform_4(%arg0: i32) -> (i32, i32) {
    %c0_i32 = arith.constant 0 : i32
    %c0_i32_0 = arith.constant 0 : i32
    %c0_i32_1 = arith.constant 0 : i32
    return %c0_i32, %c0_i32_0 : i32, i32
  }
  func.func @transform_5(%arg0: i32) -> (i32, i32) {
    %c0_i32 = arith.constant 0 : i32
    %c0_i32_0 = arith.constant 0 : i32
    return %arg0, %c0_i32 : i32, i32
  }
}

</mosaic_0001>

<llo_original>
// kernel: net_entk_forward.4
$region0: #{net_entk_forward.4}
  #allocation0 [shape = 'u32[]', space=smem, size = 0x4, offset = 0x4, fixed_abs, tag = 'smem constant byte address 0x4 - core index']
  #allocation1 [shape = 'u32[144,128]{1,0:T(1,128)}', space=vmem, size = 0x12000, scoped, tag = 'internal scratch']
  %s0 = inlined_call_operand.vmem [shape: f32[400,9], index: 0, kind: input, shape index: {}]
  %s1 = inlined_call_operand.vmem [shape: f32[9,32], index: 1, kind: input, shape index: {}]
  %s2 = inlined_call_operand.vmem [shape: f32[1,32], index: 2, kind: input, shape index: {}]
  %s3 = inlined_call_operand.vmem [shape: f32[400,32], index: 3, kind: output, shape index: {}]
  %s4 = sld [smem:[#allocation0]]
  $region22: #{net_entk_forward.4} parent=0
    _
  %s6 = ssub.s32 1, %s4
  %s7 = scalar_select 0, %s6, %s4
  // Predicated region
  $region2: #{net_entk_forward.4} parent=0 // pred_check
    _
  $region3: #{net_entk_forward.4} parent=0 // pred_check_branch
    %9 = sbr.rel (0) target = $region5
  $region4: #{net_entk_forward.4} parent=0 // pred_region
    _
  $region5: #{net_entk_forward.4} parent=0 // pred_fallthru
    _
  // Predicated region
  $region6: #{net_entk_forward.4} parent=0 // pred_check
    _
  $region7: #{net_entk_forward.4} parent=0 // pred_check_branch
    %11 = sbr.rel (0) target = $region9
  $region8: #{net_entk_forward.4} parent=0 // pred_region
    _
  $region9: #{net_entk_forward.4} parent=0 // pred_fallthru
    _
  // Predicated region
  $region10: #{net_entk_forward.4} parent=0 // pred_check
    _
  $region11: #{net_entk_forward.4} parent=0 // pred_check_branch
    %13 = sbr.rel (0) target = $region13
  $region12: #{net_entk_forward.4} parent=0 // pred_region
    _
  $region13: #{net_entk_forward.4} parent=0 // pred_fallthru
    _
  %v14 = vld [vmem:[%s0] sm:$0xff]
  %v15 = vld [vmem:[%s0 + $0x8] sm:$0xff]
  %v16 = vld [vmem:[%s0 + $0x10] sm:$0xff]
  %v17 = vld [vmem:[%s0 + $0x18] sm:$0xff]
  %v18 = vld [vmem:[%s0 + $0x20] sm:$0xff]
  %v19 = vld [vmem:[%s0 + $0x28] sm:$0xff]
  %v20 = vld [vmem:[%s0 + $0x30] sm:$0xff]
  %v21 = vld [vmem:[%s0 + $0x38] sm:$0xff]
  %v22 = vld [vmem:[%s0 + $0x40] sm:$0xff]
  %v23 = vld [vmem:[%s0 + $0x48] sm:$0xff]
  %v24 = vld [vmem:[%s0 + $0x50] sm:$0xff]
  %v25 = vld [vmem:[%s0 + $0x58] sm:$0xff]
  %v26 = vld [vmem:[%s0 + $0x60] sm:$0xff]
  %v27 = vld [vmem:[%s0 + $0x68] sm:$0xff]
  %v28 = vld [vmem:[%s0 + $0x70] sm:$0xff]
  %v29 = vld [vmem:[%s0 + $0x78] sm:$0xff]
  %v30 = vld [vmem:[%s0 + $0x80] sm:$0xff]
  %v31 = vld [vmem:[%s0 + $0x88] sm:$0xff]
  %v32 = vld [vmem:[%s0 + $0x90] sm:$0xff]
  %v33 = vld [vmem:[%s0 + $0x98] sm:$0xff]
  %v34 = vld [vmem:[%s0 + $0xa0] sm:$0xff]
  %v35 = vld [vmem:[%s0 + $0xa8] sm:$0xff]
  %v36 = vld [vmem:[%s0 + $0xb0] sm:$0xff]
  %v37 = vld [vmem:[%s0 + $0xb8] sm:$0xff]
  %v38 = vld [vmem:[%s0 + $0xc0] sm:$0xff]
  %v39 = vld [vmem:[%s0 + $0xc8] sm:$0xff]
  %v40 = vld [vmem:[%s0 + $0xd0] sm:$0xff]
  %v41 = vld [vmem:[%s0 + $0xd8] sm:$0xff]
  %v42 = vld [vmem:[%s0 + $0xe0] sm:$0xff]
  %v43 = vld [vmem:[%s0 + $0xe8] sm:$0xff]
  %v44 = vld [vmem:[%s0 + $0xf0] sm:$0xff]
  %v45 = vld [vmem:[%s0 + $0xf8] sm:$0xff]
  %v46 = vld [vmem:[%s0 + $0x100] sm:$0xff]
  %v47 = vld [vmem:[%s0 + $0x108] sm:$0xff]
  %v48 = vld [vmem:[%s0 + $0x110] sm:$0xff]
  %v49 = vld [vmem:[%s0 + $0x118] sm:$0xff]
  %v50 = vld [vmem:[%s0 + $0x120] sm:$0xff]
  %v51 = vld [vmem:[%s0 + $0x128] sm:$0xff]
  %v52 = vld [vmem:[%s0 + $0x130] sm:$0xff]
  %v53 = vld [vmem:[%s0 + $0x138] sm:$0xff]
  %v54 = vld [vmem:[%s0 + $0x140] sm:$0xff]
  %v55 = vld [vmem:[%s0 + $0x148] sm:$0xff]
  %v56 = vld [vmem:[%s0 + $0x150] sm:$0xff]
  %v57 = vld [vmem:[%s0 + $0x158] sm:$0xff]
  %v58 = vld [vmem:[%s0 + $0x160] sm:$0xff]
  %v59 = vld [vmem:[%s0 + $0x168] sm:$0xff]
  %v60 = vld [vmem:[%s0 + $0x170] sm:$0xff]
  %v61 = vld [vmem:[%s0 + $0x178] sm:$0xff]
  %v62 = vld [vmem:[%s0 + $0x180] sm:$0xff]
  %v63 = vld [vmem:[%s0 + $0x188] sm:$0xff]
  %v64 = vld [vmem:[%s1] sm:$0xff]
  %v65 = vld [vmem:[%s1 + $0x8] sm:$0x1]
  %v66 = vld [vmem:[%s2] sm:$0x1]
  %68 = vset.pattern.permute.xlu0 0
  %69 = vperm.xlu0 %68, %v14
  %v70 = vpop.permute.xlu0 %69
  %73 = vset.pattern.permute.xlu0 0
  %74 = vperm.xlu0 %73, %v15
  %v75 = vpop.permute.xlu0 %74
  %78 = vset.pattern.permute.xlu0 0
  %79 = vperm.xlu0 %78, %v16
  %v80 = vpop.permute.xlu0 %79
  %83 = vset.pattern.permute.xlu0 0
  %84 = vperm.xlu0 %83, %v17
  %v85 = vpop.permute.xlu0 %84
  %88 = vset.pattern.permute.xlu0 0
  %89 = vperm.xlu0 %88, %v18
  %v90 = vpop.permute.xlu0 %89
  %93 = vset.pattern.permute.xlu0 0
  %94 = vperm.xlu0 %93, %v19
  %v95 = vpop.permute.xlu0 %94
  %98 = vset.pattern.permute.xlu0 0
  %99 = vperm.xlu0 %98, %v20
  %v100 = vpop.permute.xlu0 %99
  %103 = vset.pattern.permute.xlu0 0
  %104 = vperm.xlu0 %103, %v21
  %v105 = vpop.permute.xlu0 %104
  %108 = vset.pattern.permute.xlu0 0
  %109 = vperm.xlu0 %108, %v22
  %v110 = vpop.permute.xlu0 %109
  %113 = vset.pattern.permute.xlu0 0
  %114 = vperm.xlu0 %113, %v23
  %v115 = vpop.permute.xlu0 %114
  %118 = vset.pattern.permute.xlu0 0
  %119 = vperm.xlu0 %118, %v24
  %v120 = vpop.permute.xlu0 %119
  %123 = vset.pattern.permute.xlu0 0
  %124 = vperm.xlu0 %123, %v25
  %v125 = vpop.permute.xlu0 %124
  %128 = vset.pattern.permute.xlu0 0
  %129 = vperm.xlu0 %128, %v26
  %v130 = vpop.permute.xlu0 %129
  %133 = vset.pattern.permute.xlu0 0
  %134 = vperm.xlu0 %133, %v27
  %v135 = vpop.permute.xlu0 %134
  %138 = vset.pattern.permute.xlu0 0
  %139 = vperm.xlu0 %138, %v28
  %v140 = vpop.permute.xlu0 %139
  %143 = vset.pattern.permute.xlu0 0
  %144 = vperm.xlu0 %143, %v29
  %v145 = vpop.permute.xlu0 %144
  %148 = vset.pattern.permute.xlu0 0
  %149 = vperm.xlu0 %148, %v30
  %v150 = vpop.permute.xlu0 %149
  %153 = vset.pattern.permute.xlu0 0
  %154 = vperm.xlu0 %153, %v31
  %v155 = vpop.permute.xlu0 %154
  %158 = vset.pattern.permute.xlu0 0
  %159 = vperm.xlu0 %158, %v32
  %v160 = vpop.permute.xlu0 %159
  %163 = vset.pattern.permute.xlu0 0
  %164 = vperm.xlu0 %163, %v33
  %v165 = vpop.permute.xlu0 %164
  %168 = vset.pattern.permute.xlu0 0
  %169 = vperm.xlu0 %168, %v34
  %v170 = vpop.permute.xlu0 %169
  %173 = vset.pattern.permute.xlu0 0
  %174 = vperm.xlu0 %173, %v35
  %v175 = vpop.permute.xlu0 %174
  %178 = vset.pattern.permute.xlu0 0
  %179 = vperm.xlu0 %178, %v36
  %v180 = vpop.permute.xlu0 %179
  %183 = vset.pattern.permute.xlu0 0
  %184 = vperm.xlu0 %183, %v37
  %v185 = vpop.permute.xlu0 %184
  %188 = vset.pattern.permute.xlu0 0
  %189 = vperm.xlu0 %188, %v38
  %v190 = vpop.permute.xlu0 %189
  %193 = vset.pattern.permute.xlu0 0
  %194 = vperm.xlu0 %193, %v39
  %v195 = vpop.permute.xlu0 %194
  %198 = vset.pattern.permute.xlu0 0
  %199 = vperm.xlu0 %198, %v40
  %v200 = vpop.permute.xlu0 %199
  %203 = vset.pattern.permute.xlu0 0
  %204 = vperm.xlu0 %203, %v41
  %v205 = vpop.permute.xlu0 %204
  %208 = vset.pattern.permute.xlu0 0
  %209 = vperm.xlu0 %208, %v42
  %v210 = vpop.permute.xlu0 %209
  %213 = vset.pattern.permute.xlu0 0
  %214 = vperm.xlu0 %213, %v43
  %v215 = vpop.permute.xlu0 %214
  %218 = vset.pattern.permute.xlu0 0
  %219 = vperm.xlu0 %218, %v44
  %v220 = vpop.permute.xlu0 %219
  %223 = vset.pattern.permute.xlu0 0
  %224 = vperm.xlu0 %223, %v45
  %v225 = vpop.permute.xlu0 %224
  %228 = vset.pattern.permute.xlu0 0
  %229 = vperm.xlu0 %228, %v46
  %v230 = vpop.permute.xlu0 %229
  %233 = vset.pattern.permute.xlu0 0
  %234 = vperm.xlu0 %233, %v47
  %v235 = vpop.permute.xlu0 %234
  %238 = vset.pattern.permute.xlu0 0
  %239 = vperm.xlu0 %238, %v48
  %v240 = vpop.permute.xlu0 %239
  %243 = vset.pattern.permute.xlu0 0
  %244 = vperm.xlu0 %243, %v49
  %v245 = vpop.permute.xlu0 %244
  %248 = vset.pattern.permute.xlu0 0
  %249 = vperm.xlu0 %248, %v50
  %v250 = vpop.permute.xlu0 %249
  %253 = vset.pattern.permute.xlu0 0
  %254 = vperm.xlu0 %253, %v51
  %v255 = vpop.permute.xlu0 %254
  %258 = vset.pattern.permute.xlu0 0
  %259 = vperm.xlu0 %258, %v52
  %v260 = vpop.permute.xlu0 %259
  %263 = vset.pattern.permute.xlu0 0
  %264 = vperm.xlu0 %263, %v53
  %v265 = vpop.permute.xlu0 %264
  %268 = vset.pattern.permute.xlu0 0
  %269 = vperm.xlu0 %268, %v54
  %v270 = vpop.permute.xlu0 %269
  %273 = vset.pattern.permute.xlu0 0
  %274 = vperm.xlu0 %273, %v55
  %v275 = vpop.permute.xlu0 %274
  %278 = vset.pattern.permute.xlu0 0
  %279 = vperm.xlu0 %278, %v56
  %v280 = vpop.permute.xlu0 %279
  %283 = vset.pattern.permute.xlu0 0
  %284 = vperm.xlu0 %283, %v57
  %v285 = vpop.permute.xlu0 %284
  %288 = vset.pattern.permute.xlu0 0
  %289 = vperm.xlu0 %288, %v58
  %v290 = vpop.permute.xlu0 %289
  %293 = vset.pattern.permute.xlu0 0
  %294 = vperm.xlu0 %293, %v59
  %v295 = vpop.permute.xlu0 %294
  %298 = vset.pattern.permute.xlu0 0
  %299 = vperm.xlu0 %298, %v60
  %v300 = vpop.permute.xlu0 %299
  %303 = vset.pattern.permute.xlu0 0
  %304 = vperm.xlu0 %303, %v61
  %v305 = vpop.permute.xlu0 %304
  %308 = vset.pattern.permute.xlu0 0
  %309 = vperm.xlu0 %308, %v62
  %v310 = vpop.permute.xlu0 %309
  %313 = vset.pattern.permute.xlu0 0
  %314 = vperm.xlu0 %313, %v63
  %v315 = vpop.permute.xlu0 %314
  %v317 = vlaneseq
  %v318 = vshrl.u32 %v317, 7
  %v319 = vsub.s32 0, %v318
  %v320 = vrot.slane %v64, %v319
  %v321 = vmul.f32 %v70, %v320
  %v322 = vmul.f32 %v75, %v320
  %v323 = vmul.f32 %v80, %v320
  %v324 = vmul.f32 %v85, %v320
  %v325 = vmul.f32 %v90, %v320
  %v326 = vmul.f32 %v95, %v320
  %v327 = vmul.f32 %v100, %v320
  %v328 = vmul.f32 %v105, %v320
  %v329 = vmul.f32 %v110, %v320
  %v330 = vmul.f32 %v115, %v320
  %v331 = vmul.f32 %v120, %v320
  %v332 = vmul.f32 %v125, %v320
  %v333 = vmul.f32 %v130, %v320
  %v334 = vmul.f32 %v135, %v320
  %v335 = vmul.f32 %v140, %v320
  %v336 = vmul.f32 %v145, %v320
  %v337 = vmul.f32 %v150, %v320
  %v338 = vmul.f32 %v155, %v320
  %v339 = vmul.f32 %v160, %v320
  %v340 = vmul.f32 %v165, %v320
  %v341 = vmul.f32 %v170, %v320
  %v342 = vmul.f32 %v175, %v320
  %v343 = vmul.f32 %v180, %v320
  %v344 = vmul.f32 %v185, %v320
  %v345 = vmul.f32 %v190, %v320
  %v346 = vmul.f32 %v195, %v320
  %v347 = vmul.f32 %v200, %v320
  %v348 = vmul.f32 %v205, %v320
  %v349 = vmul.f32 %v210, %v320
  %v350 = vmul.f32 %v215, %v320
  %v351 = vmul.f32 %v220, %v320
  %v352 = vmul.f32 %v225, %v320
  %v353 = vmul.f32 %v230, %v320
  %v354 = vmul.f32 %v235, %v320
  %v355 = vmul.f32 %v240, %v320
  %v356 = vmul.f32 %v245, %v320
  %v357 = vmul.f32 %v250, %v320
  %v358 = vmul.f32 %v255, %v320
  %v359 = vmul.f32 %v260, %v320
  %v360 = vmul.f32 %v265, %v320
  %v361 = vmul.f32 %v270, %v320
  %v362 = vmul.f32 %v275, %v320
  %v363 = vmul.f32 %v280, %v320
  %v364 = vmul.f32 %v285, %v320
  %v365 = vmul.f32 %v290, %v320
  %v366 = vmul.f32 %v295, %v320
  %v367 = vmul.f32 %v300, %v320
  %v368 = vmul.f32 %v305, %v320
  %v369 = vmul.f32 %v310, %v320
  %v370 = vmul.f32 %v315, %v320
  %v372 = vlaneseq
  %v373 = vshrl.u32 %v372, 7
  %v374 = vsub.s32 0, %v373
  %v375 = vrot.slane %v66, %v374
  %v377 = vadd.f32 %v375, %v321
  %v378 = vadd.f32 %v375, %v322
  %v379 = vadd.f32 %v375, %v323
  %v380 = vadd.f32 %v375, %v324
  %v381 = vadd.f32 %v375, %v325
  %v382 = vadd.f32 %v375, %v326
  %v383 = vadd.f32 %v375, %v327
  %v384 = vadd.f32 %v375, %v328
  %v385 = vadd.f32 %v375, %v329
  %v386 = vadd.f32 %v375, %v330
  %v387 = vadd.f32 %v375, %v331
  %v388 = vadd.f32 %v375, %v332
  %v389 = vadd.f32 %v375, %v333
  %v390 = vadd.f32 %v375, %v334
  %v391 = vadd.f32 %v375, %v335
  %v392 = vadd.f32 %v375, %v336
  %v393 = vadd.f32 %v375, %v337
  %v394 = vadd.f32 %v375, %v338
  %v395 = vadd.f32 %v375, %v339
  %v396 = vadd.f32 %v375, %v340
  %v397 = vadd.f32 %v375, %v341
  %v398 = vadd.f32 %v375, %v342
  %v399 = vadd.f32 %v375, %v343
  %v400 = vadd.f32 %v375, %v344
  %v401 = vadd.f32 %v375, %v345
  %v402 = vadd.f32 %v375, %v346
  %v403 = vadd.f32 %v375, %v347
  %v404 = vadd.f32 %v375, %v348
  %v405 = vadd.f32 %v375, %v349
  %v406 = vadd.f32 %v375, %v350
  %v407 = vadd.f32 %v375, %v351
  %v408 = vadd.f32 %v375, %v352
  %v409 = vadd.f32 %v375, %v353
  %v410 = vadd.f32 %v375, %v354
  %v411 = vadd.f32 %v375, %v355
  %v412 = vadd.f32 %v375, %v356
  %v413 = vadd.f32 %v375, %v357
  %v414 = vadd.f32 %v375, %v358
  %v415 = vadd.f32 %v375, %v359
  %v416 = vadd.f32 %v375, %v360
  %v417 = vadd.f32 %v375, %v361
  %v418 = vadd.f32 %v375, %v362
  %v419 = vadd.f32 %v375, %v363
  %v420 = vadd.f32 %v375, %v364
  %v421 = vadd.f32 %v375, %v365
  %v422 = vadd.f32 %v375, %v366
  %v423 = vadd.f32 %v375, %v367
  %v424 = vadd.f32 %v375, %v368
  %v425 = vadd.f32 %v375, %v369
  %v426 = vadd.f32 %v375, %v370
  %427 = vset.pattern.permute.xlu0 1
  %428 = vperm.xlu0 %427, %v14
  %v429 = vpop.permute.xlu0 %428
  %431 = vset.pattern.permute.xlu0 1
  %432 = vperm.xlu0 %431, %v15
  %v433 = vpop.permute.xlu0 %432
  %435 = vset.pattern.permute.xlu0 1
  %436 = vperm.xlu0 %435, %v16
  %v437 = vpop.permute.xlu0 %436
  %439 = vset.pattern.permute.xlu0 1
  %440 = vperm.xlu0 %439, %v17
  %v441 = vpop.permute.xlu0 %440
  %443 = vset.pattern.permute.xlu0 1
  %444 = vperm.xlu0 %443, %v18
  %v445 = vpop.permute.xlu0 %444
  %447 = vset.pattern.permute.xlu0 1
  %448 = vperm.xlu0 %447, %v19
  %v449 = vpop.permute.xlu0 %448
  %451 = vset.pattern.permute.xlu0 1
  %452 = vperm.xlu0 %451, %v20
  %v453 = vpop.permute.xlu0 %452
  %455 = vset.pattern.permute.xlu0 1
  %456 = vperm.xlu0 %455, %v21
  %v457 = vpop.permute.xlu0 %456
  %459 = vset.pattern.permute.xlu0 1
  %460 = vperm.xlu0 %459, %v22
  %v461 = vpop.permute.xlu0 %460
  %463 = vset.pattern.permute.xlu0 1
  %464 = vperm.xlu0 %463, %v23
  %v465 = vpop.permute.xlu0 %464
  %467 = vset.pattern.permute.xlu0 1
  %468 = vperm.xlu0 %467, %v24
  %v469 = vpop.permute.xlu0 %468
  %471 = vset.pattern.permute.xlu0 1
  %472 = vperm.xlu0 %471, %v25
  %v473 = vpop.permute.xlu0 %472
  %475 = vset.pattern.permute.xlu0 1
  %476 = vperm.xlu0 %475, %v26
  %v477 = vpop.permute.xlu0 %476
  %479 = vset.pattern.permute.xlu0 1
  %480 = vperm.xlu0 %479, %v27
  %v481 = vpop.permute.xlu0 %480
  %483 = vset.pattern.permute.xlu0 1
  %484 = vperm.xlu0 %483, %v28
  %v485 = vpop.permute.xlu0 %484
  %487 = vset.pattern.permute.xlu0 1
  %488 = vperm.xlu0 %487, %v29
  %v489 = vpop.permute.xlu0 %488
  %491 = vset.pattern.permute.xlu0 1
  %492 = vperm.xlu0 %491, %v30
  %v493 = vpop.permute.xlu0 %492
  %495 = vset.pattern.permute.xlu0 1
  %496 = vperm.xlu0 %495, %v31
  %v497 = vpop.permute.xlu0 %496
  %499 = vset.pattern.permute.xlu0 1
  %500 = vperm.xlu0 %499, %v32
  %v501 = vpop.permute.xlu0 %500
  %503 = vset.pattern.permute.xlu0 1
  %504 = vperm.xlu0 %503, %v33
  %v505 = vpop.permute.xlu0 %504
  %507 = vset.pattern.permute.xlu0 1
  %508 = vperm.xlu0 %507, %v34
  %v509 = vpop.permute.xlu0 %508
  %511 = vset.pattern.permute.xlu0 1
  %512 = vperm.xlu0 %511, %v35
  %v513 = vpop.permute.xlu0 %512
  %515 = vset.pattern.permute.xlu0 1
  %516 = vperm.xlu0 %515, %v36
  %v517 = vpop.permute.xlu0 %516
  %519 = vset.pattern.permute.xlu0 1
  %520 = vperm.xlu0 %519, %v37
  %v521 = vpop.permute.xlu0 %520
  %523 = vset.pattern.permute.xlu0 1
  %524 = vperm.xlu0 %523, %v38
  %v525 = vpop.permute.xlu0 %524
  %527 = vset.pattern.permute.xlu0 1
  %528 = vperm.xlu0 %527, %v39
  %v529 = vpop.permute.xlu0 %528
  %531 = vset.pattern.permute.xlu0 1
  %532 = vperm.xlu0 %531, %v40
  %v533 = vpop.permute.xlu0 %532
  %535 = vset.pattern.permute.xlu0 1
  %536 = vperm.xlu0 %535, %v41
  %v537 = vpop.permute.xlu0 %536
  %539 = vset.pattern.permute.xlu0 1
  %540 = vperm.xlu0 %539, %v42
  %v541 = vpop.permute.xlu0 %540
  %543 = vset.pattern.permute.xlu0 1
  %544 = vperm.xlu0 %543, %v43
  %v545 = vpop.permute.xlu0 %544
  %547 = vset.pattern.permute.xlu0 1
  %548 = vperm.xlu0 %547, %v44
  %v549 = vpop.permute.xlu0 %548
  %551 = vset.pattern.permute.xlu0 1
  %552 = vperm.xlu0 %551, %v45
  %v553 = vpop.permute.xlu0 %552
  %555 = vset.pattern.permute.xlu0 1
  %556 = vperm.xlu0 %555, %v46
  %v557 = vpop.permute.xlu0 %556
  %559 = vset.pattern.permute.xlu0 1
  %560 = vperm.xlu0 %559, %v47
  %v561 = vpop.permute.xlu0 %560
  %563 = vset.pattern.permute.xlu0 1
  %564 = vperm.xlu0 %563, %v48
  %v565 = vpop.permute.xlu0 %564
  %567 = vset.pattern.permute.xlu0 1
  %568 = vperm.xlu0 %567, %v49
  %v569 = vpop.permute.xlu0 %568
  %571 = vset.pattern.permute.xlu0 1
  %572 = vperm.xlu0 %571, %v50
  %v573 = vpop.permute.xlu0 %572
  %575 = vset.pattern.permute.xlu0 1
  %576 = vperm.xlu0 %575, %v51
  %v577 = vpop.permute.xlu0 %576
  %579 = vset.pattern.permute.xlu0 1
  %580 = vperm.xlu0 %579, %v52
  %v581 = vpop.permute.xlu0 %580
  %583 = vset.pattern.permute.xlu0 1
  %584 = vperm.xlu0 %583, %v53
  %v585 = vpop.permute.xlu0 %584
  %587 = vset.pattern.permute.xlu0 1
  %588 = vperm.xlu0 %587, %v54
  %v589 = vpop.permute.xlu0 %588
  %591 = vset.pattern.permute.xlu0 1
  %592 = vperm.xlu0 %591, %v55
  %v593 = vpop.permute.xlu0 %592
  %595 = vset.pattern.permute.xlu0 1
  %596 = vperm.xlu0 %595, %v56
  %v597 = vpop.permute.xlu0 %596
  %599 = vset.pattern.permute.xlu0 1
  %600 = vperm.xlu0 %599, %v57
  %v601 = vpop.permute.xlu0 %600
  %603 = vset.pattern.permute.xlu0 1
  %604 = vperm.xlu0 %603, %v58
  %v605 = vpop.permute.xlu0 %604
  %607 = vset.pattern.permute.xlu0 1
  %608 = vperm.xlu0 %607, %v59
  %v609 = vpop.permute.xlu0 %608
  %611 = vset.pattern.permute.xlu0 1
  %612 = vperm.xlu0 %611, %v60
  %v613 = vpop.permute.xlu0 %612
  %615 = vset.pattern.permute.xlu0 1
  %616 = vperm.xlu0 %615, %v61
  %v617 = vpop.permute.xlu0 %616
  %619 = vset.pattern.permute.xlu0 1
  %620 = vperm.xlu0 %619, %v62
  %v621 = vpop.permute.xlu0 %620
  %623 = vset.pattern.permute.xlu0 1
  %624 = vperm.xlu0 %623, %v63
  %v625 = vpop.permute.xlu0 %624
  %v627 = vlaneseq
  %v628 = vshrl.u32 %v627, 7
  %v629 = vsub.s32 1, %v628
  %v630 = vrot.slane %v64, %v629
  %v631 = vmul.f32 %v429, %v630
  %v632 = vmul.f32 %v433, %v630
  %v633 = vmul.f32 %v437, %v630
  %v634 = vmul.f32 %v441, %v630
  %v635 = vmul.f32 %v445, %v630
  %v636 = vmul.f32 %v449, %v630
  %v637 = vmul.f32 %v453, %v630
  %v638 = vmul.f32 %v457, %v630
  %v639 = vmul.f32 %v461, %v630
  %v640 = vmul.f32 %v465, %v630
  %v641 = vmul.f32 %v469, %v630
  %v642 = vmul.f32 %v473, %v630
  %v643 = vmul.f32 %v477, %v630
  %v644 = vmul.f32 %v481, %v630
  %v645 = vmul.f32 %v485, %v630
  %v646 = vmul.f32 %v489, %v630
  %v647 = vmul.f32 %v493, %v630
  %v648 = vmul.f32 %v497, %v630
  %v649 = vmul.f32 %v501, %v630
  %v650 = vmul.f32 %v505, %v630
  %v651 = vmul.f32 %v509, %v630
  %v652 = vmul.f32 %v513, %v630
  %v653 = vmul.f32 %v517, %v630
  %v654 = vmul.f32 %v521, %v630
  %v655 = vmul.f32 %v525, %v630
  %v656 = vmul.f32 %v529, %v630
  %v657 = vmul.f32 %v533, %v630
  %v658 = vmul.f32 %v537, %v630
  %v659 = vmul.f32 %v541, %v630
  %v660 = vmul.f32 %v545, %v630
  %v661 = vmul.f32 %v549, %v630
  %v662 = vmul.f32 %v553, %v630
  %v663 = vmul.f32 %v557, %v630
  %v664 = vmul.f32 %v561, %v630
  %v665 = vmul.f32 %v565, %v630
  %v666 = vmul.f32 %v569, %v630
  %v667 = vmul.f32 %v573, %v630
  %v668 = vmul.f32 %v577, %v630
  %v669 = vmul.f32 %v581, %v630
  %v670 = vmul.f32 %v585, %v630
  %v671 = vmul.f32 %v589, %v630
  %v672 = vmul.f32 %v593, %v630
  %v673 = vmul.f32 %v597, %v630
  %v674 = vmul.f32 %v601, %v630
  %v675 = vmul.f32 %v605, %v630
  %v676 = vmul.f32 %v609, %v630
  %v677 = vmul.f32 %v613, %v630
  %v678 = vmul.f32 %v617, %v630
  %v679 = vmul.f32 %v621, %v630
  %v680 = vmul.f32 %v625, %v630
  %v681 = vadd.f32 %v377, %v631
  %v682 = vadd.f32 %v378, %v632
  %v683 = vadd.f32 %v379, %v633
  %v684 = vadd.f32 %v380, %v634
  %v685 = vadd.f32 %v381, %v635
  %v686 = vadd.f32 %v382, %v636
  %v687 = vadd.f32 %v383, %v637
  %v688 = vadd.f32 %v384, %v638
  %v689 = vadd.f32 %v385, %v639
  %v690 = vadd.f32 %v386, %v640
  %v691 = vadd.f32 %v387, %v641
  %v692 = vadd.f32 %v388, %v642
  %v693 = vadd.f32 %v389, %v643
  %v694 = vadd.f32 %v390, %v644
  %v695 = vadd.f32 %v391, %v645
  %v696 = vadd.f32 %v392, %v646
  %v697 = vadd.f32 %v393, %v647
  %v698 = vadd.f32 %v394, %v648
  %v699 = vadd.f32 %v395, %v649
  %v700 = vadd.f32 %v396, %v650
  %v701 = vadd.f32 %v397, %v651
  %v702 = vadd.f32 %v398, %v652
  %v703 = vadd.f32 %v399, %v653
  %v704 = vadd.f32 %v400, %v654
  %v705 = vadd.f32 %v401, %v655
  %v706 = vadd.f32 %v402, %v656
  %v707 = vadd.f32 %v403, %v657
  %v708 = vadd.f32 %v404, %v658
  %v709 = vadd.f32 %v405, %v659
  %v710 = vadd.f32 %v406, %v660
  %v711 = vadd.f32 %v407, %v661
  %v712 = vadd.f32 %v408, %v662
  %v713 = vadd.f32 %v409, %v663
  %v714 = vadd.f32 %v410, %v664
  %v715 = vadd.f32 %v411, %v665
  %v716 = vadd.f32 %v412, %v666
  %v717 = vadd.f32 %v413, %v667
  %v718 = vadd.f32 %v414, %v668
  %v719 = vadd.f32 %v415, %v669
  %v720 = vadd.f32 %v416, %v670
  %v721 = vadd.f32 %v417, %v671
  %v722 = vadd.f32 %v418, %v672
  %v723 = vadd.f32 %v419, %v673
  %v724 = vadd.f32 %v420, %v674
  %v725 = vadd.f32 %v421, %v675
  %v726 = vadd.f32 %v422, %v676
  %v727 = vadd.f32 %v423, %v677
  %v728 = vadd.f32 %v424, %v678
  %v729 = vadd.f32 %v425, %v679
  %v730 = vadd.f32 %v426, %v680
  %731 = vset.pattern.permute.xlu0 2
  %732 = vperm.xlu0 %731, %v14
  %v733 = vpop.permute.xlu0 %732
  %735 = vset.pattern.permute.xlu0 2
  %736 = vperm.xlu0 %735, %v15
  %v737 = vpop.permute.xlu0 %736
  %739 = vset.pattern.permute.xlu0 2
  %740 = vperm.xlu0 %739, %v16
  %v741 = vpop.permute.xlu0 %740
  %743 = vset.pattern.permute.xlu0 2
  %744 = vperm.xlu0 %743, %v17
  %v745 = vpop.permute.xlu0 %744
  %747 = vset.pattern.permute.xlu0 2
  %748 = vperm.xlu0 %747, %v18
  %v749 = vpop.permute.xlu0 %748
  %751 = vset.pattern.permute.xlu0 2
  %752 = vperm.xlu0 %751, %v19
  %v753 = vpop.permute.xlu0 %752
  %755 = vset.pattern.permute.xlu0 2
  %756 = vperm.xlu0 %755, %v20
  %v757 = vpop.permute.xlu0 %756
  %759 = vset.pattern.permute.xlu0 2
  %760 = vperm.xlu0 %759, %v21
  %v761 = vpop.permute.xlu0 %760
  %763 = vset.pattern.permute.xlu0 2
  %764 = vperm.xlu0 %763, %v22
  %v765 = vpop.permute.xlu0 %764
  %767 = vset.pattern.permute.xlu0 2
  %768 = vperm.xlu0 %767, %v23
  %v769 = vpop.permute.xlu0 %768
  %771 = vset.pattern.permute.xlu0 2
  %772 = vperm.xlu0 %771, %v24
  %v773 = vpop.permute.xlu0 %772
  %775 = vset.pattern.permute.xlu0 2
  %776 = vperm.xlu0 %775, %v25
  %v777 = vpop.permute.xlu0 %776
  %779 = vset.pattern.permute.xlu0 2
  %780 = vperm.xlu0 %779, %v26
  %v781 = vpop.permute.xlu0 %780
  %783 = vset.pattern.permute.xlu0 2
  %784 = vperm.xlu0 %783, %v27
  %v785 = vpop.permute.xlu0 %784
  %787 = vset.pattern.permute.xlu0 2
  %788 = vperm.xlu0 %787, %v28
  %v789 = vpop.permute.xlu0 %788
  %791 = vset.pattern.permute.xlu0 2
  %792 = vperm.xlu0 %791, %v29
  %v793 = vpop.permute.xlu0 %792
  %795 = vset.pattern.permute.xlu0 2
  %796 = vperm.xlu0 %795, %v30
  %v797 = vpop.permute.xlu0 %796
  %799 = vset.pattern.permute.xlu0 2
  %800 = vperm.xlu0 %799, %v31
  %v801 = vpop.permute.xlu0 %800
  %803 = vset.pattern.permute.xlu0 2
  %804 = vperm.xlu0 %803, %v32
  %v805 = vpop.permute.xlu0 %804
  %807 = vset.pattern.permute.xlu0 2
  %808 = vperm.xlu0 %807, %v33
  %v809 = vpop.permute.xlu0 %808
  %811 = vset.pattern.permute.xlu0 2
  %812 = vperm.xlu0 %811, %v34
  %v813 = vpop.permute.xlu0 %812
  %815 = vset.pattern.permute.xlu0 2
  %816 = vperm.xlu0 %815, %v35
  %v817 = vpop.permute.xlu0 %816
  %819 = vset.pattern.permute.xlu0 2
  %820 = vperm.xlu0 %819, %v36
  %v821 = vpop.permute.xlu0 %820
  %823 = vset.pattern.permute.xlu0 2
  %824 = vperm.xlu0 %823, %v37
  %v825 = vpop.permute.xlu0 %824
  %827 = vset.pattern.permute.xlu0 2
  %828 = vperm.xlu0 %827, %v38
  %v829 = vpop.permute.xlu0 %828
  %831 = vset.pattern.permute.xlu0 2
  %832 = vperm.xlu0 %831, %v39
  %v833 = vpop.permute.xlu0 %832
  %835 = vset.pattern.permute.xlu0 2
  %836 = vperm.xlu0 %835, %v40
  %v837 = vpop.permute.xlu0 %836
  %839 = vset.pattern.permute.xlu0 2
  %840 = vperm.xlu0 %839, %v41
  %v841 = vpop.permute.xlu0 %840
  %843 = vset.pattern.permute.xlu0 2
  %844 = vperm.xlu0 %843, %v42
  %v845 = vpop.permute.xlu0 %844
  %847 = vset.pattern.permute.xlu0 2
  %848 = vperm.xlu0 %847, %v43
  %v849 = vpop.permute.xlu0 %848
  %851 = vset.pattern.permute.xlu0 2
  %852 = vperm.xlu0 %851, %v44
  %v853 = vpop.permute.xlu0 %852
  %855 = vset.pattern.permute.xlu0 2
  %856 = vperm.xlu0 %855, %v45
  %v857 = vpop.permute.xlu0 %856
  %859 = vset.pattern.permute.xlu0 2
  %860 = vperm.xlu0 %859, %v46
  %v861 = vpop.permute.xlu0 %860
  %863 = vset.pattern.permute.xlu0 2
  %864 = vperm.xlu0 %863, %v47
  %v865 = vpop.permute.xlu0 %864
  %867 = vset.pattern.permute.xlu0 2
  %868 = vperm.xlu0 %867, %v48
  %v869 = vpop.permute.xlu0 %868
  %871 = vset.pattern.permute.xlu0 2
  %872 = vperm.xlu0 %871, %v49
  %v873 = vpop.permute.xlu0 %872
  %875 = vset.pattern.permute.xlu0 2
  %876 = vperm.xlu0 %875, %v50
  %v877 = vpop.permute.xlu0 %876
  %879 = vset.pattern.permute.xlu0 2
  %880 = vperm.xlu0 %879, %v51
  %v881 = vpop.permute.xlu0 %880
  %883 = vset.pattern.permute.xlu0 2
  %884 = vperm.xlu0 %883, %v52
  %v885 = vpop.permute.xlu0 %884
  %887 = vset.pattern.permute.xlu0 2
  %888 = vperm.xlu0 %887, %v53
  %v889 = vpop.permute.xlu0 %888
  %891 = vset.pattern.permute.xlu0 2
  %892 = vperm.xlu0 %891, %v54
  %v893 = vpop.permute.xlu0 %892
  %895 = vset.pattern.permute.xlu0 2
  %896 = vperm.xlu0 %895, %v55
  %v897 = vpop.permute.xlu0 %896
  %899 = vset.pattern.permute.xlu0 2
  %900 = vperm.xlu0 %899, %v56
  %v901 = vpop.permute.xlu0 %900
  %903 = vset.pattern.permute.xlu0 2
  %904 = vperm.xlu0 %903, %v57
  %v905 = vpop.permute.xlu0 %904
  %907 = vset.pattern.permute.xlu0 2
  %908 = vperm.xlu0 %907, %v58
  %v909 = vpop.permute.xlu0 %908
  %911 = vset.pattern.permute.xlu0 2
  %912 = vperm.xlu0 %911, %v59
  %v913 = vpop.permute.xlu0 %912
  %915 = vset.pattern.permute.xlu0 2
  %916 = vperm.xlu0 %915, %v60
  %v917 = vpop.permute.xlu0 %916
  %919 = vset.pattern.permute.xlu0 2
  %920 = vperm.xlu0 %919, %v61
  %v921 = vpop.permute.xlu0 %920
  %923 = vset.pattern.permute.xlu0 2
  %924 = vperm.xlu0 %923, %v62
  %v925 = vpop.permute.xlu0 %924
  %927 = vset.pattern.permute.xlu0 2
  %928 = vperm.xlu0 %927, %v63
  %v929 = vpop.permute.xlu0 %928
  %v931 = vlaneseq
  %v932 = vshrl.u32 %v931, 7
  %v933 = vsub.s32 2, %v932
  %v934 = vrot.slane %v64, %v933
  %v935 = vmul.f32 %v733, %v934
  %v936 = vmul.f32 %v737, %v934
  %v937 = vmul.f32 %v741, %v934
  %v938 = vmul.f32 %v745, %v934
  %v939 = vmul.f32 %v749, %v934
  %v940 = vmul.f32 %v753, %v934
  %v941 = vmul.f32 %v757, %v934
  %v942 = vmul.f32 %v761, %v934
  %v943 = vmul.f32 %v765, %v934
  %v944 = vmul.f32 %v769, %v934
  %v945 = vmul.f32 %v773, %v934
  %v946 = vmul.f32 %v777, %v934
  %v947 = vmul.f32 %v781, %v934
  %v948 = vmul.f32 %v785, %v934
  %v949 = vmul.f32 %v789, %v934
  %v950 = vmul.f32 %v793, %v934
  %v951 = vmul.f32 %v797, %v934
  %v952 = vmul.f32 %v801, %v934
  %v953 = vmul.f32 %v805, %v934
  %v954 = vmul.f32 %v809, %v934
  %v955 = vmul.f32 %v813, %v934
  %v956 = vmul.f32 %v817, %v934
  %v957 = vmul.f32 %v821, %v934
  %v958 = vmul.f32 %v825, %v934
  %v959 = vmul.f32 %v829, %v934
  %v960 = vmul.f32 %v833, %v934
  %v961 = vmul.f32 %v837, %v934
  %v962 = vmul.f32 %v841, %v934
  %v963 = vmul.f32 %v845, %v934
  %v964 = vmul.f32 %v849, %v934
  %v965 = vmul.f32 %v853, %v934
  %v966 = vmul.f32 %v857, %v934
  %v967 = vmul.f32 %v861, %v934
  %v968 = vmul.f32 %v865, %v934
  %v969 = vmul.f32 %v869, %v934
  %v970 = vmul.f32 %v873, %v934
  %v971 = vmul.f32 %v877, %v934
  %v972 = vmul.f32 %v881, %v934
  %v973 = vmul.f32 %v885, %v934
  %v974 = vmul.f32 %v889, %v934
  %v975 = vmul.f32 %v893, %v934
  %v976 = vmul.f32 %v897, %v934
  %v977 = vmul.f32 %v901, %v934
  %v978 = vmul.f32 %v905, %v934
  %v979 = vmul.f32 %v909, %v934
  %v980 = vmul.f32 %v913, %v934
  %v981 = vmul.f32 %v917, %v934
  %v982 = vmul.f32 %v921, %v934
  %v983 = vmul.f32 %v925, %v934
  %v984 = vmul.f32 %v929, %v934
  %v985 = vadd.f32 %v681, %v935
  %v986 = vadd.f32 %v682, %v936
  %v987 = vadd.f32 %v683, %v937
  %v988 = vadd.f32 %v684, %v938
  %v989 = vadd.f32 %v685, %v939
  %v990 = vadd.f32 %v686, %v940
  %v991 = vadd.f32 %v687, %v941
  %v992 = vadd.f32 %v688, %v942
  %v993 = vadd.f32 %v689, %v943
  %v994 = vadd.f32 %v690, %v944
  %v995 = vadd.f32 %v691, %v945
  %v996 = vadd.f32 %v692, %v946
  %v997 = vadd.f32 %v693, %v947
  %v998 = vadd.f32 %v694, %v948
  %v999 = vadd.f32 %v695, %v949
  %v1000 = vadd.f32 %v696, %v950
  %v1001 = vadd.f32 %v697, %v951
  %v1002 = vadd.f32 %v698, %v952
  %v1003 = vadd.f32 %v699, %v953
  %v1004 = vadd.f32 %v700, %v954
  %v1005 = vadd.f32 %v701, %v955
  %v1006 = vadd.f32 %v702, %v956
  %v1007 = vadd.f32 %v703, %v957
  %v1008 = vadd.f32 %v704, %v958
  %v1009 = vadd.f32 %v705, %v959
  %v1010 = vadd.f32 %v706, %v960
  %v1011 = vadd.f32 %v707, %v961
  %v1012 = vadd.f32 %v708, %v962
  %v1013 = vadd.f32 %v709, %v963
  %v1014 = vadd.f32 %v710, %v964
  %v1015 = vadd.f32 %v711, %v965
  %v1016 = vadd.f32 %v712, %v966
  %v1017 = vadd.f32 %v713, %v967
  %v1018 = vadd.f32 %v714, %v968
  %v1019 = vadd.f32 %v715, %v969
  %v1020 = vadd.f32 %v716, %v970
  %v1021 = vadd.f32 %v717, %v971
  %v1022 = vadd.f32 %v718, %v972
  %v1023 = vadd.f32 %v719, %v973
  %v1024 = vadd.f32 %v720, %v974
  %v1025 = vadd.f32 %v721, %v975
  %v1026 = vadd.f32 %v722, %v976
  %v1027 = vadd.f32 %v723, %v977
  %v1028 = vadd.f32 %v724, %v978
  %v1029 = vadd.f32 %v725, %v979
  %v1030 = vadd.f32 %v726, %v980
  %v1031 = vadd.f32 %v727, %v981
  %v1032 = vadd.f32 %v728, %v982
  %v1033 = vadd.f32 %v729, %v983
  %v1034 = vadd.f32 %v730, %v984
  %1035 = vset.pattern.permute.xlu0 3
  %1036 = vperm.xlu0 %1035, %v14
  %v1037 = vpop.permute.xlu0 %1036
  %1039 = vset.pattern.permute.xlu0 3
  %1040 = vperm.xlu0 %1039, %v15
  %v1041 = vpop.permute.xlu0 %1040
  %1043 = vset.pattern.permute.xlu0 3
  %1044 = vperm.xlu0 %1043, %v16
  %v1045 = vpop.permute.xlu0 %1044
  %1047 = vset.pattern.permute.xlu0 3
  %1048 = vperm.xlu0 %1047, %v17
  %v1049 = vpop.permute.xlu0 %1048
  %1051 = vset.pattern.permute.xlu0 3
  %1052 = vperm.xlu0 %1051, %v18
  %v1053 = vpop.permute.xlu0 %1052
  %1055 = vset.pattern.permute.xlu0 3
  %1056 = vperm.xlu0 %1055, %v19
  %v1057 = vpop.permute.xlu0 %1056
  %1059 = vset.pattern.permute.xlu0 3
  %1060 = vperm.xlu0 %1059, %v20
  %v1061 = vpop.permute.xlu0 %1060
  %1063 = vset.pattern.permute.xlu0 3
  %1064 = vperm.xlu0 %1063, %v21
  %v1065 = vpop.permute.xlu0 %1064
  %1067 = vset.pattern.permute.xlu0 3
  %1068 = vperm.xlu0 %1067, %v22
  %v1069 = vpop.permute.xlu0 %1068
  %1071 = vset.pattern.permute.xlu0 3
  %1072 = vperm.xlu0 %1071, %v23
  %v1073 = vpop.permute.xlu0 %1072
  %1075 = vset.pattern.permute.xlu0 3
  %1076 = vperm.xlu0 %1075, %v24
  %v1077 = vpop.permute.xlu0 %1076
  %1079 = vset.pattern.permute.xlu0 3
  %1080 = vperm.xlu0 %1079, %v25
  %v1081 = vpop.permute.xlu0 %1080
  %1083 = vset.pattern.permute.xlu0 3
  %1084 = vperm.xlu0 %1083, %v26
  %v1085 = vpop.permute.xlu0 %1084
  %1087 = vset.pattern.permute.xlu0 3
  %1088 = vperm.xlu0 %1087, %v27
  %v1089 = vpop.permute.xlu0 %1088
  %1091 = vset.pattern.permute.xlu0 3
  %1092 = vperm.xlu0 %1091, %v28
  %v1093 = vpop.permute.xlu0 %1092
  %1095 = vset.pattern.permute.xlu0 3
  %1096 = vperm.xlu0 %1095, %v29
  %v1097 = vpop.permute.xlu0 %1096
  %1099 = vset.pattern.permute.xlu0 3
  %1100 = vperm.xlu0 %1099, %v30
  %v1101 = vpop.permute.xlu0 %1100
  %1103 = vset.pattern.permute.xlu0 3
  %1104 = vperm.xlu0 %1103, %v31
  %v1105 = vpop.permute.xlu0 %1104
  %1107 = vset.pattern.permute.xlu0 3
  %1108 = vperm.xlu0 %1107, %v32
  %v1109 = vpop.permute.xlu0 %1108
  %1111 = vset.pattern.permute.xlu0 3
  %1112 = vperm.xlu0 %1111, %v33
  %v1113 = vpop.permute.xlu0 %1112
  %1115 = vset.pattern.permute.xlu0 3
  %1116 = vperm.xlu0 %1115, %v34
  %v1117 = vpop.permute.xlu0 %1116
  %1119 = vset.pattern.permute.xlu0 3
  %1120 = vperm.xlu0 %1119, %v35
  %v1121 = vpop.permute.xlu0 %1120
  %1123 = vset.pattern.permute.xlu0 3
  %1124 = vperm.xlu0 %1123, %v36
  %v1125 = vpop.permute.xlu0 %1124
  %1127 = vset.pattern.permute.xlu0 3
  %1128 = vperm.xlu0 %1127, %v37
  %v1129 = vpop.permute.xlu0 %1128
  %1131 = vset.pattern.permute.xlu0 3
  %1132 = vperm.xlu0 %1131, %v38
  %v1133 = vpop.permute.xlu0 %1132
  %1135 = vset.pattern.permute.xlu0 3
  %1136 = vperm.xlu0 %1135, %v39
  %v1137 = vpop.permute.xlu0 %1136
  %1139 = vset.pattern.permute.xlu0 3
  %1140 = vperm.xlu0 %1139, %v40
  %v1141 = vpop.permute.xlu0 %1140
  %1143 = vset.pattern.permute.xlu0 3
  %1144 = vperm.xlu0 %1143, %v41
  %v1145 = vpop.permute.xlu0 %1144
  %1147 = vset.pattern.permute.xlu0 3
  %1148 = vperm.xlu0 %1147, %v42
  %v1149 = vpop.permute.xlu0 %1148
  %1151 = vset.pattern.permute.xlu0 3
  %1152 = vperm.xlu0 %1151, %v43
  %v1153 = vpop.permute.xlu0 %1152
  %1155 = vset.pattern.permute.xlu0 3
  %1156 = vperm.xlu0 %1155, %v44
  %v1157 = vpop.permute.xlu0 %1156
  %1159 = vset.pattern.permute.xlu0 3
  %1160 = vperm.xlu0 %1159, %v45
  %v1161 = vpop.permute.xlu0 %1160
  %1163 = vset.pattern.permute.xlu0 3
  %1164 = vperm.xlu0 %1163, %v46
  %v1165 = vpop.permute.xlu0 %1164
  %1167 = vset.pattern.permute.xlu0 3
  %1168 = vperm.xlu0 %1167, %v47
  %v1169 = vpop.permute.xlu0 %1168
  %1171 = vset.pattern.permute.xlu0 3
  %1172 = vperm.xlu0 %1171, %v48
  %v1173 = vpop.permute.xlu0 %1172
  %1175 = vset.pattern.permute.xlu0 3
  %1176 = vperm.xlu0 %1175, %v49
  %v1177 = vpop.permute.xlu0 %1176
  %1179 = vset.pattern.permute.xlu0 3
  %1180 = vperm.xlu0 %1179, %v50
  %v1181 = vpop.permute.xlu0 %1180
  %1183 = vset.pattern.permute.xlu0 3
  %1184 = vperm.xlu0 %1183, %v51
  %v1185 = vpop.permute.xlu0 %1184
  %1187 = vset.pattern.permute.xlu0 3
  %1188 = vperm.xlu0 %1187, %v52
  %v1189 = vpop.permute.xlu0 %1188
  %1191 = vset.pattern.permute.xlu0 3
  %1192 = vperm.xlu0 %1191, %v53
  %v1193 = vpop.permute.xlu0 %1192
  %1195 = vset.pattern.permute.xlu0 3
  %1196 = vperm.xlu0 %1195, %v54
  %v1197 = vpop.permute.xlu0 %1196
  %1199 = vset.pattern.permute.xlu0 3
  %1200 = vperm.xlu0 %1199, %v55
  %v1201 = vpop.permute.xlu0 %1200
  %1203 = vset.pattern.permute.xlu0 3
  %1204 = vperm.xlu0 %1203, %v56
  %v1205 = vpop.permute.xlu0 %1204
  %1207 = vset.pattern.permute.xlu0 3
  %1208 = vperm.xlu0 %1207, %v57
  %v1209 = vpop.permute.xlu0 %1208
  %1211 = vset.pattern.permute.xlu0 3
  %1212 = vperm.xlu0 %1211, %v58
  %v1213 = vpop.permute.xlu0 %1212
  %1215 = vset.pattern.permute.xlu0 3
  %1216 = vperm.xlu0 %1215, %v59
  %v1217 = vpop.permute.xlu0 %1216
  %1219 = vset.pattern.permute.xlu0 3
  %1220 = vperm.xlu0 %1219, %v60
  %v1221 = vpop.permute.xlu0 %1220
  %1223 = vset.pattern.permute.xlu0 3
  %1224 = vperm.xlu0 %1223, %v61
  %v1225 = vpop.permute.xlu0 %1224
  %1227 = vset.pattern.permute.xlu0 3
  %1228 = vperm.xlu0 %1227, %v62
  %v1229 = vpop.permute.xlu0 %1228
  %1231 = vset.pattern.permute.xlu0 3
  %1232 = vperm.xlu0 %1231, %v63
  %v1233 = vpop.permute.xlu0 %1232
  %v1235 = vlaneseq
  %v1236 = vshrl.u32 %v1235, 7
  %v1237 = vsub.s32 3, %v1236
  %v1238 = vrot.slane %v64, %v1237
  %v1239 = vmul.f32 %v1037, %v1238
  %v1240 = vmul.f32 %v1041, %v1238
  %v1241 = vmul.f32 %v1045, %v1238
  %v1242 = vmul.f32 %v1049, %v1238
  %v1243 = vmul.f32 %v1053, %v1238
  %v1244 = vmul.f32 %v1057, %v1238
  %v1245 = vmul.f32 %v1061, %v1238
  %v1246 = vmul.f32 %v1065, %v1238
  %v1247 = vmul.f32 %v1069, %v1238
  %v1248 = vmul.f32 %v1073, %v1238
  %v1249 = vmul.f32 %v1077, %v1238
  %v1250 = vmul.f32 %v1081, %v1238
  %v1251 = vmul.f32 %v1085, %v1238
  %v1252 = vmul.f32 %v1089, %v1238
  %v1253 = vmul.f32 %v1093, %v1238
  %v1254 = vmul.f32 %v1097, %v1238
  %v1255 = vmul.f32 %v1101, %v1238
  %v1256 = vmul.f32 %v1105, %v1238
  %v1257 = vmul.f32 %v1109, %v1238
  %v1258 = vmul.f32 %v1113, %v1238
  %v1259 = vmul.f32 %v1117, %v1238
  %v1260 = vmul.f32 %v1121, %v1238
  %v1261 = vmul.f32 %v1125, %v1238
  %v1262 = vmul.f32 %v1129, %v1238
  %v1263 = vmul.f32 %v1133, %v1238
  %v1264 = vmul.f32 %v1137, %v1238
  %v1265 = vmul.f32 %v1141, %v1238
  %v1266 = vmul.f32 %v1145, %v1238
  %v1267 = vmul.f32 %v1149, %v1238
  %v1268 = vmul.f32 %v1153, %v1238
  %v1269 = vmul.f32 %v1157, %v1238
  %v1270 = vmul.f32 %v1161, %v1238
  %v1271 = vmul.f32 %v1165, %v1238
  %v1272 = vmul.f32 %v1169, %v1238
  %v1273 = vmul.f32 %v1173, %v1238
  %v1274 = vmul.f32 %v1177, %v1238
  %v1275 = vmul.f32 %v1181, %v1238
  %v1276 = vmul.f32 %v1185, %v1238
  %v1277 = vmul.f32 %v1189, %v1238
  %v1278 = vmul.f32 %v1193, %v1238
  %v1279 = vmul.f32 %v1197, %v1238
  %v1280 = vmul.f32 %v1201, %v1238
  %v1281 = vmul.f32 %v1205, %v1238
  %v1282 = vmul.f32 %v1209, %v1238
  %v1283 = vmul.f32 %v1213, %v1238
  %v1284 = vmul.f32 %v1217, %v1238
  %v1285 = vmul.f32 %v1221, %v1238
  %v1286 = vmul.f32 %v1225, %v1238
  %v1287 = vmul.f32 %v1229, %v1238
  %v1288 = vmul.f32 %v1233, %v1238
  %v1289 = vadd.f32 %v985, %v1239
  %v1290 = vadd.f32 %v986, %v1240
  %v1291 = vadd.f32 %v987, %v1241
  %v1292 = vadd.f32 %v988, %v1242
  %v1293 = vadd.f32 %v989, %v1243
  %v1294 = vadd.f32 %v990, %v1244
  %v1295 = vadd.f32 %v991, %v1245
  %v1296 = vadd.f32 %v992, %v1246
  %v1297 = vadd.f32 %v993, %v1247
  %v1298 = vadd.f32 %v994, %v1248
  %v1299 = vadd.f32 %v995, %v1249
  %v1300 = vadd.f32 %v996, %v1250
  %v1301 = vadd.f32 %v997, %v1251
  %v1302 = vadd.f32 %v998, %v1252
  %v1303 = vadd.f32 %v999, %v1253
  %v1304 = vadd.f32 %v1000, %v1254
  %v1305 = vadd.f32 %v1001, %v1255
  %v1306 = vadd.f32 %v1002, %v1256
  %v1307 = vadd.f32 %v1003, %v1257
  %v1308 = vadd.f32 %v1004, %v1258
  %v1309 = vadd.f32 %v1005, %v1259
  %v1310 = vadd.f32 %v1006, %v1260
  %v1311 = vadd.f32 %v1007, %v1261
  %v1312 = vadd.f32 %v1008, %v1262
  %v1313 = vadd.f32 %v1009, %v1263
  %v1314 = vadd.f32 %v1010, %v1264
  %v1315 = vadd.f32 %v1011, %v1265
  %v1316 = vadd.f32 %v1012, %v1266
  %v1317 = vadd.f32 %v1013, %v1267
  %v1318 = vadd.f32 %v1014, %v1268
  %v1319 = vadd.f32 %v1015, %v1269
  %v1320 = vadd.f32 %v1016, %v1270
  %v1321 = vadd.f32 %v1017, %v1271
  %v1322 = vadd.f32 %v1018, %v1272
  %v1323 = vadd.f32 %v1019, %v1273
  %v1324 = vadd.f32 %v1020, %v1274
  %v1325 = vadd.f32 %v1021, %v1275
  %v1326 = vadd.f32 %v1022, %v1276
  %v1327 = vadd.f32 %v1023, %v1277
  %v1328 = vadd.f32 %v1024, %v1278
  %v1329 = vadd.f32 %v1025, %v1279
  %v1330 = vadd.f32 %v1026, %v1280
  %v1331 = vadd.f32 %v1027, %v1281
  %v1332 = vadd.f32 %v1028, %v1282
  %v1333 = vadd.f32 %v1029, %v1283
  %v1334 = vadd.f32 %v1030, %v1284
  %v1335 = vadd.f32 %v1031, %v1285
  %v1336 = vadd.f32 %v1032, %v1286
  %v1337 = vadd.f32 %v1033, %v1287
  %v1338 = vadd.f32 %v1034, %v1288
  %1339 = vset.pattern.permute.xlu0 4
  %1340 = vperm.xlu0 %1339, %v14
  %v1341 = vpop.permute.xlu0 %1340
  %1343 = vset.pattern.permute.xlu0 4
  %1344 = vperm.xlu0 %1343, %v15
  %v1345 = vpop.permute.xlu0 %1344
  %1347 = vset.pattern.permute.xlu0 4
  %1348 = vperm.xlu0 %1347, %v16
  %v1349 = vpop.permute.xlu0 %1348
  %1351 = vset.pattern.permute.xlu0 4
  %1352 = vperm.xlu0 %1351, %v17
  %v1353 = vpop.permute.xlu0 %1352
  %1355 = vset.pattern.permute.xlu0 4
  %1356 = vperm.xlu0 %1355, %v18
  %v1357 = vpop.permute.xlu0 %1356
  %1359 = vset.pattern.permute.xlu0 4
  %1360 = vperm.xlu0 %1359, %v19
  %v1361 = vpop.permute.xlu0 %1360
  %1363 = vset.pattern.permute.xlu0 4
  %1364 = vperm.xlu0 %1363, %v20
  %v1365 = vpop.permute.xlu0 %1364
  %1367 = vset.pattern.permute.xlu0 4
  %1368 = vperm.xlu0 %1367, %v21
  %v1369 = vpop.permute.xlu0 %1368
  %1371 = vset.pattern.permute.xlu0 4
  %1372 = vperm.xlu0 %1371, %v22
  %v1373 = vpop.permute.xlu0 %1372
  %1375 = vset.pattern.permute.xlu0 4
  %1376 = vperm.xlu0 %1375, %v23
  %v1377 = vpop.permute.xlu0 %1376
  %1379 = vset.pattern.permute.xlu0 4
  %1380 = vperm.xlu0 %1379, %v24
  %v1381 = vpop.permute.xlu0 %1380
  %1383 = vset.pattern.permute.xlu0 4
  %1384 = vperm.xlu0 %1383, %v25
  %v1385 = vpop.permute.xlu0 %1384
  %1387 = vset.pattern.permute.xlu0 4
  %1388 = vperm.xlu0 %1387, %v26
  %v1389 = vpop.permute.xlu0 %1388
  %1391 = vset.pattern.permute.xlu0 4
  %1392 = vperm.xlu0 %1391, %v27
  %v1393 = vpop.permute.xlu0 %1392
  %1395 = vset.pattern.permute.xlu0 4
  %1396 = vperm.xlu0 %1395, %v28
  %v1397 = vpop.permute.xlu0 %1396
  %1399 = vset.pattern.permute.xlu0 4
  %1400 = vperm.xlu0 %1399, %v29
  %v1401 = vpop.permute.xlu0 %1400
  %1403 = vset.pattern.permute.xlu0 4
  %1404 = vperm.xlu0 %1403, %v30
  %v1405 = vpop.permute.xlu0 %1404
  %1407 = vset.pattern.permute.xlu0 4
  %1408 = vperm.xlu0 %1407, %v31
  %v1409 = vpop.permute.xlu0 %1408
  %1411 = vset.pattern.permute.xlu0 4
  %1412 = vperm.xlu0 %1411, %v32
  %v1413 = vpop.permute.xlu0 %1412
  %1415 = vset.pattern.permute.xlu0 4
  %1416 = vperm.xlu0 %1415, %v33
  %v1417 = vpop.permute.xlu0 %1416
  %1419 = vset.pattern.permute.xlu0 4
  %1420 = vperm.xlu0 %1419, %v34
  %v1421 = vpop.permute.xlu0 %1420
  %1423 = vset.pattern.permute.xlu0 4
  %1424 = vperm.xlu0 %1423, %v35
  %v1425 = vpop.permute.xlu0 %1424
  %1427 = vset.pattern.permute.xlu0 4
  %1428 = vperm.xlu0 %1427, %v36
  %v1429 = vpop.permute.xlu0 %1428
  %1431 = vset.pattern.permute.xlu0 4
  %1432 = vperm.xlu0 %1431, %v37
  %v1433 = vpop.permute.xlu0 %1432
  %1435 = vset.pattern.permute.xlu0 4
  %1436 = vperm.xlu0 %1435, %v38
  %v1437 = vpop.permute.xlu0 %1436
  %1439 = vset.pattern.permute.xlu0 4
  %1440 = vperm.xlu0 %1439, %v39
  %v1441 = vpop.permute.xlu0 %1440
  %1443 = vset.pattern.permute.xlu0 4
  %1444 = vperm.xlu0 %1443, %v40
  %v1445 = vpop.permute.xlu0 %1444
  %1447 = vset.pattern.permute.xlu0 4
  %1448 = vperm.xlu0 %1447, %v41
  %v1449 = vpop.permute.xlu0 %1448
  %1451 = vset.pattern.permute.xlu0 4
  %1452 = vperm.xlu0 %1451, %v42
  %v1453 = vpop.permute.xlu0 %1452
  %1455 = vset.pattern.permute.xlu0 4
  %1456 = vperm.xlu0 %1455, %v43
  %v1457 = vpop.permute.xlu0 %1456
  %1459 = vset.pattern.permute.xlu0 4
  %1460 = vperm.xlu0 %1459, %v44
  %v1461 = vpop.permute.xlu0 %1460
  %1463 = vset.pattern.permute.xlu0 4
  %1464 = vperm.xlu0 %1463, %v45
  %v1465 = vpop.permute.xlu0 %1464
  %1467 = vset.pattern.permute.xlu0 4
  %1468 = vperm.xlu0 %1467, %v46
  %v1469 = vpop.permute.xlu0 %1468
  %1471 = vset.pattern.permute.xlu0 4
  %1472 = vperm.xlu0 %1471, %v47
  %v1473 = vpop.permute.xlu0 %1472
  %1475 = vset.pattern.permute.xlu0 4
  %1476 = vperm.xlu0 %1475, %v48
  %v1477 = vpop.permute.xlu0 %1476
  %1479 = vset.pattern.permute.xlu0 4
  %1480 = vperm.xlu0 %1479, %v49
  %v1481 = vpop.permute.xlu0 %1480
  %1483 = vset.pattern.permute.xlu0 4
  %1484 = vperm.xlu0 %1483, %v50
  %v1485 = vpop.permute.xlu0 %1484
  %1487 = vset.pattern.permute.xlu0 4
  %1488 = vperm.xlu0 %1487, %v51
  %v1489 = vpop.permute.xlu0 %1488
  %1491 = vset.pattern.permute.xlu0 4
  %1492 = vperm.xlu0 %1491, %v52
  %v1493 = vpop.permute.xlu0 %1492
  %1495 = vset.pattern.permute.xlu0 4
  %1496 = vperm.xlu0 %1495, %v53
  %v1497 = vpop.permute.xlu0 %1496
  %1499 = vset.pattern.permute.xlu0 4
  %1500 = vperm.xlu0 %1499, %v54
  %v1501 = vpop.permute.xlu0 %1500
  %1503 = vset.pattern.permute.xlu0 4
  %1504 = vperm.xlu0 %1503, %v55
  %v1505 = vpop.permute.xlu0 %1504
  %1507 = vset.pattern.permute.xlu0 4
  %1508 = vperm.xlu0 %1507, %v56
  %v1509 = vpop.permute.xlu0 %1508
  %1511 = vset.pattern.permute.xlu0 4
  %1512 = vperm.xlu0 %1511, %v57
  %v1513 = vpop.permute.xlu0 %1512
  %1515 = vset.pattern.permute.xlu0 4
  %1516 = vperm.xlu0 %1515, %v58
  %v1517 = vpop.permute.xlu0 %1516
  %1519 = vset.pattern.permute.xlu0 4
  %1520 = vperm.xlu0 %1519, %v59
  %v1521 = vpop.permute.xlu0 %1520
  %1523 = vset.pattern.permute.xlu0 4
  %1524 = vperm.xlu0 %1523, %v60
  %v1525 = vpop.permute.xlu0 %1524
  %1527 = vset.pattern.permute.xlu0 4
  %1528 = vperm.xlu0 %1527, %v61
  %v1529 = vpop.permute.xlu0 %1528
  %1531 = vset.pattern.permute.xlu0 4
  %1532 = vperm.xlu0 %1531, %v62
  %v1533 = vpop.permute.xlu0 %1532
  %1535 = vset.pattern.permute.xlu0 4
  %1536 = vperm.xlu0 %1535, %v63
  %v1537 = vpop.permute.xlu0 %1536
  %v1539 = vlaneseq
  %v1540 = vshrl.u32 %v1539, 7
  %v1541 = vsub.s32 4, %v1540
  %v1542 = vrot.slane %v64, %v1541
  %v1543 = vmul.f32 %v1341, %v1542
  %v1544 = vmul.f32 %v1345, %v1542
  %v1545 = vmul.f32 %v1349, %v1542
  %v1546 = vmul.f32 %v1353, %v1542
  %v1547 = vmul.f32 %v1357, %v1542
  %v1548 = vmul.f32 %v1361, %v1542
  %v1549 = vmul.f32 %v1365, %v1542
  %v1550 = vmul.f32 %v1369, %v1542
  %v1551 = vmul.f32 %v1373, %v1542
  %v1552 = vmul.f32 %v1377, %v1542
  %v1553 = vmul.f32 %v1381, %v1542
  %v1554 = vmul.f32 %v1385, %v1542
  %v1555 = vmul.f32 %v1389, %v1542
  %v1556 = vmul.f32 %v1393, %v1542
  %v1557 = vmul.f32 %v1397, %v1542
  %v1558 = vmul.f32 %v1401, %v1542
  %v1559 = vmul.f32 %v1405, %v1542
  %v1560 = vmul.f32 %v1409, %v1542
  %v1561 = vmul.f32 %v1413, %v1542
  %v1562 = vmul.f32 %v1417, %v1542
  %v1563 = vmul.f32 %v1421, %v1542
  %v1564 = vmul.f32 %v1425, %v1542
  %v1565 = vmul.f32 %v1429, %v1542
  %v1566 = vmul.f32 %v1433, %v1542
  %v1567 = vmul.f32 %v1437, %v1542
  %v1568 = vmul.f32 %v1441, %v1542
  %v1569 = vmul.f32 %v1445, %v1542
  %v1570 = vmul.f32 %v1449, %v1542
  %v1571 = vmul.f32 %v1453, %v1542
  %v1572 = vmul.f32 %v1457, %v1542
  %v1573 = vmul.f32 %v1461, %v1542
  %v1574 = vmul.f32 %v1465, %v1542
  %v1575 = vmul.f32 %v1469, %v1542
  %v1576 = vmul.f32 %v1473, %v1542
  %v1577 = vmul.f32 %v1477, %v1542
  %v1578 = vmul.f32 %v1481, %v1542
  %v1579 = vmul.f32 %v1485, %v1542
  %v1580 = vmul.f32 %v1489, %v1542
  %v1581 = vmul.f32 %v1493, %v1542
  %v1582 = vmul.f32 %v1497, %v1542
  %v1583 = vmul.f32 %v1501, %v1542
  %v1584 = vmul.f32 %v1505, %v1542
  %v1585 = vmul.f32 %v1509, %v1542
  %v1586 = vmul.f32 %v1513, %v1542
  %v1587 = vmul.f32 %v1517, %v1542
  %v1588 = vmul.f32 %v1521, %v1542
  %v1589 = vmul.f32 %v1525, %v1542
  %v1590 = vmul.f32 %v1529, %v1542
  %v1591 = vmul.f32 %v1533, %v1542
  %v1592 = vmul.f32 %v1537, %v1542
  %v1593 = vadd.f32 %v1289, %v1543
  %v1594 = vadd.f32 %v1290, %v1544
  %v1595 = vadd.f32 %v1291, %v1545
  %v1596 = vadd.f32 %v1292, %v1546
  %v1597 = vadd.f32 %v1293, %v1547
  %v1598 = vadd.f32 %v1294, %v1548
  %v1599 = vadd.f32 %v1295, %v1549
  %v1600 = vadd.f32 %v1296, %v1550
  %v1601 = vadd.f32 %v1297, %v1551
  %v1602 = vadd.f32 %v1298, %v1552
  %v1603 = vadd.f32 %v1299, %v1553
  %v1604 = vadd.f32 %v1300, %v1554
  %v1605 = vadd.f32 %v1301, %v1555
  %v1606 = vadd.f32 %v1302, %v1556
  %v1607 = vadd.f32 %v1303, %v1557
  %v1608 = vadd.f32 %v1304, %v1558
  %v1609 = vadd.f32 %v1305, %v1559
  %v1610 = vadd.f32 %v1306, %v1560
  %v1611 = vadd.f32 %v1307, %v1561
  %v1612 = vadd.f32 %v1308, %v1562
  %v1613 = vadd.f32 %v1309, %v1563
  %v1614 = vadd.f32 %v1310, %v1564
  %v1615 = vadd.f32 %v1311, %v1565
  %v1616 = vadd.f32 %v1312, %v1566
  %v1617 = vadd.f32 %v1313, %v1567
  %v1618 = vadd.f32 %v1314, %v1568
  %v1619 = vadd.f32 %v1315, %v1569
  %v1620 = vadd.f32 %v1316, %v1570
  %v1621 = vadd.f32 %v1317, %v1571
  %v1622 = vadd.f32 %v1318, %v1572
  %v1623 = vadd.f32 %v1319, %v1573
  %v1624 = vadd.f32 %v1320, %v1574
  %v1625 = vadd.f32 %v1321, %v1575
  %v1626 = vadd.f32 %v1322, %v1576
  %v1627 = vadd.f32 %v1323, %v1577
  %v1628 = vadd.f32 %v1324, %v1578
  %v1629 = vadd.f32 %v1325, %v1579
  %v1630 = vadd.f32 %v1326, %v1580
  %v1631 = vadd.f32 %v1327, %v1581
  %v1632 = vadd.f32 %v1328, %v1582
  %v1633 = vadd.f32 %v1329, %v1583
  %v1634 = vadd.f32 %v1330, %v1584
  %v1635 = vadd.f32 %v1331, %v1585
  %v1636 = vadd.f32 %v1332, %v1586
  %v1637 = vadd.f32 %v1333, %v1587
  %v1638 = vadd.f32 %v1334, %v1588
  %v1639 = vadd.f32 %v1335, %v1589
  %v1640 = vadd.f32 %v1336, %v1590
  %v1641 = vadd.f32 %v1337, %v1591
  %v1642 = vadd.f32 %v1338, %v1592
  %1643 = vset.pattern.permute.xlu0 5
  %1644 = vperm.xlu0 %1643, %v14
  %v1645 = vpop.permute.xlu0 %1644
  %1647 = vset.pattern.permute.xlu0 5
  %1648 = vperm.xlu0 %1647, %v15
  %v1649 = vpop.permute.xlu0 %1648
  %1651 = vset.pattern.permute.xlu0 5
  %1652 = vperm.xlu0 %1651, %v16
  %v1653 = vpop.permute.xlu0 %1652
  %1655 = vset.pattern.permute.xlu0 5
  %1656 = vperm.xlu0 %1655, %v17
  %v1657 = vpop.permute.xlu0 %1656
  %1659 = vset.pattern.permute.xlu0 5
  %1660 = vperm.xlu0 %1659, %v18
  %v1661 = vpop.permute.xlu0 %1660
  %1663 = vset.pattern.permute.xlu0 5
  %1664 = vperm.xlu0 %1663, %v19
  %v1665 = vpop.permute.xlu0 %1664
  %1667 = vset.pattern.permute.xlu0 5
  %1668 = vperm.xlu0 %1667, %v20
  %v1669 = vpop.permute.xlu0 %1668
  %1671 = vset.pattern.permute.xlu0 5
  %1672 = vperm.xlu0 %1671, %v21
  %v1673 = vpop.permute.xlu0 %1672
  %1675 = vset.pattern.permute.xlu0 5
  %1676 = vperm.xlu0 %1675, %v22
  %v1677 = vpop.permute.xlu0 %1676
  %1679 = vset.pattern.permute.xlu0 5
  %1680 = vperm.xlu0 %1679, %v23
  %v1681 = vpop.permute.xlu0 %1680
  %1683 = vset.pattern.permute.xlu0 5
  %1684 = vperm.xlu0 %1683, %v24
  %v1685 = vpop.permute.xlu0 %1684
  %1687 = vset.pattern.permute.xlu0 5
  %1688 = vperm.xlu0 %1687, %v25
  %v1689 = vpop.permute.xlu0 %1688
  %1691 = vset.pattern.permute.xlu0 5
  %1692 = vperm.xlu0 %1691, %v26
  %v1693 = vpop.permute.xlu0 %1692
  %1695 = vset.pattern.permute.xlu0 5
  %1696 = vperm.xlu0 %1695, %v27
  %v1697 = vpop.permute.xlu0 %1696
  %1699 = vset.pattern.permute.xlu0 5
  %1700 = vperm.xlu0 %1699, %v28
  %v1701 = vpop.permute.xlu0 %1700
  %1703 = vset.pattern.permute.xlu0 5
  %1704 = vperm.xlu0 %1703, %v29
  %v1705 = vpop.permute.xlu0 %1704
  %1707 = vset.pattern.permute.xlu0 5
  %1708 = vperm.xlu0 %1707, %v30
  %v1709 = vpop.permute.xlu0 %1708
  %1711 = vset.pattern.permute.xlu0 5
  %1712 = vperm.xlu0 %1711, %v31
  %v1713 = vpop.permute.xlu0 %1712
  %1715 = vset.pattern.permute.xlu0 5
  %1716 = vperm.xlu0 %1715, %v32
  %v1717 = vpop.permute.xlu0 %1716
  %1719 = vset.pattern.permute.xlu0 5
  %1720 = vperm.xlu0 %1719, %v33
  %v1721 = vpop.permute.xlu0 %1720
  %1723 = vset.pattern.permute.xlu0 5
  %1724 = vperm.xlu0 %1723, %v34
  %v1725 = vpop.permute.xlu0 %1724
  %1727 = vset.pattern.permute.xlu0 5
  %1728 = vperm.xlu0 %1727, %v35
  %v1729 = vpop.permute.xlu0 %1728
  %1731 = vset.pattern.permute.xlu0 5
  %1732 = vperm.xlu0 %1731, %v36
  %v1733 = vpop.permute.xlu0 %1732
  %1735 = vset.pattern.permute.xlu0 5
  %1736 = vperm.xlu0 %1735, %v37
  %v1737 = vpop.permute.xlu0 %1736
  %1739 = vset.pattern.permute.xlu0 5
  %1740 = vperm.xlu0 %1739, %v38
  %v1741 = vpop.permute.xlu0 %1740
  %1743 = vset.pattern.permute.xlu0 5
  %1744 = vperm.xlu0 %1743, %v39
  %v1745 = vpop.permute.xlu0 %1744
  %1747 = vset.pattern.permute.xlu0 5
  %1748 = vperm.xlu0 %1747, %v40
  %v1749 = vpop.permute.xlu0 %1748
  %1751 = vset.pattern.permute.xlu0 5
  %1752 = vperm.xlu0 %1751, %v41
  %v1753 = vpop.permute.xlu0 %1752
  %1755 = vset.pattern.permute.xlu0 5
  %1756 = vperm.xlu0 %1755, %v42
  %v1757 = vpop.permute.xlu0 %1756
  %1759 = vset.pattern.permute.xlu0 5
  %1760 = vperm.xlu0 %1759, %v43
  %v1761 = vpop.permute.xlu0 %1760
  %1763 = vset.pattern.permute.xlu0 5
  %1764 = vperm.xlu0 %1763, %v44
  %v1765 = vpop.permute.xlu0 %1764
  %1767 = vset.pattern.permute.xlu0 5
  %1768 = vperm.xlu0 %1767, %v45
  %v1769 = vpop.permute.xlu0 %1768
  %1771 = vset.pattern.permute.xlu0 5
  %1772 = vperm.xlu0 %1771, %v46
  %v1773 = vpop.permute.xlu0 %1772
  %1775 = vset.pattern.permute.xlu0 5
  %1776 = vperm.xlu0 %1775, %v47
  %v1777 = vpop.permute.xlu0 %1776
  %1779 = vset.pattern.permute.xlu0 5
  %1780 = vperm.xlu0 %1779, %v48
  %v1781 = vpop.permute.xlu0 %1780
  %1783 = vset.pattern.permute.xlu0 5
  %1784 = vperm.xlu0 %1783, %v49
  %v1785 = vpop.permute.xlu0 %1784
  %1787 = vset.pattern.permute.xlu0 5
  %1788 = vperm.xlu0 %1787, %v50
  %v1789 = vpop.permute.xlu0 %1788
  %1791 = vset.pattern.permute.xlu0 5
  %1792 = vperm.xlu0 %1791, %v51
  %v1793 = vpop.permute.xlu0 %1792
  %1795 = vset.pattern.permute.xlu0 5
  %1796 = vperm.xlu0 %1795, %v52
  %v1797 = vpop.permute.xlu0 %1796
  %1799 = vset.pattern.permute.xlu0 5
  %1800 = vperm.xlu0 %1799, %v53
  %v1801 = vpop.permute.xlu0 %1800
  %1803 = vset.pattern.permute.xlu0 5
  %1804 = vperm.xlu0 %1803, %v54
  %v1805 = vpop.permute.xlu0 %1804
  %1807 = vset.pattern.permute.xlu0 5
  %1808 = vperm.xlu0 %1807, %v55
  %v1809 = vpop.permute.xlu0 %1808
  %1811 = vset.pattern.permute.xlu0 5
  %1812 = vperm.xlu0 %1811, %v56
  %v1813 = vpop.permute.xlu0 %1812
  %1815 = vset.pattern.permute.xlu0 5
  %1816 = vperm.xlu0 %1815, %v57
  %v1817 = vpop.permute.xlu0 %1816
  %1819 = vset.pattern.permute.xlu0 5
  %1820 = vperm.xlu0 %1819, %v58
  %v1821 = vpop.permute.xlu0 %1820
  %1823 = vset.pattern.permute.xlu0 5
  %1824 = vperm.xlu0 %1823, %v59
  %v1825 = vpop.permute.xlu0 %1824
  %1827 = vset.pattern.permute.xlu0 5
  %1828 = vperm.xlu0 %1827, %v60
  %v1829 = vpop.permute.xlu0 %1828
  %1831 = vset.pattern.permute.xlu0 5
  %1832 = vperm.xlu0 %1831, %v61
  %v1833 = vpop.permute.xlu0 %1832
  %1835 = vset.pattern.permute.xlu0 5
  %1836 = vperm.xlu0 %1835, %v62
  %v1837 = vpop.permute.xlu0 %1836
  %1839 = vset.pattern.permute.xlu0 5
  %1840 = vperm.xlu0 %1839, %v63
  %v1841 = vpop.permute.xlu0 %1840
  %v1843 = vlaneseq
  %v1844 = vshrl.u32 %v1843, 7
  %v1845 = vsub.s32 5, %v1844
  %v1846 = vrot.slane %v64, %v1845
  %v1847 = vmul.f32 %v1645, %v1846
  %v1848 = vmul.f32 %v1649, %v1846
  %v1849 = vmul.f32 %v1653, %v1846
  %v1850 = vmul.f32 %v1657, %v1846
  %v1851 = vmul.f32 %v1661, %v1846
  %v1852 = vmul.f32 %v1665, %v1846
  %v1853 = vmul.f32 %v1669, %v1846
  %v1854 = vmul.f32 %v1673, %v1846
  %v1855 = vmul.f32 %v1677, %v1846
  %v1856 = vmul.f32 %v1681, %v1846
  %v1857 = vmul.f32 %v1685, %v1846
  %v1858 = vmul.f32 %v1689, %v1846
  %v1859 = vmul.f32 %v1693, %v1846
  %v1860 = vmul.f32 %v1697, %v1846
  %v1861 = vmul.f32 %v1701, %v1846
  %v1862 = vmul.f32 %v1705, %v1846
  %v1863 = vmul.f32 %v1709, %v1846
  %v1864 = vmul.f32 %v1713, %v1846
  %v1865 = vmul.f32 %v1717, %v1846
  %v1866 = vmul.f32 %v1721, %v1846
  %v1867 = vmul.f32 %v1725, %v1846
  %v1868 = vmul.f32 %v1729, %v1846
  %v1869 = vmul.f32 %v1733, %v1846
  %v1870 = vmul.f32 %v1737, %v1846
  %v1871 = vmul.f32 %v1741, %v1846
  %v1872 = vmul.f32 %v1745, %v1846
  %v1873 = vmul.f32 %v1749, %v1846
  %v1874 = vmul.f32 %v1753, %v1846
  %v1875 = vmul.f32 %v1757, %v1846
  %v1876 = vmul.f32 %v1761, %v1846
  %v1877 = vmul.f32 %v1765, %v1846
  %v1878 = vmul.f32 %v1769, %v1846
  %v1879 = vmul.f32 %v1773, %v1846
  %v1880 = vmul.f32 %v1777, %v1846
  %v1881 = vmul.f32 %v1781, %v1846
  %v1882 = vmul.f32 %v1785, %v1846
  %v1883 = vmul.f32 %v1789, %v1846
  %v1884 = vmul.f32 %v1793, %v1846
  %v1885 = vmul.f32 %v1797, %v1846
  %v1886 = vmul.f32 %v1801, %v1846
  %v1887 = vmul.f32 %v1805, %v1846
  %v1888 = vmul.f32 %v1809, %v1846
  %v1889 = vmul.f32 %v1813, %v1846
  %v1890 = vmul.f32 %v1817, %v1846
  %v1891 = vmul.f32 %v1821, %v1846
  %v1892 = vmul.f32 %v1825, %v1846
  %v1893 = vmul.f32 %v1829, %v1846
  %v1894 = vmul.f32 %v1833, %v1846
  %v1895 = vmul.f32 %v1837, %v1846
  %v1896 = vmul.f32 %v1841, %v1846
  %v1897 = vadd.f32 %v1593, %v1847
  %v1898 = vadd.f32 %v1594, %v1848
  %v1899 = vadd.f32 %v1595, %v1849
  %v1900 = vadd.f32 %v1596, %v1850
  %v1901 = vadd.f32 %v1597, %v1851
  %v1902 = vadd.f32 %v1598, %v1852
  %v1903 = vadd.f32 %v1599, %v1853
  %v1904 = vadd.f32 %v1600, %v1854
  %v1905 = vadd.f32 %v1601, %v1855
  %v1906 = vadd.f32 %v1602, %v1856
  %v1907 = vadd.f32 %v1603, %v1857
  %v1908 = vadd.f32 %v1604, %v1858
  %v1909 = vadd.f32 %v1605, %v1859
  %v1910 = vadd.f32 %v1606, %v1860
  %v1911 = vadd.f32 %v1607, %v1861
  %v1912 = vadd.f32 %v1608, %v1862
  %v1913 = vadd.f32 %v1609, %v1863
  %v1914 = vadd.f32 %v1610, %v1864
  %v1915 = vadd.f32 %v1611, %v1865
  %v1916 = vadd.f32 %v1612, %v1866
  %v1917 = vadd.f32 %v1613, %v1867
  %v1918 = vadd.f32 %v1614, %v1868
  %v1919 = vadd.f32 %v1615, %v1869
  %v1920 = vadd.f32 %v1616, %v1870
  %v1921 = vadd.f32 %v1617, %v1871
  %v1922 = vadd.f32 %v1618, %v1872
  %v1923 = vadd.f32 %v1619, %v1873
  %v1924 = vadd.f32 %v1620, %v1874
  %v1925 = vadd.f32 %v1621, %v1875
  %v1926 = vadd.f32 %v1622, %v1876
  %v1927 = vadd.f32 %v1623, %v1877
  %v1928 = vadd.f32 %v1624, %v1878
  %v1929 = vadd.f32 %v1625, %v1879
  %v1930 = vadd.f32 %v1626, %v1880
  %v1931 = vadd.f32 %v1627, %v1881
  %v1932 = vadd.f32 %v1628, %v1882
  %v1933 = vadd.f32 %v1629, %v1883
  %v1934 = vadd.f32 %v1630, %v1884
  %v1935 = vadd.f32 %v1631, %v1885
  %v1936 = vadd.f32 %v1632, %v1886
  %v1937 = vadd.f32 %v1633, %v1887
  %v1938 = vadd.f32 %v1634, %v1888
  %v1939 = vadd.f32 %v1635, %v1889
  %v1940 = vadd.f32 %v1636, %v1890
  %v1941 = vadd.f32 %v1637, %v1891
  %v1942 = vadd.f32 %v1638, %v1892
  %v1943 = vadd.f32 %v1639, %v1893
  %v1944 = vadd.f32 %v1640, %v1894
  %v1945 = vadd.f32 %v1641, %v1895
  %v1946 = vadd.f32 %v1642, %v1896
  %1947 = vset.pattern.permute.xlu0 6
  %1948 = vperm.xlu0 %1947, %v14
  %v1949 = vpop.permute.xlu0 %1948
  %1951 = vset.pattern.permute.xlu0 6
  %1952 = vperm.xlu0 %1951, %v15
  %v1953 = vpop.permute.xlu0 %1952
  %1955 = vset.pattern.permute.xlu0 6
  %1956 = vperm.xlu0 %1955, %v16
  %v1957 = vpop.permute.xlu0 %1956
  %1959 = vset.pattern.permute.xlu0 6
  %1960 = vperm.xlu0 %1959, %v17
  %v1961 = vpop.permute.xlu0 %1960
  %1963 = vset.pattern.permute.xlu0 6
  %1964 = vperm.xlu0 %1963, %v18
  %v1965 = vpop.permute.xlu0 %1964
  %1967 = vset.pattern.permute.xlu0 6
  %1968 = vperm.xlu0 %1967, %v19
  %v1969 = vpop.permute.xlu0 %1968
  %1971 = vset.pattern.permute.xlu0 6
  %1972 = vperm.xlu0 %1971, %v20
  %v1973 = vpop.permute.xlu0 %1972
  %1975 = vset.pattern.permute.xlu0 6
  %1976 = vperm.xlu0 %1975, %v21
  %v1977 = vpop.permute.xlu0 %1976
  %1979 = vset.pattern.permute.xlu0 6
  %1980 = vperm.xlu0 %1979, %v22
  %v1981 = vpop.permute.xlu0 %1980
  %1983 = vset.pattern.permute.xlu0 6
  %1984 = vperm.xlu0 %1983, %v23
  %v1985 = vpop.permute.xlu0 %1984
  %1987 = vset.pattern.permute.xlu0 6
  %1988 = vperm.xlu0 %1987, %v24
  %v1989 = vpop.permute.xlu0 %1988
  %1991 = vset.pattern.permute.xlu0 6
  %1992 = vperm.xlu0 %1991, %v25
  %v1993 = vpop.permute.xlu0 %1992
  %1995 = vset.pattern.permute.xlu0 6
  %1996 = vperm.xlu0 %1995, %v26
  %v1997 = vpop.permute.xlu0 %1996
  %1999 = vset.pattern.permute.xlu0 6
  %2000 = vperm.xlu0 %1999, %v27
  %v2001 = vpop.permute.xlu0 %2000
  %2003 = vset.pattern.permute.xlu0 6
  %2004 = vperm.xlu0 %2003, %v28
  %v2005 = vpop.permute.xlu0 %2004
  %2007 = vset.pattern.permute.xlu0 6
  %2008 = vperm.xlu0 %2007, %v29
  %v2009 = vpop.permute.xlu0 %2008
  %2011 = vset.pattern.permute.xlu0 6
  %2012 = vperm.xlu0 %2011, %v30
  %v2013 = vpop.permute.xlu0 %2012
  %2015 = vset.pattern.permute.xlu0 6
  %2016 = vperm.xlu0 %2015, %v31
  %v2017 = vpop.permute.xlu0 %2016
  %2019 = vset.pattern.permute.xlu0 6
  %2020 = vperm.xlu0 %2019, %v32
  %v2021 = vpop.permute.xlu0 %2020
  %2023 = vset.pattern.permute.xlu0 6
  %2024 = vperm.xlu0 %2023, %v33
  %v2025 = vpop.permute.xlu0 %2024
  %2027 = vset.pattern.permute.xlu0 6
  %2028 = vperm.xlu0 %2027, %v34
  %v2029 = vpop.permute.xlu0 %2028
  %2031 = vset.pattern.permute.xlu0 6
  %2032 = vperm.xlu0 %2031, %v35
  %v2033 = vpop.permute.xlu0 %2032
  %2035 = vset.pattern.permute.xlu0 6
  %2036 = vperm.xlu0 %2035, %v36
  %v2037 = vpop.permute.xlu0 %2036
  %2039 = vset.pattern.permute.xlu0 6
  %2040 = vperm.xlu0 %2039, %v37
  %v2041 = vpop.permute.xlu0 %2040
  %2043 = vset.pattern.permute.xlu0 6
  %2044 = vperm.xlu0 %2043, %v38
  %v2045 = vpop.permute.xlu0 %2044
  %2047 = vset.pattern.permute.xlu0 6
  %2048 = vperm.xlu0 %2047, %v39
  %v2049 = vpop.permute.xlu0 %2048
  %2051 = vset.pattern.permute.xlu0 6
  %2052 = vperm.xlu0 %2051, %v40
  %v2053 = vpop.permute.xlu0 %2052
  %2055 = vset.pattern.permute.xlu0 6
  %2056 = vperm.xlu0 %2055, %v41
  %v2057 = vpop.permute.xlu0 %2056
  %2059 = vset.pattern.permute.xlu0 6
  %2060 = vperm.xlu0 %2059, %v42
  %v2061 = vpop.permute.xlu0 %2060
  %2063 = vset.pattern.permute.xlu0 6
  %2064 = vperm.xlu0 %2063, %v43
  %v2065 = vpop.permute.xlu0 %2064
  %2067 = vset.pattern.permute.xlu0 6
  %2068 = vperm.xlu0 %2067, %v44
  %v2069 = vpop.permute.xlu0 %2068
  %2071 = vset.pattern.permute.xlu0 6
  %2072 = vperm.xlu0 %2071, %v45
  %v2073 = vpop.permute.xlu0 %2072
  %2075 = vset.pattern.permute.xlu0 6
  %2076 = vperm.xlu0 %2075, %v46
  %v2077 = vpop.permute.xlu0 %2076
  %2079 = vset.pattern.permute.xlu0 6
  %2080 = vperm.xlu0 %2079, %v47
  %v2081 = vpop.permute.xlu0 %2080
  %2083 = vset.pattern.permute.xlu0 6
  %2084 = vperm.xlu0 %2083, %v48
  %v2085 = vpop.permute.xlu0 %2084
  %2087 = vset.pattern.permute.xlu0 6
  %2088 = vperm.xlu0 %2087, %v49
  %v2089 = vpop.permute.xlu0 %2088
  %2091 = vset.pattern.permute.xlu0 6
  %2092 = vperm.xlu0 %2091, %v50
  %v2093 = vpop.permute.xlu0 %2092
  %2095 = vset.pattern.permute.xlu0 6
  %2096 = vperm.xlu0 %2095, %v51
  %v2097 = vpop.permute.xlu0 %2096
  %2099 = vset.pattern.permute.xlu0 6
  %2100 = vperm.xlu0 %2099, %v52
  %v2101 = vpop.permute.xlu0 %2100
  %2103 = vset.pattern.permute.xlu0 6
  %2104 = vperm.xlu0 %2103, %v53
  %v2105 = vpop.permute.xlu0 %2104
  %2107 = vset.pattern.permute.xlu0 6
  %2108 = vperm.xlu0 %2107, %v54
  %v2109 = vpop.permute.xlu0 %2108
  %2111 = vset.pattern.permute.xlu0 6
  %2112 = vperm.xlu0 %2111, %v55
  %v2113 = vpop.permute.xlu0 %2112
  %2115 = vset.pattern.permute.xlu0 6
  %2116 = vperm.xlu0 %2115, %v56
  %v2117 = vpop.permute.xlu0 %2116
  %2119 = vset.pattern.permute.xlu0 6
  %2120 = vperm.xlu0 %2119, %v57
  %v2121 = vpop.permute.xlu0 %2120
  %2123 = vset.pattern.permute.xlu0 6
  %2124 = vperm.xlu0 %2123, %v58
  %v2125 = vpop.permute.xlu0 %2124
  %2127 = vset.pattern.permute.xlu0 6
  %2128 = vperm.xlu0 %2127, %v59
  %v2129 = vpop.permute.xlu0 %2128
  %2131 = vset.pattern.permute.xlu0 6
  %2132 = vperm.xlu0 %2131, %v60
  %v2133 = vpop.permute.xlu0 %2132
  %2135 = vset.pattern.permute.xlu0 6
  %2136 = vperm.xlu0 %2135, %v61
  %v2137 = vpop.permute.xlu0 %2136
  %2139 = vset.pattern.permute.xlu0 6
  %2140 = vperm.xlu0 %2139, %v62
  %v2141 = vpop.permute.xlu0 %2140
  %2143 = vset.pattern.permute.xlu0 6
  %2144 = vperm.xlu0 %2143, %v63
  %v2145 = vpop.permute.xlu0 %2144
  %v2147 = vlaneseq
  %v2148 = vshrl.u32 %v2147, 7
  %v2149 = vsub.s32 6, %v2148
  %v2150 = vrot.slane %v64, %v2149
  %v2151 = vmul.f32 %v1949, %v2150
  %v2152 = vmul.f32 %v1953, %v2150
  %v2153 = vmul.f32 %v1957, %v2150
  %v2154 = vmul.f32 %v1961, %v2150
  %v2155 = vmul.f32 %v1965, %v2150
  %v2156 = vmul.f32 %v1969, %v2150
  %v2157 = vmul.f32 %v1973, %v2150
  %v2158 = vmul.f32 %v1977, %v2150
  %v2159 = vmul.f32 %v1981, %v2150
  %v2160 = vmul.f32 %v1985, %v2150
  %v2161 = vmul.f32 %v1989, %v2150
  %v2162 = vmul.f32 %v1993, %v2150
  %v2163 = vmul.f32 %v1997, %v2150
  %v2164 = vmul.f32 %v2001, %v2150
  %v2165 = vmul.f32 %v2005, %v2150
  %v2166 = vmul.f32 %v2009, %v2150
  %v2167 = vmul.f32 %v2013, %v2150
  %v2168 = vmul.f32 %v2017, %v2150
  %v2169 = vmul.f32 %v2021, %v2150
  %v2170 = vmul.f32 %v2025, %v2150
  %v2171 = vmul.f32 %v2029, %v2150
  %v2172 = vmul.f32 %v2033, %v2150
  %v2173 = vmul.f32 %v2037, %v2150
  %v2174 = vmul.f32 %v2041, %v2150
  %v2175 = vmul.f32 %v2045, %v2150
  %v2176 = vmul.f32 %v2049, %v2150
  %v2177 = vmul.f32 %v2053, %v2150
  %v2178 = vmul.f32 %v2057, %v2150
  %v2179 = vmul.f32 %v2061, %v2150
  %v2180 = vmul.f32 %v2065, %v2150
  %v2181 = vmul.f32 %v2069, %v2150
  %v2182 = vmul.f32 %v2073, %v2150
  %v2183 = vmul.f32 %v2077, %v2150
  %v2184 = vmul.f32 %v2081, %v2150
  %v2185 = vmul.f32 %v2085, %v2150
  %v2186 = vmul.f32 %v2089, %v2150
  %v2187 = vmul.f32 %v2093, %v2150
  %v2188 = vmul.f32 %v2097, %v2150
  %v2189 = vmul.f32 %v2101, %v2150
  %v2190 = vmul.f32 %v2105, %v2150
  %v2191 = vmul.f32 %v2109, %v2150
  %v2192 = vmul.f32 %v2113, %v2150
  %v2193 = vmul.f32 %v2117, %v2150
  %v2194 = vmul.f32 %v2121, %v2150
  %v2195 = vmul.f32 %v2125, %v2150
  %v2196 = vmul.f32 %v2129, %v2150
  %v2197 = vmul.f32 %v2133, %v2150
  %v2198 = vmul.f32 %v2137, %v2150
  %v2199 = vmul.f32 %v2141, %v2150
  %v2200 = vmul.f32 %v2145, %v2150
  %v2201 = vadd.f32 %v1897, %v2151
  %v2202 = vadd.f32 %v1898, %v2152
  %v2203 = vadd.f32 %v1899, %v2153
  %v2204 = vadd.f32 %v1900, %v2154
  %v2205 = vadd.f32 %v1901, %v2155
  %v2206 = vadd.f32 %v1902, %v2156
  %v2207 = vadd.f32 %v1903, %v2157
  %v2208 = vadd.f32 %v1904, %v2158
  %v2209 = vadd.f32 %v1905, %v2159
  %v2210 = vadd.f32 %v1906, %v2160
  %v2211 = vadd.f32 %v1907, %v2161
  %v2212 = vadd.f32 %v1908, %v2162
  %v2213 = vadd.f32 %v1909, %v2163
  %v2214 = vadd.f32 %v1910, %v2164
  %v2215 = vadd.f32 %v1911, %v2165
  %v2216 = vadd.f32 %v1912, %v2166
  %v2217 = vadd.f32 %v1913, %v2167
  %v2218 = vadd.f32 %v1914, %v2168
  %v2219 = vadd.f32 %v1915, %v2169
  %v2220 = vadd.f32 %v1916, %v2170
  %v2221 = vadd.f32 %v1917, %v2171
  %v2222 = vadd.f32 %v1918, %v2172
  %v2223 = vadd.f32 %v1919, %v2173
  %v2224 = vadd.f32 %v1920, %v2174
  %v2225 = vadd.f32 %v1921, %v2175
  %v2226 = vadd.f32 %v1922, %v2176
  %v2227 = vadd.f32 %v1923, %v2177
  %v2228 = vadd.f32 %v1924, %v2178
  %v2229 = vadd.f32 %v1925, %v2179
  %v2230 = vadd.f32 %v1926, %v2180
  %v2231 = vadd.f32 %v1927, %v2181
  %v2232 = vadd.f32 %v1928, %v2182
  %v2233 = vadd.f32 %v1929, %v2183
  %v2234 = vadd.f32 %v1930, %v2184
  %v2235 = vadd.f32 %v1931, %v2185
  %v2236 = vadd.f32 %v1932, %v2186
  %v2237 = vadd.f32 %v1933, %v2187
  %v2238 = vadd.f32 %v1934, %v2188
  %v2239 = vadd.f32 %v1935, %v2189
  %v2240 = vadd.f32 %v1936, %v2190
  %v2241 = vadd.f32 %v1937, %v2191
  %v2242 = vadd.f32 %v1938, %v2192
  %v2243 = vadd.f32 %v1939, %v2193
  %v2244 = vadd.f32 %v1940, %v2194
  %v2245 = vadd.f32 %v1941, %v2195
  %v2246 = vadd.f32 %v1942, %v2196
  %v2247 = vadd.f32 %v1943, %v2197
  %v2248 = vadd.f32 %v1944, %v2198
  %v2249 = vadd.f32 %v1945, %v2199
  %v2250 = vadd.f32 %v1946, %v2200
  %2251 = vset.pattern.permute.xlu0 7
  %2252 = vperm.xlu0 %2251, %v14
  %v2253 = vpop.permute.xlu0 %2252
  %2255 = vset.pattern.permute.xlu0 7
  %2256 = vperm.xlu0 %2255, %v15
  %v2257 = vpop.permute.xlu0 %2256
  %2259 = vset.pattern.permute.xlu0 7
  %2260 = vperm.xlu0 %2259, %v16
  %v2261 = vpop.permute.xlu0 %2260
  %2263 = vset.pattern.permute.xlu0 7
  %2264 = vperm.xlu0 %2263, %v17
  %v2265 = vpop.permute.xlu0 %2264
  %2267 = vset.pattern.permute.xlu0 7
  %2268 = vperm.xlu0 %2267, %v18
  %v2269 = vpop.permute.xlu0 %2268
  %2271 = vset.pattern.permute.xlu0 7
  %2272 = vperm.xlu0 %2271, %v19
  %v2273 = vpop.permute.xlu0 %2272
  %2275 = vset.pattern.permute.xlu0 7
  %2276 = vperm.xlu0 %2275, %v20
  %v2277 = vpop.permute.xlu0 %2276
  %2279 = vset.pattern.permute.xlu0 7
  %2280 = vperm.xlu0 %2279, %v21
  %v2281 = vpop.permute.xlu0 %2280
  %2283 = vset.pattern.permute.xlu0 7
  %2284 = vperm.xlu0 %2283, %v22
  %v2285 = vpop.permute.xlu0 %2284
  %2287 = vset.pattern.permute.xlu0 7
  %2288 = vperm.xlu0 %2287, %v23
  %v2289 = vpop.permute.xlu0 %2288
  %2291 = vset.pattern.permute.xlu0 7
  %2292 = vperm.xlu0 %2291, %v24
  %v2293 = vpop.permute.xlu0 %2292
  %2295 = vset.pattern.permute.xlu0 7
  %2296 = vperm.xlu0 %2295, %v25
  %v2297 = vpop.permute.xlu0 %2296
  %2299 = vset.pattern.permute.xlu0 7
  %2300 = vperm.xlu0 %2299, %v26
  %v2301 = vpop.permute.xlu0 %2300
  %2303 = vset.pattern.permute.xlu0 7
  %2304 = vperm.xlu0 %2303, %v27
  %v2305 = vpop.permute.xlu0 %2304
  %2307 = vset.pattern.permute.xlu0 7
  %2308 = vperm.xlu0 %2307, %v28
  %v2309 = vpop.permute.xlu0 %2308
  %2311 = vset.pattern.permute.xlu0 7
  %2312 = vperm.xlu0 %2311, %v29
  %v2313 = vpop.permute.xlu0 %2312
  %2315 = vset.pattern.permute.xlu0 7
  %2316 = vperm.xlu0 %2315, %v30
  %v2317 = vpop.permute.xlu0 %2316
  %2319 = vset.pattern.permute.xlu0 7
  %2320 = vperm.xlu0 %2319, %v31
  %v2321 = vpop.permute.xlu0 %2320
  %2323 = vset.pattern.permute.xlu0 7
  %2324 = vperm.xlu0 %2323, %v32
  %v2325 = vpop.permute.xlu0 %2324
  %2327 = vset.pattern.permute.xlu0 7
  %2328 = vperm.xlu0 %2327, %v33
  %v2329 = vpop.permute.xlu0 %2328
  %2331 = vset.pattern.permute.xlu0 7
  %2332 = vperm.xlu0 %2331, %v34
  %v2333 = vpop.permute.xlu0 %2332
  %2335 = vset.pattern.permute.xlu0 7
  %2336 = vperm.xlu0 %2335, %v35
  %v2337 = vpop.permute.xlu0 %2336
  %2339 = vset.pattern.permute.xlu0 7
  %2340 = vperm.xlu0 %2339, %v36
  %v2341 = vpop.permute.xlu0 %2340
  %2343 = vset.pattern.permute.xlu0 7
  %2344 = vperm.xlu0 %2343, %v37
  %v2345 = vpop.permute.xlu0 %2344
  %2347 = vset.pattern.permute.xlu0 7
  %2348 = vperm.xlu0 %2347, %v38
  %v2349 = vpop.permute.xlu0 %2348
  %2351 = vset.pattern.permute.xlu0 7
  %2352 = vperm.xlu0 %2351, %v39
  %v2353 = vpop.permute.xlu0 %2352
  %2355 = vset.pattern.permute.xlu0 7
  %2356 = vperm.xlu0 %2355, %v40
  %v2357 = vpop.permute.xlu0 %2356
  %2359 = vset.pattern.permute.xlu0 7
  %2360 = vperm.xlu0 %2359, %v41
  %v2361 = vpop.permute.xlu0 %2360
  %2363 = vset.pattern.permute.xlu0 7
  %2364 = vperm.xlu0 %2363, %v42
  %v2365 = vpop.permute.xlu0 %2364
  %2367 = vset.pattern.permute.xlu0 7
  %2368 = vperm.xlu0 %2367, %v43
  %v2369 = vpop.permute.xlu0 %2368
  %2371 = vset.pattern.permute.xlu0 7
  %2372 = vperm.xlu0 %2371, %v44
  %v2373 = vpop.permute.xlu0 %2372
  %2375 = vset.pattern.permute.xlu0 7
  %2376 = vperm.xlu0 %2375, %v45
  %v2377 = vpop.permute.xlu0 %2376
  %2379 = vset.pattern.permute.xlu0 7
  %2380 = vperm.xlu0 %2379, %v46
  %v2381 = vpop.permute.xlu0 %2380
  %2383 = vset.pattern.permute.xlu0 7
  %2384 = vperm.xlu0 %2383, %v47
  %v2385 = vpop.permute.xlu0 %2384
  %2387 = vset.pattern.permute.xlu0 7
  %2388 = vperm.xlu0 %2387, %v48
  %v2389 = vpop.permute.xlu0 %2388
  %2391 = vset.pattern.permute.xlu0 7
  %2392 = vperm.xlu0 %2391, %v49
  %v2393 = vpop.permute.xlu0 %2392
  %2395 = vset.pattern.permute.xlu0 7
  %2396 = vperm.xlu0 %2395, %v50
  %v2397 = vpop.permute.xlu0 %2396
  %2399 = vset.pattern.permute.xlu0 7
  %2400 = vperm.xlu0 %2399, %v51
  %v2401 = vpop.permute.xlu0 %2400
  %2403 = vset.pattern.permute.xlu0 7
  %2404 = vperm.xlu0 %2403, %v52
  %v2405 = vpop.permute.xlu0 %2404
  %2407 = vset.pattern.permute.xlu0 7
  %2408 = vperm.xlu0 %2407, %v53
  %v2409 = vpop.permute.xlu0 %2408
  %2411 = vset.pattern.permute.xlu0 7
  %2412 = vperm.xlu0 %2411, %v54
  %v2413 = vpop.permute.xlu0 %2412
  %2415 = vset.pattern.permute.xlu0 7
  %2416 = vperm.xlu0 %2415, %v55
  %v2417 = vpop.permute.xlu0 %2416
  %2419 = vset.pattern.permute.xlu0 7
  %2420 = vperm.xlu0 %2419, %v56
  %v2421 = vpop.permute.xlu0 %2420
  %2423 = vset.pattern.permute.xlu0 7
  %2424 = vperm.xlu0 %2423, %v57
  %v2425 = vpop.permute.xlu0 %2424
  %2427 = vset.pattern.permute.xlu0 7
  %2428 = vperm.xlu0 %2427, %v58
  %v2429 = vpop.permute.xlu0 %2428
  %2431 = vset.pattern.permute.xlu0 7
  %2432 = vperm.xlu0 %2431, %v59
  %v2433 = vpop.permute.xlu0 %2432
  %2435 = vset.pattern.permute.xlu0 7
  %2436 = vperm.xlu0 %2435, %v60
  %v2437 = vpop.permute.xlu0 %2436
  %2439 = vset.pattern.permute.xlu0 7
  %2440 = vperm.xlu0 %2439, %v61
  %v2441 = vpop.permute.xlu0 %2440
  %2443 = vset.pattern.permute.xlu0 7
  %2444 = vperm.xlu0 %2443, %v62
  %v2445 = vpop.permute.xlu0 %2444
  %2447 = vset.pattern.permute.xlu0 7
  %2448 = vperm.xlu0 %2447, %v63
  %v2449 = vpop.permute.xlu0 %2448
  %v2451 = vlaneseq
  %v2452 = vshrl.u32 %v2451, 7
  %v2453 = vsub.s32 7, %v2452
  %v2454 = vrot.slane %v64, %v2453
  %v2455 = vmul.f32 %v2253, %v2454
  %v2456 = vmul.f32 %v2257, %v2454
  %v2457 = vmul.f32 %v2261, %v2454
  %v2458 = vmul.f32 %v2265, %v2454
  %v2459 = vmul.f32 %v2269, %v2454
  %v2460 = vmul.f32 %v2273, %v2454
  %v2461 = vmul.f32 %v2277, %v2454
  %v2462 = vmul.f32 %v2281, %v2454
  %v2463 = vmul.f32 %v2285, %v2454
  %v2464 = vmul.f32 %v2289, %v2454
  %v2465 = vmul.f32 %v2293, %v2454
  %v2466 = vmul.f32 %v2297, %v2454
  %v2467 = vmul.f32 %v2301, %v2454
  %v2468 = vmul.f32 %v2305, %v2454
  %v2469 = vmul.f32 %v2309, %v2454
  %v2470 = vmul.f32 %v2313, %v2454
  %v2471 = vmul.f32 %v2317, %v2454
  %v2472 = vmul.f32 %v2321, %v2454
  %v2473 = vmul.f32 %v2325, %v2454
  %v2474 = vmul.f32 %v2329, %v2454
  %v2475 = vmul.f32 %v2333, %v2454
  %v2476 = vmul.f32 %v2337, %v2454
  %v2477 = vmul.f32 %v2341, %v2454
  %v2478 = vmul.f32 %v2345, %v2454
  %v2479 = vmul.f32 %v2349, %v2454
  %v2480 = vmul.f32 %v2353, %v2454
  %v2481 = vmul.f32 %v2357, %v2454
  %v2482 = vmul.f32 %v2361, %v2454
  %v2483 = vmul.f32 %v2365, %v2454
  %v2484 = vmul.f32 %v2369, %v2454
  %v2485 = vmul.f32 %v2373, %v2454
  %v2486 = vmul.f32 %v2377, %v2454
  %v2487 = vmul.f32 %v2381, %v2454
  %v2488 = vmul.f32 %v2385, %v2454
  %v2489 = vmul.f32 %v2389, %v2454
  %v2490 = vmul.f32 %v2393, %v2454
  %v2491 = vmul.f32 %v2397, %v2454
  %v2492 = vmul.f32 %v2401, %v2454
  %v2493 = vmul.f32 %v2405, %v2454
  %v2494 = vmul.f32 %v2409, %v2454
  %v2495 = vmul.f32 %v2413, %v2454
  %v2496 = vmul.f32 %v2417, %v2454
  %v2497 = vmul.f32 %v2421, %v2454
  %v2498 = vmul.f32 %v2425, %v2454
  %v2499 = vmul.f32 %v2429, %v2454
  %v2500 = vmul.f32 %v2433, %v2454
  %v2501 = vmul.f32 %v2437, %v2454
  %v2502 = vmul.f32 %v2441, %v2454
  %v2503 = vmul.f32 %v2445, %v2454
  %v2504 = vmul.f32 %v2449, %v2454
  %v2505 = vadd.f32 %v2201, %v2455
  %v2506 = vadd.f32 %v2202, %v2456
  %v2507 = vadd.f32 %v2203, %v2457
  %v2508 = vadd.f32 %v2204, %v2458
  %v2509 = vadd.f32 %v2205, %v2459
  %v2510 = vadd.f32 %v2206, %v2460
  %v2511 = vadd.f32 %v2207, %v2461
  %v2512 = vadd.f32 %v2208, %v2462
  %v2513 = vadd.f32 %v2209, %v2463
  %v2514 = vadd.f32 %v2210, %v2464
  %v2515 = vadd.f32 %v2211, %v2465
  %v2516 = vadd.f32 %v2212, %v2466
  %v2517 = vadd.f32 %v2213, %v2467
  %v2518 = vadd.f32 %v2214, %v2468
  %v2519 = vadd.f32 %v2215, %v2469
  %v2520 = vadd.f32 %v2216, %v2470
  %v2521 = vadd.f32 %v2217, %v2471
  %v2522 = vadd.f32 %v2218, %v2472
  %v2523 = vadd.f32 %v2219, %v2473
  %v2524 = vadd.f32 %v2220, %v2474
  %v2525 = vadd.f32 %v2221, %v2475
  %v2526 = vadd.f32 %v2222, %v2476
  %v2527 = vadd.f32 %v2223, %v2477
  %v2528 = vadd.f32 %v2224, %v2478
  %v2529 = vadd.f32 %v2225, %v2479
  %v2530 = vadd.f32 %v2226, %v2480
  %v2531 = vadd.f32 %v2227, %v2481
  %v2532 = vadd.f32 %v2228, %v2482
  %v2533 = vadd.f32 %v2229, %v2483
  %v2534 = vadd.f32 %v2230, %v2484
  %v2535 = vadd.f32 %v2231, %v2485
  %v2536 = vadd.f32 %v2232, %v2486
  %v2537 = vadd.f32 %v2233, %v2487
  %v2538 = vadd.f32 %v2234, %v2488
  %v2539 = vadd.f32 %v2235, %v2489
  %v2540 = vadd.f32 %v2236, %v2490
  %v2541 = vadd.f32 %v2237, %v2491
  %v2542 = vadd.f32 %v2238, %v2492
  %v2543 = vadd.f32 %v2239, %v2493
  %v2544 = vadd.f32 %v2240, %v2494
  %v2545 = vadd.f32 %v2241, %v2495
  %v2546 = vadd.f32 %v2242, %v2496
  %v2547 = vadd.f32 %v2243, %v2497
  %v2548 = vadd.f32 %v2244, %v2498
  %v2549 = vadd.f32 %v2245, %v2499
  %v2550 = vadd.f32 %v2246, %v2500
  %v2551 = vadd.f32 %v2247, %v2501
  %v2552 = vadd.f32 %v2248, %v2502
  %v2553 = vadd.f32 %v2249, %v2503
  %v2554 = vadd.f32 %v2250, %v2504
  %2555 = vset.pattern.permute.xlu0 8
  %2556 = vperm.xlu0 %2555, %v14
  %v2557 = vpop.permute.xlu0 %2556
  %2559 = vset.pattern.permute.xlu0 8
  %2560 = vperm.xlu0 %2559, %v15
  %v2561 = vpop.permute.xlu0 %2560
  %2563 = vset.pattern.permute.xlu0 8
  %2564 = vperm.xlu0 %2563, %v16
  %v2565 = vpop.permute.xlu0 %2564
  %2567 = vset.pattern.permute.xlu0 8
  %2568 = vperm.xlu0 %2567, %v17
  %v2569 = vpop.permute.xlu0 %2568
  %2571 = vset.pattern.permute.xlu0 8
  %2572 = vperm.xlu0 %2571, %v18
  %v2573 = vpop.permute.xlu0 %2572
  %2575 = vset.pattern.permute.xlu0 8
  %2576 = vperm.xlu0 %2575, %v19
  %v2577 = vpop.permute.xlu0 %2576
  %2579 = vset.pattern.permute.xlu0 8
  %2580 = vperm.xlu0 %2579, %v20
  %v2581 = vpop.permute.xlu0 %2580
  %2583 = vset.pattern.permute.xlu0 8
  %2584 = vperm.xlu0 %2583, %v21
  %v2585 = vpop.permute.xlu0 %2584
  %2587 = vset.pattern.permute.xlu0 8
  %2588 = vperm.xlu0 %2587, %v22
  %v2589 = vpop.permute.xlu0 %2588
  %2591 = vset.pattern.permute.xlu0 8
  %2592 = vperm.xlu0 %2591, %v23
  %v2593 = vpop.permute.xlu0 %2592
  %2595 = vset.pattern.permute.xlu0 8
  %2596 = vperm.xlu0 %2595, %v24
  %v2597 = vpop.permute.xlu0 %2596
  %2599 = vset.pattern.permute.xlu0 8
  %2600 = vperm.xlu0 %2599, %v25
  %v2601 = vpop.permute.xlu0 %2600
  %2603 = vset.pattern.permute.xlu0 8
  %2604 = vperm.xlu0 %2603, %v26
  %v2605 = vpop.permute.xlu0 %2604
  %2607 = vset.pattern.permute.xlu0 8
  %2608 = vperm.xlu0 %2607, %v27
  %v2609 = vpop.permute.xlu0 %2608
  %2611 = vset.pattern.permute.xlu0 8
  %2612 = vperm.xlu0 %2611, %v28
  %v2613 = vpop.permute.xlu0 %2612
  %2615 = vset.pattern.permute.xlu0 8
  %2616 = vperm.xlu0 %2615, %v29
  %v2617 = vpop.permute.xlu0 %2616
  %2619 = vset.pattern.permute.xlu0 8
  %2620 = vperm.xlu0 %2619, %v30
  %v2621 = vpop.permute.xlu0 %2620
  %2623 = vset.pattern.permute.xlu0 8
  %2624 = vperm.xlu0 %2623, %v31
  %v2625 = vpop.permute.xlu0 %2624
  %2627 = vset.pattern.permute.xlu0 8
  %2628 = vperm.xlu0 %2627, %v32
  %v2629 = vpop.permute.xlu0 %2628
  %2631 = vset.pattern.permute.xlu0 8
  %2632 = vperm.xlu0 %2631, %v33
  %v2633 = vpop.permute.xlu0 %2632
  %2635 = vset.pattern.permute.xlu0 8
  %2636 = vperm.xlu0 %2635, %v34
  %v2637 = vpop.permute.xlu0 %2636
  %2639 = vset.pattern.permute.xlu0 8
  %2640 = vperm.xlu0 %2639, %v35
  %v2641 = vpop.permute.xlu0 %2640
  %2643 = vset.pattern.permute.xlu0 8
  %2644 = vperm.xlu0 %2643, %v36
  %v2645 = vpop.permute.xlu0 %2644
  %2647 = vset.pattern.permute.xlu0 8
  %2648 = vperm.xlu0 %2647, %v37
  %v2649 = vpop.permute.xlu0 %2648
  %2651 = vset.pattern.permute.xlu0 8
  %2652 = vperm.xlu0 %2651, %v38
  %v2653 = vpop.permute.xlu0 %2652
  %2655 = vset.pattern.permute.xlu0 8
  %2656 = vperm.xlu0 %2655, %v39
  %v2657 = vpop.permute.xlu0 %2656
  %2659 = vset.pattern.permute.xlu0 8
  %2660 = vperm.xlu0 %2659, %v40
  %v2661 = vpop.permute.xlu0 %2660
  %2663 = vset.pattern.permute.xlu0 8
  %2664 = vperm.xlu0 %2663, %v41
  %v2665 = vpop.permute.xlu0 %2664
  %2667 = vset.pattern.permute.xlu0 8
  %2668 = vperm.xlu0 %2667, %v42
  %v2669 = vpop.permute.xlu0 %2668
  %2671 = vset.pattern.permute.xlu0 8
  %2672 = vperm.xlu0 %2671, %v43
  %v2673 = vpop.permute.xlu0 %2672
  %2675 = vset.pattern.permute.xlu0 8
  %2676 = vperm.xlu0 %2675, %v44
  %v2677 = vpop.permute.xlu0 %2676
  %2679 = vset.pattern.permute.xlu0 8
  %2680 = vperm.xlu0 %2679, %v45
  %v2681 = vpop.permute.xlu0 %2680
  %2683 = vset.pattern.permute.xlu0 8
  %2684 = vperm.xlu0 %2683, %v46
  %v2685 = vpop.permute.xlu0 %2684
  %2687 = vset.pattern.permute.xlu0 8
  %2688 = vperm.xlu0 %2687, %v47
  %v2689 = vpop.permute.xlu0 %2688
  %2691 = vset.pattern.permute.xlu0 8
  %2692 = vperm.xlu0 %2691, %v48
  %v2693 = vpop.permute.xlu0 %2692
  %2695 = vset.pattern.permute.xlu0 8
  %2696 = vperm.xlu0 %2695, %v49
  %v2697 = vpop.permute.xlu0 %2696
  %2699 = vset.pattern.permute.xlu0 8
  %2700 = vperm.xlu0 %2699, %v50
  %v2701 = vpop.permute.xlu0 %2700
  %2703 = vset.pattern.permute.xlu0 8
  %2704 = vperm.xlu0 %2703, %v51
  %v2705 = vpop.permute.xlu0 %2704
  %2707 = vset.pattern.permute.xlu0 8
  %2708 = vperm.xlu0 %2707, %v52
  %v2709 = vpop.permute.xlu0 %2708
  %2711 = vset.pattern.permute.xlu0 8
  %2712 = vperm.xlu0 %2711, %v53
  %v2713 = vpop.permute.xlu0 %2712
  %2715 = vset.pattern.permute.xlu0 8
  %2716 = vperm.xlu0 %2715, %v54
  %v2717 = vpop.permute.xlu0 %2716
  %2719 = vset.pattern.permute.xlu0 8
  %2720 = vperm.xlu0 %2719, %v55
  %v2721 = vpop.permute.xlu0 %2720
  %2723 = vset.pattern.permute.xlu0 8
  %2724 = vperm.xlu0 %2723, %v56
  %v2725 = vpop.permute.xlu0 %2724
  %2727 = vset.pattern.permute.xlu0 8
  %2728 = vperm.xlu0 %2727, %v57
  %v2729 = vpop.permute.xlu0 %2728
  %2731 = vset.pattern.permute.xlu0 8
  %2732 = vperm.xlu0 %2731, %v58
  %v2733 = vpop.permute.xlu0 %2732
  %2735 = vset.pattern.permute.xlu0 8
  %2736 = vperm.xlu0 %2735, %v59
  %v2737 = vpop.permute.xlu0 %2736
  %2739 = vset.pattern.permute.xlu0 8
  %2740 = vperm.xlu0 %2739, %v60
  %v2741 = vpop.permute.xlu0 %2740
  %2743 = vset.pattern.permute.xlu0 8
  %2744 = vperm.xlu0 %2743, %v61
  %v2745 = vpop.permute.xlu0 %2744
  %2747 = vset.pattern.permute.xlu0 8
  %2748 = vperm.xlu0 %2747, %v62
  %v2749 = vpop.permute.xlu0 %2748
  %2751 = vset.pattern.permute.xlu0 8
  %2752 = vperm.xlu0 %2751, %v63
  %v2753 = vpop.permute.xlu0 %2752
  %v2755 = vlaneseq
  %v2756 = vshrl.u32 %v2755, 7
  %v2757 = vsub.s32 0, %v2756
  %v2758 = vrot.slane %v65, %v2757
  %v2759 = vmul.f32 %v2557, %v2758
  %v2760 = vmul.f32 %v2561, %v2758
  %v2761 = vmul.f32 %v2565, %v2758
  %v2762 = vmul.f32 %v2569, %v2758
  %v2763 = vmul.f32 %v2573, %v2758
  %v2764 = vmul.f32 %v2577, %v2758
  %v2765 = vmul.f32 %v2581, %v2758
  %v2766 = vmul.f32 %v2585, %v2758
  %v2767 = vmul.f32 %v2589, %v2758
  %v2768 = vmul.f32 %v2593, %v2758
  %v2769 = vmul.f32 %v2597, %v2758
  %v2770 = vmul.f32 %v2601, %v2758
  %v2771 = vmul.f32 %v2605, %v2758
  %v2772 = vmul.f32 %v2609, %v2758
  %v2773 = vmul.f32 %v2613, %v2758
  %v2774 = vmul.f32 %v2617, %v2758
  %v2775 = vmul.f32 %v2621, %v2758
  %v2776 = vmul.f32 %v2625, %v2758
  %v2777 = vmul.f32 %v2629, %v2758
  %v2778 = vmul.f32 %v2633, %v2758
  %v2779 = vmul.f32 %v2637, %v2758
  %v2780 = vmul.f32 %v2641, %v2758
  %v2781 = vmul.f32 %v2645, %v2758
  %v2782 = vmul.f32 %v2649, %v2758
  %v2783 = vmul.f32 %v2653, %v2758
  %v2784 = vmul.f32 %v2657, %v2758
  %v2785 = vmul.f32 %v2661, %v2758
  %v2786 = vmul.f32 %v2665, %v2758
  %v2787 = vmul.f32 %v2669, %v2758
  %v2788 = vmul.f32 %v2673, %v2758
  %v2789 = vmul.f32 %v2677, %v2758
  %v2790 = vmul.f32 %v2681, %v2758
  %v2791 = vmul.f32 %v2685, %v2758
  %v2792 = vmul.f32 %v2689, %v2758
  %v2793 = vmul.f32 %v2693, %v2758
  %v2794 = vmul.f32 %v2697, %v2758
  %v2795 = vmul.f32 %v2701, %v2758
  %v2796 = vmul.f32 %v2705, %v2758
  %v2797 = vmul.f32 %v2709, %v2758
  %v2798 = vmul.f32 %v2713, %v2758
  %v2799 = vmul.f32 %v2717, %v2758
  %v2800 = vmul.f32 %v2721, %v2758
  %v2801 = vmul.f32 %v2725, %v2758
  %v2802 = vmul.f32 %v2729, %v2758
  %v2803 = vmul.f32 %v2733, %v2758
  %v2804 = vmul.f32 %v2737, %v2758
  %v2805 = vmul.f32 %v2741, %v2758
  %v2806 = vmul.f32 %v2745, %v2758
  %v2807 = vmul.f32 %v2749, %v2758
  %v2808 = vmul.f32 %v2753, %v2758
  %v2809 = vadd.f32 %v2505, %v2759
  %v2810 = vadd.f32 %v2506, %v2760
  %v2811 = vadd.f32 %v2507, %v2761
  %v2812 = vadd.f32 %v2508, %v2762
  %v2813 = vadd.f32 %v2509, %v2763
  %v2814 = vadd.f32 %v2510, %v2764
  %v2815 = vadd.f32 %v2511, %v2765
  %v2816 = vadd.f32 %v2512, %v2766
  %v2817 = vadd.f32 %v2513, %v2767
  %v2818 = vadd.f32 %v2514, %v2768
  %v2819 = vadd.f32 %v2515, %v2769
  %v2820 = vadd.f32 %v2516, %v2770
  %v2821 = vadd.f32 %v2517, %v2771
  %v2822 = vadd.f32 %v2518, %v2772
  %v2823 = vadd.f32 %v2519, %v2773
  %v2824 = vadd.f32 %v2520, %v2774
  %v2825 = vadd.f32 %v2521, %v2775
  %v2826 = vadd.f32 %v2522, %v2776
  %v2827 = vadd.f32 %v2523, %v2777
  %v2828 = vadd.f32 %v2524, %v2778
  %v2829 = vadd.f32 %v2525, %v2779
  %v2830 = vadd.f32 %v2526, %v2780
  %v2831 = vadd.f32 %v2527, %v2781
  %v2832 = vadd.f32 %v2528, %v2782
  %v2833 = vadd.f32 %v2529, %v2783
  %v2834 = vadd.f32 %v2530, %v2784
  %v2835 = vadd.f32 %v2531, %v2785
  %v2836 = vadd.f32 %v2532, %v2786
  %v2837 = vadd.f32 %v2533, %v2787
  %v2838 = vadd.f32 %v2534, %v2788
  %v2839 = vadd.f32 %v2535, %v2789
  %v2840 = vadd.f32 %v2536, %v2790
  %v2841 = vadd.f32 %v2537, %v2791
  %v2842 = vadd.f32 %v2538, %v2792
  %v2843 = vadd.f32 %v2539, %v2793
  %v2844 = vadd.f32 %v2540, %v2794
  %v2845 = vadd.f32 %v2541, %v2795
  %v2846 = vadd.f32 %v2542, %v2796
  %v2847 = vadd.f32 %v2543, %v2797
  %v2848 = vadd.f32 %v2544, %v2798
  %v2849 = vadd.f32 %v2545, %v2799
  %v2850 = vadd.f32 %v2546, %v2800
  %v2851 = vadd.f32 %v2547, %v2801
  %v2852 = vadd.f32 %v2548, %v2802
  %v2853 = vadd.f32 %v2549, %v2803
  %v2854 = vadd.f32 %v2550, %v2804
  %v2855 = vadd.f32 %v2551, %v2805
  %v2856 = vadd.f32 %v2552, %v2806
  %v2857 = vadd.f32 %v2553, %v2807
  %v2858 = vadd.f32 %v2554, %v2808
  %v2859 = vmax.f32 %v2809, 0.0
  %v2860 = vmax.f32 %v2810, 0.0
  %v2861 = vmax.f32 %v2811, 0.0
  %v2862 = vmax.f32 %v2812, 0.0
  %v2863 = vmax.f32 %v2813, 0.0
  %v2864 = vmax.f32 %v2814, 0.0
  %v2865 = vmax.f32 %v2815, 0.0
  %v2866 = vmax.f32 %v2816, 0.0
  %v2867 = vmax.f32 %v2817, 0.0
  %v2868 = vmax.f32 %v2818, 0.0
  %v2869 = vmax.f32 %v2819, 0.0
  %v2870 = vmax.f32 %v2820, 0.0
  %v2871 = vmax.f32 %v2821, 0.0
  %v2872 = vmax.f32 %v2822, 0.0
  %v2873 = vmax.f32 %v2823, 0.0
  %v2874 = vmax.f32 %v2824, 0.0
  %v2875 = vmax.f32 %v2825, 0.0
  %v2876 = vmax.f32 %v2826, 0.0
  %v2877 = vmax.f32 %v2827, 0.0
  %v2878 = vmax.f32 %v2828, 0.0
  %v2879 = vmax.f32 %v2829, 0.0
  %v2880 = vmax.f32 %v2830, 0.0
  %v2881 = vmax.f32 %v2831, 0.0
  %v2882 = vmax.f32 %v2832, 0.0
  %v2883 = vmax.f32 %v2833, 0.0
  %v2884 = vmax.f32 %v2834, 0.0
  %v2885 = vmax.f32 %v2835, 0.0
  %v2886 = vmax.f32 %v2836, 0.0
  %v2887 = vmax.f32 %v2837, 0.0
  %v2888 = vmax.f32 %v2838, 0.0
  %v2889 = vmax.f32 %v2839, 0.0
  %v2890 = vmax.f32 %v2840, 0.0
  %v2891 = vmax.f32 %v2841, 0.0
  %v2892 = vmax.f32 %v2842, 0.0
  %v2893 = vmax.f32 %v2843, 0.0
  %v2894 = vmax.f32 %v2844, 0.0
  %v2895 = vmax.f32 %v2845, 0.0
  %v2896 = vmax.f32 %v2846, 0.0
  %v2897 = vmax.f32 %v2847, 0.0
  %v2898 = vmax.f32 %v2848, 0.0
  %v2899 = vmax.f32 %v2849, 0.0
  %v2900 = vmax.f32 %v2850, 0.0
  %v2901 = vmax.f32 %v2851, 0.0
  %v2902 = vmax.f32 %v2852, 0.0
  %v2903 = vmax.f32 %v2853, 0.0
  %v2904 = vmax.f32 %v2854, 0.0
  %v2905 = vmax.f32 %v2855, 0.0
  %v2906 = vmax.f32 %v2856, 0.0
  %v2907 = vmax.f32 %v2857, 0.0
  %v2908 = vmax.f32 %v2858, 0.0
  %vm2909 = vcmask 261120
  %2910 = vst.msk [vmem:[%s3] sm:$0xff] %vm2909, %v2859
  %2911 = vst.msk [vmem:[%s3 + $0x8] sm:$0xff] %vm2909, %v2860
  %2912 = vst.msk [vmem:[%s3 + $0x10] sm:$0xff] %vm2909, %v2861
  %2913 = vst.msk [vmem:[%s3 + $0x18] sm:$0xff] %vm2909, %v2862
  %2914 = vst.msk [vmem:[%s3 + $0x20] sm:$0xff] %vm2909, %v2863
  %2915 = vst.msk [vmem:[%s3 + $0x28] sm:$0xff] %vm2909, %v2864
  %2916 = vst.msk [vmem:[%s3 + $0x30] sm:$0xff] %vm2909, %v2865
  %2917 = vst.msk [vmem:[%s3 + $0x38] sm:$0xff] %vm2909, %v2866
  %2918 = vst.msk [vmem:[%s3 + $0x40] sm:$0xff] %vm2909, %v2867
  %2919 = vst.msk [vmem:[%s3 + $0x48] sm:$0xff] %vm2909, %v2868
  %2920 = vst.msk [vmem:[%s3 + $0x50] sm:$0xff] %vm2909, %v2869
  %2921 = vst.msk [vmem:[%s3 + $0x58] sm:$0xff] %vm2909, %v2870
  %2922 = vst.msk [vmem:[%s3 + $0x60] sm:$0xff] %vm2909, %v2871
  %2923 = vst.msk [vmem:[%s3 + $0x68] sm:$0xff] %vm2909, %v2872
  %2924 = vst.msk [vmem:[%s3 + $0x70] sm:$0xff] %vm2909, %v2873
  %2925 = vst.msk [vmem:[%s3 + $0x78] sm:$0xff] %vm2909, %v2874
  %2926 = vst.msk [vmem:[%s3 + $0x80] sm:$0xff] %vm2909, %v2875
  %2927 = vst.msk [vmem:[%s3 + $0x88] sm:$0xff] %vm2909, %v2876
  %2928 = vst.msk [vmem:[%s3 + $0x90] sm:$0xff] %vm2909, %v2877
  %2929 = vst.msk [vmem:[%s3 + $0x98] sm:$0xff] %vm2909, %v2878
  %2930 = vst.msk [vmem:[%s3 + $0xa0] sm:$0xff] %vm2909, %v2879
  %2931 = vst.msk [vmem:[%s3 + $0xa8] sm:$0xff] %vm2909, %v2880
  %2932 = vst.msk [vmem:[%s3 + $0xb0] sm:$0xff] %vm2909, %v2881
  %2933 = vst.msk [vmem:[%s3 + $0xb8] sm:$0xff] %vm2909, %v2882
  %2934 = vst.msk [vmem:[%s3 + $0xc0] sm:$0xff] %vm2909, %v2883
  %2935 = vst.msk [vmem:[%s3 + $0xc8] sm:$0xff] %vm2909, %v2884
  %2936 = vst.msk [vmem:[%s3 + $0xd0] sm:$0xff] %vm2909, %v2885
  %2937 = vst.msk [vmem:[%s3 + $0xd8] sm:$0xff] %vm2909, %v2886
  %2938 = vst.msk [vmem:[%s3 + $0xe0] sm:$0xff] %vm2909, %v2887
  %2939 = vst.msk [vmem:[%s3 + $0xe8] sm:$0xff] %vm2909, %v2888
  %2940 = vst.msk [vmem:[%s3 + $0xf0] sm:$0xff] %vm2909, %v2889
  %2941 = vst.msk [vmem:[%s3 + $0xf8] sm:$0xff] %vm2909, %v2890
  %2942 = vst.msk [vmem:[%s3 + $0x100] sm:$0xff] %vm2909, %v2891
  %2943 = vst.msk [vmem:[%s3 + $0x108] sm:$0xff] %vm2909, %v2892
  %2944 = vst.msk [vmem:[%s3 + $0x110] sm:$0xff] %vm2909, %v2893
  %2945 = vst.msk [vmem:[%s3 + $0x118] sm:$0xff] %vm2909, %v2894
  %2946 = vst.msk [vmem:[%s3 + $0x120] sm:$0xff] %vm2909, %v2895
  %2947 = vst.msk [vmem:[%s3 + $0x128] sm:$0xff] %vm2909, %v2896
  %2948 = vst.msk [vmem:[%s3 + $0x130] sm:$0xff] %vm2909, %v2897
  %2949 = vst.msk [vmem:[%s3 + $0x138] sm:$0xff] %vm2909, %v2898
  %2950 = vst.msk [vmem:[%s3 + $0x140] sm:$0xff] %vm2909, %v2899
  %2951 = vst.msk [vmem:[%s3 + $0x148] sm:$0xff] %vm2909, %v2900
  %2952 = vst.msk [vmem:[%s3 + $0x150] sm:$0xff] %vm2909, %v2901
  %2953 = vst.msk [vmem:[%s3 + $0x158] sm:$0xff] %vm2909, %v2902
  %2954 = vst.msk [vmem:[%s3 + $0x160] sm:$0xff] %vm2909, %v2903
  %2955 = vst.msk [vmem:[%s3 + $0x168] sm:$0xff] %vm2909, %v2904
  %2956 = vst.msk [vmem:[%s3 + $0x170] sm:$0xff] %vm2909, %v2905
  %2957 = vst.msk [vmem:[%s3 + $0x178] sm:$0xff] %vm2909, %v2906
  %2958 = vst.msk [vmem:[%s3 + $0x180] sm:$0xff] %vm2909, %v2907
  %2959 = vst.msk [vmem:[%s3 + $0x188] sm:$0xff] %vm2909, %v2908
  // Predicated region
  $region14: #{net_entk_forward.4} parent=0 // pred_check
    _
  $region15: #{net_entk_forward.4} parent=0 // pred_check_branch
    %2961 = sbr.rel (0) target = $region17
  $region16: #{net_entk_forward.4} parent=0 // pred_region
    _
  $region17: #{net_entk_forward.4} parent=0 // pred_fallthru
    _
  // Predicated region
  $region18: #{net_entk_forward.4} parent=0 // pred_check
    _
  $region19: #{net_entk_forward.4} parent=0 // pred_check_branch
    %2963 = sbr.rel (0) target = $region21
  $region20: #{net_entk_forward.4} parent=0 // pred_region
    _
  $region21: #{net_entk_forward.4} parent=0 // pred_fallthru
    _

// kernel: net_entk_forward.5
$region0: #{net_entk_forward.5}
  #allocation0 [shape = 'u32[]', space=smem, size = 0x4, offset = 0x4, fixed_abs, tag = 'smem constant byte address 0x4 - core index']
  #allocation1 [shape = 'u32[144,128]{1,0:T(1,128)}', space=vmem, size = 0x12000, scoped, tag = 'internal scratch']
  %s0 = inlined_call_operand.vmem [shape: bf16[112,288], index: 0, kind: input, shape index: {}]
  %s1 = inlined_call_operand.vmem [shape: bf16[288,64], index: 1, kind: input, shape index: {}]
  %s2 = inlined_call_operand.vmem [shape: f32[1,64], index: 2, kind: input, shape index: {}]
  %s3 = inlined_call_operand.vmem [shape: f32[112,64], index: 3, kind: output, shape index: {}]
  %s4 = sld [smem:[#allocation0]]
  $region22: #{net_entk_forward.5} parent=0
    _
  %s6 = ssub.s32 1, %s4
  %s7 = scalar_select 0, %s6, %s4
  // Predicated region
  $region2: #{net_entk_forward.5} parent=0 // pred_check
    _
  $region3: #{net_entk_forward.5} parent=0 // pred_check_branch
    %9 = sbr.rel (0) target = $region5
  $region4: #{net_entk_forward.5} parent=0 // pred_region
    _
  $region5: #{net_entk_forward.5} parent=0 // pred_fallthru
    _
  // Predicated region
  $region6: #{net_entk_forward.5} parent=0 // pred_check
    _
  $region7: #{net_entk_forward.5} parent=0 // pred_check_branch
    %11 = sbr.rel (0) target = $region9
  $region8: #{net_entk_forward.5} parent=0 // pred_region
    _
  $region9: #{net_entk_forward.5} parent=0 // pred_fallthru
    _
  // Predicated region
  $region10: #{net_entk_forward.5} parent=0 // pred_check
    _
  $region11: #{net_entk_forward.5} parent=0 // pred_check_branch
    %13 = sbr.rel (0) target = $region13
  $region12: #{net_entk_forward.5} parent=0 // pred_region
    _
  $region13: #{net_entk_forward.5} parent=0 // pred_fallthru
    _
  %v15 = vld [vmem:[%s0] sm:$0xff]
  %v16 = vld [vmem:[%s0 + $0x8] sm:$0xf]
  %v17 = vld [vmem:[%s0 + $0xc] sm:$0xff]
  %v18 = vld [vmem:[%s0 + $0x14] sm:$0xf]
  %v19 = vld [vmem:[%s0 + $0x18] sm:$0xff]
  %v20 = vld [vmem:[%s0 + $0x20] sm:$0xf]
  %v21 = vld [vmem:[%s0 + $0x24] sm:$0xff]
  %v22 = vld [vmem:[%s0 + $0x2c] sm:$0xf]
  %v23 = vld [vmem:[%s0 + $0x30] sm:$0xff]
  %v24 = vld [vmem:[%s0 + $0x38] sm:$0xf]
  %v25 = vld [vmem:[%s0 + $0x3c] sm:$0xff]
  %v26 = vld [vmem:[%s0 + $0x44] sm:$0xf]
  %v27 = vld [vmem:[%s0 + $0x48] sm:$0xff]
  %v28 = vld [vmem:[%s0 + $0x50] sm:$0xf]
  %v29 = vld [vmem:[%s0 + $0x54] sm:$0xff]
  %v30 = vld [vmem:[%s0 + $0x5c] sm:$0xf]
  %v31 = vld [vmem:[%s0 + $0x60] sm:$0xff]
  %v32 = vld [vmem:[%s0 + $0x68] sm:$0xf]
  %v33 = vld [vmem:[%s0 + $0x6c] sm:$0xff]
  %v34 = vld [vmem:[%s0 + $0x74] sm:$0xf]
  %v35 = vld [vmem:[%s0 + $0x78] sm:$0xff]
  %v36 = vld [vmem:[%s0 + $0x80] sm:$0xf]
  %v37 = vld [vmem:[%s0 + $0x84] sm:$0xff]
  %v38 = vld [vmem:[%s0 + $0x8c] sm:$0xf]
  %v39 = vld [vmem:[%s0 + $0x90] sm:$0xff]
  %v40 = vld [vmem:[%s0 + $0x98] sm:$0xf]
  %v41 = vld [vmem:[%s0 + $0x9c] sm:$0xff]
  %v42 = vld [vmem:[%s0 + $0xa4] sm:$0xf]
  %v43 = vld [vmem:[%s1] sm:$0xf]
  %v44 = vld [vmem:[%s1 + $0x4] sm:$0xf]
  %v45 = vld [vmem:[%s1 + $0x8] sm:$0xf]
  %v46 = vld [vmem:[%s1 + $0xc] sm:$0xf]
  %v47 = vld [vmem:[%s1 + $0x10] sm:$0xf]
  %v48 = vld [vmem:[%s1 + $0x14] sm:$0xf]
  %v49 = vld [vmem:[%s1 + $0x18] sm:$0xf]
  %v50 = vld [vmem:[%s1 + $0x1c] sm:$0xf]
  %v51 = vld [vmem:[%s1 + $0x20] sm:$0xf]
  %v52 = vld [vmem:[%s1 + $0x24] sm:$0xf]
  %v53 = vld [vmem:[%s1 + $0x28] sm:$0xf]
  %v54 = vld [vmem:[%s1 + $0x2c] sm:$0xf]
  %v55 = vld [vmem:[%s1 + $0x30] sm:$0xf]
  %v56 = vld [vmem:[%s1 + $0x34] sm:$0xf]
  %v57 = vld [vmem:[%s1 + $0x38] sm:$0xf]
  %v58 = vld [vmem:[%s1 + $0x3c] sm:$0xf]
  %v59 = vld [vmem:[%s1 + $0x40] sm:$0xf]
  %v60 = vld [vmem:[%s1 + $0x44] sm:$0xf]
  %v61 = vld [vmem:[%s1 + $0x48] sm:$0xf]
  %v62 = vld [vmem:[%s1 + $0x4c] sm:$0xf]
  %v63 = vld [vmem:[%s1 + $0x50] sm:$0xf]
  %v64 = vld [vmem:[%s1 + $0x54] sm:$0xf]
  %v65 = vld [vmem:[%s1 + $0x58] sm:$0xf]
  %v66 = vld [vmem:[%s1 + $0x5c] sm:$0xf]
  %v67 = vld [vmem:[%s1 + $0x60] sm:$0xf]
  %v68 = vld [vmem:[%s1 + $0x64] sm:$0xf]
  %v69 = vld [vmem:[%s1 + $0x68] sm:$0xf]
  %v70 = vld [vmem:[%s1 + $0x6c] sm:$0xf]
  %v71 = vld [vmem:[%s1 + $0x70] sm:$0xf]
  %v72 = vld [vmem:[%s1 + $0x74] sm:$0xf]
  %v73 = vld [vmem:[%s1 + $0x78] sm:$0xf]
  %v74 = vld [vmem:[%s1 + $0x7c] sm:$0xf]
  %v75 = vld [vmem:[%s1 + $0x80] sm:$0xf]
  %v76 = vld [vmem:[%s1 + $0x84] sm:$0xf]
  %v77 = vld [vmem:[%s1 + $0x88] sm:$0xf]
  %v78 = vld [vmem:[%s1 + $0x8c] sm:$0xf]
  %v79 = vld [vmem:[%s2] sm:$0x1]
  %v81 = vlaneseq
  %v82 = vshrl.u32 %v81, 7
  %v83 = vsub.s32 0, %v82
  %v84 = vrot.slane %v79, %v83
  %v114 = vunpack.c.l.b16 %v15
  %v115 = vunpack.c.h.b16 %v15
  %v116 = vunpack.c.l.b16 %v16
  %v117 = vunpack.c.l.b16 %v17
  %v118 = vunpack.c.h.b16 %v17
  %v119 = vunpack.c.l.b16 %v18
  %v120 = vunpack.c.l.b16 %v19
  %v121 = vunpack.c.h.b16 %v19
  %v122 = vunpack.c.l.b16 %v20
  %v123 = vunpack.c.l.b16 %v21
  %v124 = vunpack.c.h.b16 %v21
  %v125 = vunpack.c.l.b16 %v22
  %v126 = vunpack.c.l.b16 %v23
  %v127 = vunpack.c.h.b16 %v23
  %v128 = vunpack.c.l.b16 %v24
  %v129 = vunpack.c.l.b16 %v25
  %v130 = vunpack.c.h.b16 %v25
  %v131 = vunpack.c.l.b16 %v26
  %v132 = vunpack.c.l.b16 %v27
  %v133 = vunpack.c.h.b16 %v27
  %v134 = vunpack.c.l.b16 %v28
  %v135 = vunpack.c.l.b16 %v29
  %v136 = vunpack.c.h.b16 %v29
  %v137 = vunpack.c.l.b16 %v30
  %v138 = vunpack.c.l.b16 %v31
  %v139 = vunpack.c.h.b16 %v31
  %v140 = vunpack.c.l.b16 %v32
  %v141 = vunpack.c.l.b16 %v33
  %v142 = vunpack.c.h.b16 %v33
  %v143 = vunpack.c.l.b16 %v34
  %v144 = vunpack.c.l.b16 %v35
  %v145 = vunpack.c.h.b16 %v35
  %v146 = vunpack.c.l.b16 %v36
  %v147 = vunpack.c.l.b16 %v37
  %v148 = vunpack.c.h.b16 %v37
  %v149 = vunpack.c.l.b16 %v38
  %v150 = vunpack.c.l.b16 %v39
  %v151 = vunpack.c.h.b16 %v39
  %v152 = vunpack.c.l.b16 %v40
  %v153 = vunpack.c.l.b16 %v41
  %v154 = vunpack.c.h.b16 %v41
  %v155 = vunpack.c.l.b16 %v42
  %v156 = vpack.c.b16 %v117, %v114
  %v157 = vpack.c.b16 %v118, %v115
  %v158 = vpack.c.b16 %v119, %v116
  %v159 = vpack.c.b16 %v123, %v120
  %v160 = vpack.c.b16 %v124, %v121
  %v161 = vpack.c.b16 %v125, %v122
  %v162 = vpack.c.b16 %v129, %v126
  %v163 = vpack.c.b16 %v130, %v127
  %v164 = vpack.c.b16 %v131, %v128
  %v165 = vpack.c.b16 %v135, %v132
  %v166 = vpack.c.b16 %v136, %v133
  %v167 = vpack.c.b16 %v137, %v134
  %v168 = vpack.c.b16 %v141, %v138
  %v169 = vpack.c.b16 %v142, %v139
  %v170 = vpack.c.b16 %v143, %v140
  %v171 = vpack.c.b16 %v147, %v144
  %v172 = vpack.c.b16 %v148, %v145
  %v173 = vpack.c.b16 %v149, %v146
  %v174 = vpack.c.b16 %v153, %v150
  %v175 = vpack.c.b16 %v154, %v151
  %v176 = vpack.c.b16 %v155, %v152
  %v227 = vunpack.c.l.b16 %v43
  %v228 = vunpack.c.l.b16 %v44
  %v229 = vunpack.c.l.b16 %v45
  %v230 = vunpack.c.l.b16 %v46
  %v231 = vunpack.c.l.b16 %v47
  %v232 = vunpack.c.l.b16 %v48
  %v233 = vunpack.c.l.b16 %v49
  %v234 = vunpack.c.l.b16 %v50
  %v235 = vunpack.c.l.b16 %v51
  %v236 = vunpack.c.l.b16 %v52
  %v237 = vunpack.c.l.b16 %v53
  %v238 = vunpack.c.l.b16 %v54
  %v239 = vunpack.c.l.b16 %v55
  %v240 = vunpack.c.l.b16 %v56
  %v241 = vunpack.c.l.b16 %v57
  %v242 = vunpack.c.l.b16 %v58
  %v243 = vunpack.c.l.b16 %v59
  %v244 = vunpack.c.l.b16 %v60
  %v245 = vunpack.c.l.b16 %v61
  %v246 = vunpack.c.l.b16 %v62
  %v247 = vunpack.c.l.b16 %v63
  %v248 = vunpack.c.l.b16 %v64
  %v249 = vunpack.c.l.b16 %v65
  %v250 = vunpack.c.l.b16 %v66
  %v251 = vunpack.c.l.b16 %v67
  %v252 = vunpack.c.l.b16 %v68
  %v253 = vunpack.c.l.b16 %v69
  %v254 = vunpack.c.l.b16 %v70
  %v255 = vunpack.c.l.b16 %v71
  %v256 = vunpack.c.l.b16 %v72
  %v257 = vunpack.c.l.b16 %v73
  %v258 = vunpack.c.l.b16 %v74
  %v259 = vunpack.c.l.b16 %v75
  %v260 = vunpack.c.l.b16 %v76
  %v261 = vunpack.c.l.b16 %v77
  %v262 = vunpack.c.l.b16 %v78
  %v263 = vpack.c.b16 %v228, %v227
  %v264 = vpack.c.b16 %v230, %v229
  %v265 = vpack.c.b16 %v232, %v231
  %v266 = vpack.c.b16 %v234, %v233
  %v267 = vpack.c.b16 %v236, %v235
  %v268 = vpack.c.b16 %v238, %v237
  %v269 = vpack.c.b16 %v240, %v239
  %v270 = vpack.c.b16 %v242, %v241
  %v271 = vpack.c.b16 %v244, %v243
  %v272 = vpack.c.b16 %v246, %v245
  %v273 = vpack.c.b16 %v248, %v247
  %v274 = vpack.c.b16 %v250, %v249
  %v275 = vpack.c.b16 %v252, %v251
  %v276 = vpack.c.b16 %v254, %v253
  %v277 = vpack.c.b16 %v256, %v255
  %v278 = vpack.c.b16 %v258, %v257
  %v279 = vpack.c.b16 %v260, %v259
  %v280 = vpack.c.b16 %v262, %v261
  %vm299 = vcmask 261120
  %v301 = vsel %vm299, %v158, 0
  %v304 = vsel %vm299, %v161, 0
  %v307 = vsel %vm299, %v164, 0
  %v310 = vsel %vm299, %v167, 0
  %v313 = vsel %vm299, %v170, 0
  %v316 = vsel %vm299, %v173, 0
  %v319 = vsel %vm299, %v176, 0
  %321 = vmatprep.subr.bf16.mxu0 0
  %322 = vmatpush1.bf16.msra.mxu0 %v270
  %323 = vmatprep.subr.bf16.mxu0 0
  %324 = vmatpush1.bf16.msra.mxu0 %v269
  %325 = vmatprep.subr.bf16.mxu0 0
  %326 = vmatpush1.bf16.msra.mxu0 %v268
  %327 = vmatprep.subr.bf16.mxu0 0
  %328 = vmatpush1.bf16.msra.mxu0 %v267
  %329 = vmatprep.subr.bf16.mxu0 0
  %330 = vmatpush1.bf16.msra.mxu0 %v266
  %331 = vmatprep.subr.bf16.mxu0 0
  %332 = vmatpush1.bf16.msra.mxu0 %v265
  %333 = vmatprep.subr.bf16.mxu0 0
  %334 = vmatpush1.bf16.msra.mxu0 %v264
  %335 = vmatprep.subr.bf16.mxu0 0
  %336 = vmatpush1.bf16.msra.mxu0 %v263
  %337 = vmatprep.subr.bf16.mxu0 0
  %338 = vmatpush2.bf16.msra.mxu0 %v278
  %339 = vmatprep.subr.bf16.mxu0 0
  %340 = vmatpush2.bf16.msra.mxu0 %v277
  %341 = vmatprep.subr.bf16.mxu0 0
  %342 = vmatpush2.bf16.msra.mxu0 %v276
  %343 = vmatprep.subr.bf16.mxu0 0
  %344 = vmatpush2.bf16.msra.mxu0 %v275
  %345 = vmatprep.subr.bf16.mxu0 0
  %346 = vmatpush2.bf16.msra.mxu0 %v274
  %347 = vmatprep.subr.bf16.mxu0 0
  %348 = vmatpush2.bf16.msra.mxu0 %v273
  %349 = vmatprep.subr.bf16.mxu0 0
  %350 = vmatpush2.bf16.msra.mxu0 %v272
  %351 = vmatprep.subr.bf16.mxu0 0
  %352 = vmatpush2.bf16.msra.mxu0 %v271
  %353 = vmatprep.mubr.bf16.mxu0 %v157
  %354 = vmatmul.mubr.bf16.gmra.mxu0 %v156
  %v355 = vpop.f32.mrf.mxu0
  %v356 = vadd.f32 %v84, %v355
  %v357 = vpop.f32.mrf.mxu0
  %v358 = vpop.f32.mrf.mxu0
  %v359 = vadd.f32 %v84, %v358
  %v360 = vpop.f32.mrf.mxu0
  %361 = vmatprep.mubr.bf16.mxu0 %v160
  %362 = vmatmul.mubr.bf16.gmra.mxu0 %v159
  %v363 = vpop.f32.mrf.mxu0
  %v364 = vadd.f32 %v84, %v363
  %v365 = vpop.f32.mrf.mxu0
  %v366 = vpop.f32.mrf.mxu0
  %v367 = vadd.f32 %v84, %v366
  %v368 = vpop.f32.mrf.mxu0
  %369 = vmatprep.mubr.bf16.mxu0 %v163
  %370 = vmatmul.mubr.bf16.gmra.mxu0 %v162
  %v371 = vpop.f32.mrf.mxu0
  %v372 = vadd.f32 %v84, %v371
  %v373 = vpop.f32.mrf.mxu0
  %v374 = vpop.f32.mrf.mxu0
  %v375 = vadd.f32 %v84, %v374
  %v376 = vpop.f32.mrf.mxu0
  %377 = vmatprep.mubr.bf16.mxu0 %v166
  %378 = vmatmul.mubr.bf16.gmra.mxu0 %v165
  %v379 = vpop.f32.mrf.mxu0
  %v380 = vadd.f32 %v84, %v379
  %v381 = vpop.f32.mrf.mxu0
  %v382 = vpop.f32.mrf.mxu0
  %v383 = vadd.f32 %v84, %v382
  %v384 = vpop.f32.mrf.mxu0
  %385 = vmatprep.mubr.bf16.mxu0 %v169
  %386 = vmatmul.mubr.bf16.gmra.mxu0 %v168
  %v387 = vpop.f32.mrf.mxu0
  %v388 = vadd.f32 %v84, %v387
  %v389 = vpop.f32.mrf.mxu0
  %v390 = vpop.f32.mrf.mxu0
  %v391 = vadd.f32 %v84, %v390
  %v392 = vpop.f32.mrf.mxu0
  %393 = vmatprep.mubr.bf16.mxu0 %v172
  %394 = vmatmul.mubr.bf16.gmra.mxu0 %v171
  %v395 = vpop.f32.mrf.mxu0
  %v396 = vadd.f32 %v84, %v395
  %v397 = vpop.f32.mrf.mxu0
  %v398 = vpop.f32.mrf.mxu0
  %v399 = vadd.f32 %v84, %v398
  %v400 = vpop.f32.mrf.mxu0
  %401 = vmatprep.mubr.bf16.mxu0 %v175
  %402 = vmatmul.mubr.bf16.gmra.mxu0 %v174
  %v403 = vpop.f32.mrf.mxu0
  %v404 = vadd.f32 %v84, %v403
  %v405 = vpop.f32.mrf.mxu0
  %v406 = vpop.f32.mrf.mxu0
  %v407 = vadd.f32 %v84, %v406
  %v408 = vpop.f32.mrf.mxu0
  %409 = vdwg.mxu0
  %410 = vmatprep.subr.bf16.mxu0 0
  %411 = vmatpush1.bf16.msra.mxu0 0
  %412 = vmatprep.subr.bf16.mxu0 0
  %413 = vmatpush1.bf16.msra.mxu0 0
  %414 = vmatprep.subr.bf16.mxu0 0
  %415 = vmatpush1.bf16.msra.mxu0 0
  %416 = vmatprep.subr.bf16.mxu0 0
  %417 = vmatpush1.bf16.msra.mxu0 0
  %418 = vmatprep.subr.bf16.mxu0 0
  %419 = vmatpush1.bf16.msra.mxu0 0
  %420 = vmatprep.subr.bf16.mxu0 0
  %421 = vmatpush1.bf16.msra.mxu0 0
  %422 = vmatprep.subr.bf16.mxu0 0
  %423 = vmatpush1.bf16.msra.mxu0 %v280
  %424 = vmatprep.subr.bf16.mxu0 0
  %425 = vmatpush1.bf16.msra.mxu0 %v279
  %426 = vmatprep.subr.bf16.mxu0 0
  %427 = vmatpush2.bf16.msra.mxu0 0
  %428 = vmatprep.subr.bf16.mxu0 0
  %429 = vmatpush2.bf16.msra.mxu0 0
  %430 = vmatprep.subr.bf16.mxu0 0
  %431 = vmatpush2.bf16.msra.mxu0 0
  %432 = vmatprep.subr.bf16.mxu0 0
  %433 = vmatpush2.bf16.msra.mxu0 0
  %434 = vmatprep.subr.bf16.mxu0 0
  %435 = vmatpush2.bf16.msra.mxu0 0
  %436 = vmatprep.subr.bf16.mxu0 0
  %437 = vmatpush2.bf16.msra.mxu0 0
  %438 = vmatprep.subr.bf16.mxu0 0
  %439 = vmatpush2.bf16.msra.mxu0 0
  %440 = vmatprep.subr.bf16.mxu0 0
  %441 = vmatpush2.bf16.msra.mxu0 0
  %442 = vmatprep.mubr.bf16.mxu0 0
  %443 = vmatmul.mubr.bf16.gmra.mxu0 %v301
  %v444 = vpop.f32.mrf.mxu0
  %v445 = vadd.f32 %v356, %v444
  %v446 = vpop.f32.mrf.mxu0
  %v447 = vpop.f32.mrf.mxu0
  %v448 = vadd.f32 %v359, %v447
  %v449 = vpop.f32.mrf.mxu0
  %450 = vmatprep.mubr.bf16.mxu0 0
  %451 = vmatmul.mubr.bf16.gmra.mxu0 %v304
  %v452 = vpop.f32.mrf.mxu0
  %v453 = vadd.f32 %v364, %v452
  %v454 = vpop.f32.mrf.mxu0
  %v455 = vpop.f32.mrf.mxu0
  %v456 = vadd.f32 %v367, %v455
  %v457 = vpop.f32.mrf.mxu0
  %458 = vmatprep.mubr.bf16.mxu0 0
  %459 = vmatmul.mubr.bf16.gmra.mxu0 %v307
  %v460 = vpop.f32.mrf.mxu0
  %v461 = vadd.f32 %v372, %v460
  %v462 = vpop.f32.mrf.mxu0
  %v463 = vpop.f32.mrf.mxu0
  %v464 = vadd.f32 %v375, %v463
  %v465 = vpop.f32.mrf.mxu0
  %466 = vmatprep.mubr.bf16.mxu0 0
  %467 = vmatmul.mubr.bf16.gmra.mxu0 %v310
  %v468 = vpop.f32.mrf.mxu0
  %v469 = vadd.f32 %v380, %v468
  %v470 = vpop.f32.mrf.mxu0
  %v471 = vpop.f32.mrf.mxu0
  %v472 = vadd.f32 %v383, %v471
  %v473 = vpop.f32.mrf.mxu0
  %474 = vmatprep.mubr.bf16.mxu0 0
  %475 = vmatmul.mubr.bf16.gmra.mxu0 %v313
  %v476 = vpop.f32.mrf.mxu0
  %v477 = vadd.f32 %v388, %v476
  %v478 = vpop.f32.mrf.mxu0
  %v479 = vpop.f32.mrf.mxu0
  %v480 = vadd.f32 %v391, %v479
  %v481 = vpop.f32.mrf.mxu0
  %482 = vmatprep.mubr.bf16.mxu0 0
  %483 = vmatmul.mubr.bf16.gmra.mxu0 %v316
  %v484 = vpop.f32.mrf.mxu0
  %v485 = vadd.f32 %v396, %v484
  %v486 = vpop.f32.mrf.mxu0
  %v487 = vpop.f32.mrf.mxu0
  %v488 = vadd.f32 %v399, %v487
  %v489 = vpop.f32.mrf.mxu0
  %490 = vmatprep.mubr.bf16.mxu0 0
  %491 = vmatmul.mubr.bf16.gmra.mxu0 %v319
  %v492 = vpop.f32.mrf.mxu0
  %v493 = vadd.f32 %v404, %v492
  %v494 = vpop.f32.mrf.mxu0
  %v495 = vpop.f32.mrf.mxu0
  %v496 = vadd.f32 %v407, %v495
  %v497 = vpop.f32.mrf.mxu0
  %498 = vdwg.mxu0
  %v499 = vmax.f32 %v445, 0.0
  %v500 = vmax.f32 %v448, 0.0
  %v501 = vmax.f32 %v453, 0.0
  %v502 = vmax.f32 %v456, 0.0
  %v503 = vmax.f32 %v461, 0.0
  %v504 = vmax.f32 %v464, 0.0
  %v505 = vmax.f32 %v469, 0.0
  %v506 = vmax.f32 %v472, 0.0
  %v507 = vmax.f32 %v477, 0.0
  %v508 = vmax.f32 %v480, 0.0
  %v509 = vmax.f32 %v485, 0.0
  %v510 = vmax.f32 %v488, 0.0
  %v511 = vmax.f32 %v493, 0.0
  %v512 = vmax.f32 %v496, 0.0
  %vm513 = vcmask 523264
  %514 = vst.msk [vmem:[%s3] sm:$0xff] %vm513, %v499
  %515 = vst.msk [vmem:[%s3 + $0x8] sm:$0xff] %vm513, %v500
  %516 = vst.msk [vmem:[%s3 + $0x10] sm:$0xff] %vm513, %v501
  %517 = vst.msk [vmem:[%s3 + $0x18] sm:$0xff] %vm513, %v502
  %518 = vst.msk [vmem:[%s3 + $0x20] sm:$0xff] %vm513, %v503
  %519 = vst.msk [vmem:[%s3 + $0x28] sm:$0xff] %vm513, %v504
  %520 = vst.msk [vmem:[%s3 + $0x30] sm:$0xff] %vm513, %v505
  %521 = vst.msk [vmem:[%s3 + $0x38] sm:$0xff] %vm513, %v506
  %522 = vst.msk [vmem:[%s3 + $0x40] sm:$0xff] %vm513, %v507
  %523 = vst.msk [vmem:[%s3 + $0x48] sm:$0xff] %vm513, %v508
  %524 = vst.msk [vmem:[%s3 + $0x50] sm:$0xff] %vm513, %v509
  %525 = vst.msk [vmem:[%s3 + $0x58] sm:$0xff] %vm513, %v510
  %526 = vst.msk [vmem:[%s3 + $0x60] sm:$0xff] %vm513, %v511
  %527 = vst.msk [vmem:[%s3 + $0x68] sm:$0xff] %vm513, %v512
  // Predicated region
  $region14: #{net_entk_forward.5} parent=0 // pred_check
    _
  $region15: #{net_entk_forward.5} parent=0 // pred_check_branch
    %529 = sbr.rel (0) target = $region17
  $region16: #{net_entk_forward.5} parent=0 // pred_region
    _
  $region17: #{net_entk_forward.5} parent=0 // pred_fallthru
    _
  // Predicated region
  $region18: #{net_entk_forward.5} parent=0 // pred_check
    _
  $region19: #{net_entk_forward.5} parent=0 // pred_check_branch
    %531 = sbr.rel (0) target = $region21
  $region20: #{net_entk_forward.5} parent=0 // pred_region
    _
  $region21: #{net_entk_forward.5} parent=0 // pred_fallthru
    _

// kernel: net_entk_forward.6
$region0: #{net_entk_forward.6}
  #allocation0 [shape = 'u32[]', space=smem, size = 0x4, offset = 0x4, fixed_abs, tag = 'smem constant byte address 0x4 - core index']
  #allocation1 [shape = 'u32[144,128]{1,0:T(1,128)}', space=vmem, size = 0x12000, scoped, tag = 'internal scratch']
  %s0 = inlined_call_operand.vmem [shape: bf16[32,576], index: 0, kind: input, shape index: {}]
  %s1 = inlined_call_operand.vmem [shape: bf16[576,128], index: 1, kind: input, shape index: {}]
  %s2 = inlined_call_operand.vmem [shape: f32[1,128], index: 2, kind: input, shape index: {}]
  %s3 = inlined_call_operand.vmem [shape: f32[32,128], index: 3, kind: output, shape index: {}]
  %s4 = sld [smem:[#allocation0]]
  $region22: #{net_entk_forward.6} parent=0
    _
  %s6 = ssub.s32 1, %s4
  %s7 = scalar_select 0, %s6, %s4
  // Predicated region
  $region2: #{net_entk_forward.6} parent=0 // pred_check
    _
  $region3: #{net_entk_forward.6} parent=0 // pred_check_branch
    %9 = sbr.rel (0) target = $region5
  $region4: #{net_entk_forward.6} parent=0 // pred_region
    _
  $region5: #{net_entk_forward.6} parent=0 // pred_fallthru
    _
  // Predicated region
  $region6: #{net_entk_forward.6} parent=0 // pred_check
    _
  $region7: #{net_entk_forward.6} parent=0 // pred_check_branch
    %11 = sbr.rel (0) target = $region9
  $region8: #{net_entk_forward.6} parent=0 // pred_region
    _
  $region9: #{net_entk_forward.6} parent=0 // pred_fallthru
    _
  // Predicated region
  $region10: #{net_entk_forward.6} parent=0 // pred_check
    _
  $region11: #{net_entk_forward.6} parent=0 // pred_check_branch
    %13 = sbr.rel (0) target = $region13
  $region12: #{net_entk_forward.6} parent=0 // pred_region
    _
  $region13: #{net_entk_forward.6} parent=0 // pred_fallthru
    _
  %v15 = vld [vmem:[%s0] sm:$0xff]
  %v16 = vld [vmem:[%s0 + $0x8] sm:$0xff]
  %v17 = vld [vmem:[%s0 + $0x10] sm:$0xf]
  %v18 = vld [vmem:[%s0 + $0x14] sm:$0xff]
  %v19 = vld [vmem:[%s0 + $0x1c] sm:$0xff]
  %v20 = vld [vmem:[%s0 + $0x24] sm:$0xf]
  %v21 = vld [vmem:[%s0 + $0x28] sm:$0xff]
  %v22 = vld [vmem:[%s0 + $0x30] sm:$0xff]
  %v23 = vld [vmem:[%s0 + $0x38] sm:$0xf]
  %v24 = vld [vmem:[%s0 + $0x3c] sm:$0xff]
  %v25 = vld [vmem:[%s0 + $0x44] sm:$0xff]
  %v26 = vld [vmem:[%s0 + $0x4c] sm:$0xf]
  %v27 = vld [vmem:[%s1] sm:$0xf]
  %v28 = vld [vmem:[%s1 + $0x4] sm:$0xf]
  %v29 = vld [vmem:[%s1 + $0x8] sm:$0xf]
  %v30 = vld [vmem:[%s1 + $0xc] sm:$0xf]
  %v31 = vld [vmem:[%s1 + $0x10] sm:$0xf]
  %v32 = vld [vmem:[%s1 + $0x14] sm:$0xf]
  %v33 = vld [vmem:[%s1 + $0x18] sm:$0xf]
  %v34 = vld [vmem:[%s1 + $0x1c] sm:$0xf]
  %v35 = vld [vmem:[%s1 + $0x20] sm:$0xf]
  %v36 = vld [vmem:[%s1 + $0x24] sm:$0xf]
  %v37 = vld [vmem:[%s1 + $0x28] sm:$0xf]
  %v38 = vld [vmem:[%s1 + $0x2c] sm:$0xf]
  %v39 = vld [vmem:[%s1 + $0x30] sm:$0xf]
  %v40 = vld [vmem:[%s1 + $0x34] sm:$0xf]
  %v41 = vld [vmem:[%s1 + $0x38] sm:$0xf]
  %v42 = vld [vmem:[%s1 + $0x3c] sm:$0xf]
  %v43 = vld [vmem:[%s1 + $0x40] sm:$0xf]
  %v44 = vld [vmem:[%s1 + $0x44] sm:$0xf]
  %v45 = vld [vmem:[%s1 + $0x48] sm:$0xf]
  %v46 = vld [vmem:[%s1 + $0x4c] sm:$0xf]
  %v47 = vld [vmem:[%s1 + $0x50] sm:$0xf]
  %v48 = vld [vmem:[%s1 + $0x54] sm:$0xf]
  %v49 = vld [vmem:[%s1 + $0x58] sm:$0xf]
  %v50 = vld [vmem:[%s1 + $0x5c] sm:$0xf]
  %v51 = vld [vmem:[%s1 + $0x60] sm:$0xf]
  %v52 = vld [vmem:[%s1 + $0x64] sm:$0xf]
  %v53 = vld [vmem:[%s1 + $0x68] sm:$0xf]
  %v54 = vld [vmem:[%s1 + $0x6c] sm:$0xf]
  %v55 = vld [vmem:[%s1 + $0x70] sm:$0xf]
  %v56 = vld [vmem:[%s1 + $0x74] sm:$0xf]
  %v57 = vld [vmem:[%s1 + $0x78] sm:$0xf]
  %v58 = vld [vmem:[%s1 + $0x7c] sm:$0xf]
  %v59 = vld [vmem:[%s1 + $0x80] sm:$0xf]
  %v60 = vld [vmem:[%s1 + $0x84] sm:$0xf]
  %v61 = vld [vmem:[%s1 + $0x88] sm:$0xf]
  %v62 = vld [vmem:[%s1 + $0x8c] sm:$0xf]
  %v63 = vld [vmem:[%s1 + $0x90] sm:$0xf]
  %v64 = vld [vmem:[%s1 + $0x94] sm:$0xf]
  %v65 = vld [vmem:[%s1 + $0x98] sm:$0xf]
  %v66 = vld [vmem:[%s1 + $0x9c] sm:$0xf]
  %v67 = vld [vmem:[%s1 + $0xa0] sm:$0xf]
  %v68 = vld [vmem:[%s1 + $0xa4] sm:$0xf]
  %v69 = vld [vmem:[%s1 + $0xa8] sm:$0xf]
  %v70 = vld [vmem:[%s1 + $0xac] sm:$0xf]
  %v71 = vld [vmem:[%s1 + $0xb0] sm:$0xf]
  %v72 = vld [vmem:[%s1 + $0xb4] sm:$0xf]
  %v73 = vld [vmem:[%s1 + $0xb8] sm:$0xf]
  %v74 = vld [vmem:[%s1 + $0xbc] sm:$0xf]
  %v75 = vld [vmem:[%s1 + $0xc0] sm:$0xf]
  %v76 = vld [vmem:[%s1 + $0xc4] sm:$0xf]
  %v77 = vld [vmem:[%s1 + $0xc8] sm:$0xf]
  %v78 = vld [vmem:[%s1 + $0xcc] sm:$0xf]
  %v79 = vld [vmem:[%s1 + $0xd0] sm:$0xf]
  %v80 = vld [vmem:[%s1 + $0xd4] sm:$0xf]
  %v81 = vld [vmem:[%s1 + $0xd8] sm:$0xf]
  %v82 = vld [vmem:[%s1 + $0xdc] sm:$0xf]
  %v83 = vld [vmem:[%s1 + $0xe0] sm:$0xf]
  %v84 = vld [vmem:[%s1 + $0xe4] sm:$0xf]
  %v85 = vld [vmem:[%s1 + $0xe8] sm:$0xf]
  %v86 = vld [vmem:[%s1 + $0xec] sm:$0xf]
  %v87 = vld [vmem:[%s1 + $0xf0] sm:$0xf]
  %v88 = vld [vmem:[%s1 + $0xf4] sm:$0xf]
  %v89 = vld [vmem:[%s1 + $0xf8] sm:$0xf]
  %v90 = vld [vmem:[%s1 + $0xfc] sm:$0xf]
  %v91 = vld [vmem:[%s1 + $0x100] sm:$0xf]
  %v92 = vld [vmem:[%s1 + $0x104] sm:$0xf]
  %v93 = vld [vmem:[%s1 + $0x108] sm:$0xf]
  %v94 = vld [vmem:[%s1 + $0x10c] sm:$0xf]
  %v95 = vld [vmem:[%s1 + $0x110] sm:$0xf]
  %v96 = vld [vmem:[%s1 + $0x114] sm:$0xf]
  %v97 = vld [vmem:[%s1 + $0x118] sm:$0xf]
  %v98 = vld [vmem:[%s1 + $0x11c] sm:$0xf]
  %v99 = vld [vmem:[%s2] sm:$0x1]
  %v101 = vlaneseq
  %v102 = vshrl.u32 %v101, 7
  %v103 = vsub.s32 0, %v102
  %v104 = vrot.slane %v99, %v103
  %v118 = vunpack.c.l.b16 %v15
  %v119 = vunpack.c.h.b16 %v15
  %v120 = vunpack.c.l.b16 %v16
  %v121 = vunpack.c.h.b16 %v16
  %v122 = vunpack.c.l.b16 %v17
  %v123 = vunpack.c.l.b16 %v18
  %v124 = vunpack.c.h.b16 %v18
  %v125 = vunpack.c.l.b16 %v19
  %v126 = vunpack.c.h.b16 %v19
  %v127 = vunpack.c.l.b16 %v20
  %v128 = vunpack.c.l.b16 %v21
  %v129 = vunpack.c.h.b16 %v21
  %v130 = vunpack.c.l.b16 %v22
  %v131 = vunpack.c.h.b16 %v22
  %v132 = vunpack.c.l.b16 %v23
  %v133 = vunpack.c.l.b16 %v24
  %v134 = vunpack.c.h.b16 %v24
  %v135 = vunpack.c.l.b16 %v25
  %v136 = vunpack.c.h.b16 %v25
  %v137 = vunpack.c.l.b16 %v26
  %v138 = vpack.c.b16 %v123, %v118
  %v139 = vpack.c.b16 %v124, %v119
  %v140 = vpack.c.b16 %v125, %v120
  %v141 = vpack.c.b16 %v126, %v121
  %v142 = vpack.c.b16 %v127, %v122
  %v143 = vpack.c.b16 %v133, %v128
  %v144 = vpack.c.b16 %v134, %v129
  %v145 = vpack.c.b16 %v135, %v130
  %v146 = vpack.c.b16 %v136, %v131
  %v147 = vpack.c.b16 %v137, %v132
  %v228 = vunpack.c.l.b16 %v27
  %v229 = vunpack.c.l.b16 %v28
  %v230 = vunpack.c.l.b16 %v29
  %v231 = vunpack.c.l.b16 %v30
  %v232 = vunpack.c.l.b16 %v31
  %v233 = vunpack.c.l.b16 %v32
  %v234 = vunpack.c.l.b16 %v33
  %v235 = vunpack.c.l.b16 %v34
  %v236 = vunpack.c.l.b16 %v35
  %v237 = vunpack.c.l.b16 %v36
  %v238 = vunpack.c.l.b16 %v37
  %v239 = vunpack.c.l.b16 %v38
  %v240 = vunpack.c.l.b16 %v39
  %v241 = vunpack.c.l.b16 %v40
  %v242 = vunpack.c.l.b16 %v41
  %v243 = vunpack.c.l.b16 %v42
  %v244 = vunpack.c.l.b16 %v43
  %v245 = vunpack.c.l.b16 %v44
  %v246 = vunpack.c.l.b16 %v45
  %v247 = vunpack.c.l.b16 %v46
  %v248 = vunpack.c.l.b16 %v47
  %v249 = vunpack.c.l.b16 %v48
  %v250 = vunpack.c.l.b16 %v49
  %v251 = vunpack.c.l.b16 %v50
  %v252 = vunpack.c.l.b16 %v51
  %v253 = vunpack.c.l.b16 %v52
  %v254 = vunpack.c.l.b16 %v53
  %v255 = vunpack.c.l.b16 %v54
  %v256 = vunpack.c.l.b16 %v55
  %v257 = vunpack.c.l.b16 %v56
  %v258 = vunpack.c.l.b16 %v57
  %v259 = vunpack.c.l.b16 %v58
  %v260 = vunpack.c.l.b16 %v59
  %v261 = vunpack.c.l.b16 %v60
  %v262 = vunpack.c.l.b16 %v61
  %v263 = vunpack.c.l.b16 %v62
  %v264 = vunpack.c.l.b16 %v63
  %v265 = vunpack.c.l.b16 %v64
  %v266 = vunpack.c.l.b16 %v65
  %v267 = vunpack.c.l.b16 %v66
  %v268 = vunpack.c.l.b16 %v67
  %v269 = vunpack.c.l.b16 %v68
  %v270 = vunpack.c.l.b16 %v69
  %v271 = vunpack.c.l.b16 %v70
  %v272 = vunpack.c.l.b16 %v71
  %v273 = vunpack.c.l.b16 %v72
  %v274 = vunpack.c.l.b16 %v73
  %v275 = vunpack.c.l.b16 %v74
  %v276 = vunpack.c.l.b16 %v75
  %v277 = vunpack.c.l.b16 %v76
  %v278 = vunpack.c.l.b16 %v77
  %v279 = vunpack.c.l.b16 %v78
  %v280 = vunpack.c.l.b16 %v79
  %v281 = vunpack.c.l.b16 %v80
  %v282 = vunpack.c.l.b16 %v81
  %v283 = vunpack.c.l.b16 %v82
  %v284 = vunpack.c.l.b16 %v83
  %v285 = vunpack.c.l.b16 %v84
  %v286 = vunpack.c.l.b16 %v85
  %v287 = vunpack.c.l.b16 %v86
  %v288 = vunpack.c.l.b16 %v87
  %v289 = vunpack.c.l.b16 %v88
  %v290 = vunpack.c.l.b16 %v89
  %v291 = vunpack.c.l.b16 %v90
  %v292 = vunpack.c.l.b16 %v91
  %v293 = vunpack.c.l.b16 %v92
  %v294 = vunpack.c.l.b16 %v93
  %v295 = vunpack.c.l.b16 %v94
  %v296 = vunpack.c.l.b16 %v95
  %v297 = vunpack.c.l.b16 %v96
  %v298 = vunpack.c.l.b16 %v97
  %v299 = vunpack.c.l.b16 %v98
  %v300 = vpack.c.b16 %v229, %v228
  %v301 = vpack.c.b16 %v231, %v230
  %v302 = vpack.c.b16 %v233, %v232
  %v303 = vpack.c.b16 %v235, %v234
  %v304 = vpack.c.b16 %v237, %v236
  %v305 = vpack.c.b16 %v239, %v238
  %v306 = vpack.c.b16 %v241, %v240
  %v307 = vpack.c.b16 %v243, %v242
  %v308 = vpack.c.b16 %v245, %v244
  %v309 = vpack.c.b16 %v247, %v246
  %v310 = vpack.c.b16 %v249, %v248
  %v311 = vpack.c.b16 %v251, %v250
  %v312 = vpack.c.b16 %v253, %v252
  %v313 = vpack.c.b16 %v255, %v254
  %v314 = vpack.c.b16 %v257, %v256
  %v315 = vpack.c.b16 %v259, %v258
  %v316 = vpack.c.b16 %v261, %v260
  %v317 = vpack.c.b16 %v263, %v262
  %v318 = vpack.c.b16 %v265, %v264
  %v319 = vpack.c.b16 %v267, %v266
  %v320 = vpack.c.b16 %v269, %v268
  %v321 = vpack.c.b16 %v271, %v270
  %v322 = vpack.c.b16 %v273, %v272
  %v323 = vpack.c.b16 %v275, %v274
  %v324 = vpack.c.b16 %v277, %v276
  %v325 = vpack.c.b16 %v279, %v278
  %v326 = vpack.c.b16 %v281, %v280
  %v327 = vpack.c.b16 %v283, %v282
  %v328 = vpack.c.b16 %v285, %v284
  %v329 = vpack.c.b16 %v287, %v286
  %v330 = vpack.c.b16 %v289, %v288
  %v331 = vpack.c.b16 %v291, %v290
  %v332 = vpack.c.b16 %v293, %v292
  %v333 = vpack.c.b16 %v295, %v294
  %v334 = vpack.c.b16 %v297, %v296
  %v335 = vpack.c.b16 %v299, %v298
  %vm372 = vcmask 523264
  %v374 = vsel %vm372, %v142, 0
  %v377 = vsel %vm372, %v147, 0
  %379 = vmatprep.subr.bf16.mxu0 0
  %380 = vmatpush1.bf16.msra.mxu0 %v307
  %381 = vmatprep.subr.bf16.mxu0 0
  %382 = vmatpush1.bf16.msra.mxu0 %v306
  %383 = vmatprep.subr.bf16.mxu0 0
  %384 = vmatpush1.bf16.msra.mxu0 %v305
  %385 = vmatprep.subr.bf16.mxu0 0
  %386 = vmatpush1.bf16.msra.mxu0 %v304
  %387 = vmatprep.subr.bf16.mxu0 0
  %388 = vmatpush1.bf16.msra.mxu0 %v303
  %389 = vmatprep.subr.bf16.mxu0 0
  %390 = vmatpush1.bf16.msra.mxu0 %v302
  %391 = vmatprep.subr.bf16.mxu0 0
  %392 = vmatpush1.bf16.msra.mxu0 %v301
  %393 = vmatprep.subr.bf16.mxu0 0
  %394 = vmatpush1.bf16.msra.mxu0 %v300
  %395 = vmatprep.subr.bf16.mxu0 0
  %396 = vmatpush2.bf16.msra.mxu0 %v315
  %397 = vmatprep.subr.bf16.mxu0 0
  %398 = vmatpush2.bf16.msra.mxu0 %v314
  %399 = vmatprep.subr.bf16.mxu0 0
  %400 = vmatpush2.bf16.msra.mxu0 %v313
  %401 = vmatprep.subr.bf16.mxu0 0
  %402 = vmatpush2.bf16.msra.mxu0 %v312
  %403 = vmatprep.subr.bf16.mxu0 0
  %404 = vmatpush2.bf16.msra.mxu0 %v311
  %405 = vmatprep.subr.bf16.mxu0 0
  %406 = vmatpush2.bf16.msra.mxu0 %v310
  %407 = vmatprep.subr.bf16.mxu0 0
  %408 = vmatpush2.bf16.msra.mxu0 %v309
  %409 = vmatprep.subr.bf16.mxu0 0
  %410 = vmatpush2.bf16.msra.mxu0 %v308
  %411 = vmatprep.mubr.bf16.mxu0 %v139
  %412 = vmatmul.mubr.bf16.gmra.mxu0 %v138
  %v413 = vpop.f32.mrf.mxu0
  %v414 = vadd.f32 %v104, %v413
  %v415 = vpop.f32.mrf.mxu0
  %v416 = vpop.f32.mrf.mxu0
  %v417 = vadd.f32 %v104, %v416
  %v418 = vpop.f32.mrf.mxu0
  %419 = vmatprep.mubr.bf16.mxu0 %v144
  %420 = vmatmul.mubr.bf16.gmra.mxu0 %v143
  %v421 = vpop.f32.mrf.mxu0
  %v422 = vadd.f32 %v104, %v421
  %v423 = vpop.f32.mrf.mxu0
  %v424 = vpop.f32.mrf.mxu0
  %v425 = vadd.f32 %v104, %v424
  %v426 = vpop.f32.mrf.mxu0
  %427 = vdwg.mxu0
  %428 = vmatprep.subr.bf16.mxu0 0
  %429 = vmatpush1.bf16.msra.mxu0 %v323
  %430 = vmatprep.subr.bf16.mxu0 0
  %431 = vmatpush1.bf16.msra.mxu0 %v322
  %432 = vmatprep.subr.bf16.mxu0 0
  %433 = vmatpush1.bf16.msra.mxu0 %v321
  %434 = vmatprep.subr.bf16.mxu0 0
  %435 = vmatpush1.bf16.msra.mxu0 %v320
  %436 = vmatprep.subr.bf16.mxu0 0
  %437 = vmatpush1.bf16.msra.mxu0 %v319
  %438 = vmatprep.subr.bf16.mxu0 0
  %439 = vmatpush1.bf16.msra.mxu0 %v318
  %440 = vmatprep.subr.bf16.mxu0 0
  %441 = vmatpush1.bf16.msra.mxu0 %v317
  %442 = vmatprep.subr.bf16.mxu0 0
  %443 = vmatpush1.bf16.msra.mxu0 %v316
  %444 = vmatprep.subr.bf16.mxu0 0
  %445 = vmatpush2.bf16.msra.mxu0 %v331
  %446 = vmatprep.subr.bf16.mxu0 0
  %447 = vmatpush2.bf16.msra.mxu0 %v330
  %448 = vmatprep.subr.bf16.mxu0 0
  %449 = vmatpush2.bf16.msra.mxu0 %v329
  %450 = vmatprep.subr.bf16.mxu0 0
  %451 = vmatpush2.bf16.msra.mxu0 %v328
  %452 = vmatprep.subr.bf16.mxu0 0
  %453 = vmatpush2.bf16.msra.mxu0 %v327
  %454 = vmatprep.subr.bf16.mxu0 0
  %455 = vmatpush2.bf16.msra.mxu0 %v326
  %456 = vmatprep.subr.bf16.mxu0 0
  %457 = vmatpush2.bf16.msra.mxu0 %v325
  %458 = vmatprep.subr.bf16.mxu0 0
  %459 = vmatpush2.bf16.msra.mxu0 %v324
  %460 = vmatprep.mubr.bf16.mxu0 %v141
  %461 = vmatmul.mubr.bf16.gmra.mxu0 %v140
  %v462 = vpop.f32.mrf.mxu0
  %v463 = vadd.f32 %v414, %v462
  %v464 = vpop.f32.mrf.mxu0
  %v465 = vpop.f32.mrf.mxu0
  %v466 = vadd.f32 %v417, %v465
  %v467 = vpop.f32.mrf.mxu0
  %468 = vmatprep.mubr.bf16.mxu0 %v146
  %469 = vmatmul.mubr.bf16.gmra.mxu0 %v145
  %v470 = vpop.f32.mrf.mxu0
  %v471 = vadd.f32 %v422, %v470
  %v472 = vpop.f32.mrf.mxu0
  %v473 = vpop.f32.mrf.mxu0
  %v474 = vadd.f32 %v425, %v473
  %v475 = vpop.f32.mrf.mxu0
  %476 = vdwg.mxu0
  %477 = vmatprep.subr.bf16.mxu0 0
  %478 = vmatpush1.bf16.msra.mxu0 0
  %479 = vmatprep.subr.bf16.mxu0 0
  %480 = vmatpush1.bf16.msra.mxu0 0
  %481 = vmatprep.subr.bf16.mxu0 0
  %482 = vmatpush1.bf16.msra.mxu0 0
  %483 = vmatprep.subr.bf16.mxu0 0
  %484 = vmatpush1.bf16.msra.mxu0 0
  %485 = vmatprep.subr.bf16.mxu0 0
  %486 = vmatpush1.bf16.msra.mxu0 %v335
  %487 = vmatprep.subr.bf16.mxu0 0
  %488 = vmatpush1.bf16.msra.mxu0 %v334
  %489 = vmatprep.subr.bf16.mxu0 0
  %490 = vmatpush1.bf16.msra.mxu0 %v333
  %491 = vmatprep.subr.bf16.mxu0 0
  %492 = vmatpush1.bf16.msra.mxu0 %v332
  %493 = vmatprep.subr.bf16.mxu0 0
  %494 = vmatpush2.bf16.msra.mxu0 0
  %495 = vmatprep.subr.bf16.mxu0 0
  %496 = vmatpush2.bf16.msra.mxu0 0
  %497 = vmatprep.subr.bf16.mxu0 0
  %498 = vmatpush2.bf16.msra.mxu0 0
  %499 = vmatprep.subr.bf16.mxu0 0
  %500 = vmatpush2.bf16.msra.mxu0 0
  %501 = vmatprep.subr.bf16.mxu0 0
  %502 = vmatpush2.bf16.msra.mxu0 0
  %503 = vmatprep.subr.bf16.mxu0 0
  %504 = vmatpush2.bf16.msra.mxu0 0
  %505 = vmatprep.subr.bf16.mxu0 0
  %506 = vmatpush2.bf16.msra.mxu0 0
  %507 = vmatprep.subr.bf16.mxu0 0
  %508 = vmatpush2.bf16.msra.mxu0 0
  %509 = vmatprep.mubr.bf16.mxu0 0
  %510 = vmatmul.mubr.bf16.gmra.mxu0 %v374
  %v511 = vpop.f32.mrf.mxu0
  %v512 = vadd.f32 %v463, %v511
  %v513 = vpop.f32.mrf.mxu0
  %v514 = vpop.f32.mrf.mxu0
  %v515 = vadd.f32 %v466, %v514
  %v516 = vpop.f32.mrf.mxu0
  %517 = vmatprep.mubr.bf16.mxu0 0
  %518 = vmatmul.mubr.bf16.gmra.mxu0 %v377
  %v519 = vpop.f32.mrf.mxu0
  %v520 = vadd.f32 %v471, %v519
  %v521 = vpop.f32.mrf.mxu0
  %v522 = vpop.f32.mrf.mxu0
  %v523 = vadd.f32 %v474, %v522
  %v524 = vpop.f32.mrf.mxu0
  %525 = vdwg.mxu0
  %v526 = vmax.f32 %v512, 0.0
  %v527 = vmax.f32 %v515, 0.0
  %v528 = vmax.f32 %v520, 0.0
  %v529 = vmax.f32 %v523, 0.0
  %530 = vst [vmem:[%s3] sm:$0xff] %v526
  %531 = vst [vmem:[%s3 + $0x8] sm:$0xff] %v527
  %532 = vst [vmem:[%s3 + $0x10] sm:$0xff] %v528
  %533 = vst [vmem:[%s3 + $0x18] sm:$0xff] %v529
  // Predicated region
  $region14: #{net_entk_forward.6} parent=0 // pred_check
    _
  $region15: #{net_entk_forward.6} parent=0 // pred_check_branch
    %535 = sbr.rel (0) target = $region17
  $region16: #{net_entk_forward.6} parent=0 // pred_region
    _
  $region17: #{net_entk_forward.6} parent=0 // pred_fallthru
    _
  // Predicated region
  $region18: #{net_entk_forward.6} parent=0 // pred_check
    _
  $region19: #{net_entk_forward.6} parent=0 // pred_check_branch
    %537 = sbr.rel (0) target = $region21
  $region20: #{net_entk_forward.6} parent=0 // pred_region
    _
  $region21: #{net_entk_forward.6} parent=0 // pred_fallthru
    _

// kernel: net_entk_forward.7
$region0: #{net_entk_forward.7}
  #allocation0 [shape = 'u32[]', space=smem, size = 0x4, offset = 0x4, fixed_abs, tag = 'smem constant byte address 0x4 - core index']
  #allocation1 [shape = 'u32[144,128]{1,0:T(1,128)}', space=vmem, size = 0x12000, scoped, tag = 'internal scratch']
  %s0 = inlined_call_operand.vmem [shape: bf16[16,2048], index: 0, kind: input, shape index: {}]
  %s1 = inlined_call_operand.vmem [shape: bf16[2048,128], index: 1, kind: input, shape index: {}]
  %s2 = inlined_call_operand.vmem [shape: f32[1,128], index: 2, kind: input, shape index: {}]
  %s3 = inlined_call_operand.vmem [shape: f32[128,128], index: 3, kind: input, shape index: {}]
  %s4 = inlined_call_operand.vmem [shape: f32[1,128], index: 4, kind: input, shape index: {}]
  %s5 = inlined_call_operand.vmem [shape: f32[16,128], index: 5, kind: output, shape index: {}]
  %s6 = sld [smem:[#allocation0]]
  $region30: #{net_entk_forward.7} parent=0
    _
  %s8 = ssub.s32 1, %s6
  %s9 = scalar_select 0, %s8, %s6
  // Predicated region
  $region2: #{net_entk_forward.7} parent=0 // pred_check
    _
  $region3: #{net_entk_forward.7} parent=0 // pred_check_branch
    %11 = sbr.rel (0) target = $region5
  $region4: #{net_entk_forward.7} parent=0 // pred_region
    _
  $region5: #{net_entk_forward.7} parent=0 // pred_fallthru
    _
  // Predicated region
  $region6: #{net_entk_forward.7} parent=0 // pred_check
    _
  $region7: #{net_entk_forward.7} parent=0 // pred_check_branch
    %13 = sbr.rel (0) target = $region9
  $region8: #{net_entk_forward.7} parent=0 // pred_region
    _
  $region9: #{net_entk_forward.7} parent=0 // pred_fallthru
    _
  // Predicated region
  $region10: #{net_entk_forward.7} parent=0 // pred_check
    _
  $region11: #{net_entk_forward.7} parent=0 // pred_check_branch
    %15 = sbr.rel (0) target = $region13
  $region12: #{net_entk_forward.7} parent=0 // pred_region
    _
  $region13: #{net_entk_forward.7} parent=0 // pred_fallthru
    _
  // Predicated region
  $region14: #{net_entk_forward.7} parent=0 // pred_check
    _
  $region15: #{net_entk_forward.7} parent=0 // pred_check_branch
    %17 = sbr.rel (0) target = $region17
  $region16: #{net_entk_forward.7} parent=0 // pred_region
    _
  $region17: #{net_entk_forward.7} parent=0 // pred_fallthru
    _
  // Predicated region
  $region18: #{net_entk_forward.7} parent=0 // pred_check
    _
  $region19: #{net_entk_forward.7} parent=0 // pred_check_branch
    %19 = sbr.rel (0) target = $region21
  $region20: #{net_entk_forward.7} parent=0 // pred_region
    _
  $region21: #{net_entk_forward.7} parent=0 // pred_fallthru
    _
  %v21 = vld [vmem:[%s0] sm:$0xff]
  %v22 = vld [vmem:[%s0 + $0x8] sm:$0xff]
  %v23 = vld [vmem:[%s0 + $0x10] sm:$0xff]
  %v24 = vld [vmem:[%s0 + $0x18] sm:$0xff]
  %v25 = vld [vmem:[%s0 + $0x20] sm:$0xff]
  %v26 = vld [vmem:[%s0 + $0x28] sm:$0xff]
  %v27 = vld [vmem:[%s0 + $0x30] sm:$0xff]
  %v28 = vld [vmem:[%s0 + $0x38] sm:$0xff]
  %v29 = vld [vmem:[%s0 + $0x40] sm:$0xff]
  %v30 = vld [vmem:[%s0 + $0x48] sm:$0xff]
  %v31 = vld [vmem:[%s0 + $0x50] sm:$0xff]
  %v32 = vld [vmem:[%s0 + $0x58] sm:$0xff]
  %v33 = vld [vmem:[%s0 + $0x60] sm:$0xff]
  %v34 = vld [vmem:[%s0 + $0x68] sm:$0xff]
  %v35 = vld [vmem:[%s0 + $0x70] sm:$0xff]
  %v36 = vld [vmem:[%s0 + $0x78] sm:$0xff]
  %v37 = vld [vmem:[%s1] sm:$0xf]
  %v38 = vld [vmem:[%s1 + $0x4] sm:$0xf]
  %v39 = vld [vmem:[%s1 + $0x8] sm:$0xf]
  %v40 = vld [vmem:[%s1 + $0xc] sm:$0xf]
  %v41 = vld [vmem:[%s1 + $0x10] sm:$0xf]
  %v42 = vld [vmem:[%s1 + $0x14] sm:$0xf]
  %v43 = vld [vmem:[%s1 + $0x18] sm:$0xf]
  %v44 = vld [vmem:[%s1 + $0x1c] sm:$0xf]
  %v45 = vld [vmem:[%s1 + $0x20] sm:$0xf]
  %v46 = vld [vmem:[%s1 + $0x24] sm:$0xf]
  %v47 = vld [vmem:[%s1 + $0x28] sm:$0xf]
  %v48 = vld [vmem:[%s1 + $0x2c] sm:$0xf]
  %v49 = vld [vmem:[%s1 + $0x30] sm:$0xf]
  %v50 = vld [vmem:[%s1 + $0x34] sm:$0xf]
  %v51 = vld [vmem:[%s1 + $0x38] sm:$0xf]
  %v52 = vld [vmem:[%s1 + $0x3c] sm:$0xf]
  %v53 = vld [vmem:[%s1 + $0x40] sm:$0xf]
  %v54 = vld [vmem:[%s1 + $0x44] sm:$0xf]
  %v55 = vld [vmem:[%s1 + $0x48] sm:$0xf]
  %v56 = vld [vmem:[%s1 + $0x4c] sm:$0xf]
  %v57 = vld [vmem:[%s1 + $0x50] sm:$0xf]
  %v58 = vld [vmem:[%s1 + $0x54] sm:$0xf]
  %v59 = vld [vmem:[%s1 + $0x58] sm:$0xf]
  %v60 = vld [vmem:[%s1 + $0x5c] sm:$0xf]
  %v61 = vld [vmem:[%s1 + $0x60] sm:$0xf]
  %v62 = vld [vmem:[%s1 + $0x64] sm:$0xf]
  %v63 = vld [vmem:[%s1 + $0x68] sm:$0xf]
  %v64 = vld [vmem:[%s1 + $0x6c] sm:$0xf]
  %v65 = vld [vmem:[%s1 + $0x70] sm:$0xf]
  %v66 = vld [vmem:[%s1 + $0x74] sm:$0xf]
  %v67 = vld [vmem:[%s1 + $0x78] sm:$0xf]
  %v68 = vld [vmem:[%s1 + $0x7c] sm:$0xf]
  %v69 = vld [vmem:[%s1 + $0x80] sm:$0xf]
  %v70 = vld [vmem:[%s1 + $0x84] sm:$0xf]
  %v71 = vld [vmem:[%s1 + $0x88] sm:$0xf]
  %v72 = vld [vmem:[%s1 + $0x8c] sm:$0xf]
  %v73 = vld [vmem:[%s1 + $0x90] sm:$0xf]
  %v74 = vld [vmem:[%s1 + $0x94] sm:$0xf]
  %v75 = vld [vmem:[%s1 + $0x98] sm:$0xf]
  %v76 = vld [vmem:[%s1 + $0x9c] sm:$0xf]
  %v77 = vld [vmem:[%s1 + $0xa0] sm:$0xf]
  %v78 = vld [vmem:[%s1 + $0xa4] sm:$0xf]
  %v79 = vld [vmem:[%s1 + $0xa8] sm:$0xf]
  %v80 = vld [vmem:[%s1 + $0xac] sm:$0xf]
  %v81 = vld [vmem:[%s1 + $0xb0] sm:$0xf]
  %v82 = vld [vmem:[%s1 + $0xb4] sm:$0xf]
  %v83 = vld [vmem:[%s1 + $0xb8] sm:$0xf]
  %v84 = vld [vmem:[%s1 + $0xbc] sm:$0xf]
  %v85 = vld [vmem:[%s1 + $0xc0] sm:$0xf]
  %v86 = vld [vmem:[%s1 + $0xc4] sm:$0xf]
  %v87 = vld [vmem:[%s1 + $0xc8] sm:$0xf]
  %v88 = vld [vmem:[%s1 + $0xcc] sm:$0xf]
  %v89 = vld [vmem:[%s1 + $0xd0] sm:$0xf]
  %v90 = vld [vmem:[%s1 + $0xd4] sm:$0xf]
  %v91 = vld [vmem:[%s1 + $0xd8] sm:$0xf]
  %v92 = vld [vmem:[%s1 + $0xdc] sm:$0xf]
  %v93 = vld [vmem:[%s1 + $0xe0] sm:$0xf]
  %v94 = vld [vmem:[%s1 + $0xe4] sm:$0xf]
  %v95 = vld [vmem:[%s1 + $0xe8] sm:$0xf]
  %v96 = vld [vmem:[%s1 + $0xec] sm:$0xf]
  %v97 = vld [vmem:[%s1 + $0xf0] sm:$0xf]
  %v98 = vld [vmem:[%s1 + $0xf4] sm:$0xf]
  %v99 = vld [vmem:[%s1 + $0xf8] sm:$0xf]
  %v100 = vld [vmem:[%s1 + $0xfc] sm:$0xf]
  %v101 = vld [vmem:[%s1 + $0x100] sm:$0xf]
  %v102 = vld [vmem:[%s1 + $0x104] sm:$0xf]
  %v103 = vld [vmem:[%s1 + $0x108] sm:$0xf]
  %v104 = vld [vmem:[%s1 + $0x10c] sm:$0xf]
  %v105 = vld [vmem:[%s1 + $0x110] sm:$0xf]
  %v106 = vld [vmem:[%s1 + $0x114] sm:$0xf]
  %v107 = vld [vmem:[%s1 + $0x118] sm:$0xf]
  %v108 = vld [vmem:[%s1 + $0x11c] sm:$0xf]
  %v109 = vld [vmem:[%s1 + $0x120] sm:$0xf]
  %v110 = vld [vmem:[%s1 + $0x124] sm:$0xf]
  %v111 = vld [vmem:[%s1 + $0x128] sm:$0xf]
  %v112 = vld [vmem:[%s1 + $0x12c] sm:$0xf]
  %v113 = vld [vmem:[%s1 + $0x130] sm:$0xf]
  %v114 = vld [vmem:[%s1 + $0x134] sm:$0xf]
  %v115 = vld [vmem:[%s1 + $0x138] sm:$0xf]
  %v116 = vld [vmem:[%s1 + $0x13c] sm:$0xf]
  %v117 = vld [vmem:[%s1 + $0x140] sm:$0xf]
  %v118 = vld [vmem:[%s1 + $0x144] sm:$0xf]
  %v119 = vld [vmem:[%s1 + $0x148] sm:$0xf]
  %v120 = vld [vmem:[%s1 + $0x14c] sm:$0xf]
  %v121 = vld [vmem:[%s1 + $0x150] sm:$0xf]
  %v122 = vld [vmem:[%s1 + $0x154] sm:$0xf]
  %v123 = vld [vmem:[%s1 + $0x158] sm:$0xf]
  %v124 = vld [vmem:[%s1 + $0x15c] sm:$0xf]
  %v125 = vld [vmem:[%s1 + $0x160] sm:$0xf]
  %v126 = vld [vmem:[%s1 + $0x164] sm:$0xf]
  %v127 = vld [vmem:[%s1 + $0x168] sm:$0xf]
  %v128 = vld [vmem:[%s1 + $0x16c] sm:$0xf]
  %v129 = vld [vmem:[%s1 + $0x170] sm:$0xf]
  %v130 = vld [vmem:[%s1 + $0x174] sm:$0xf]
  %v131 = vld [vmem:[%s1 + $0x178] sm:$0xf]
  %v132 = vld [vmem:[%s1 + $0x17c] sm:$0xf]
  %v133 = vld [vmem:[%s1 + $0x180] sm:$0xf]
  %v134 = vld [vmem:[%s1 + $0x184] sm:$0xf]
  %v135 = vld [vmem:[%s1 + $0x188] sm:$0xf]
  %v136 = vld [vmem:[%s1 + $0x18c] sm:$0xf]
  %v137 = vld [vmem:[%s1 + $0x190] sm:$0xf]
  %v138 = vld [vmem:[%s1 + $0x194] sm:$0xf]
  %v139 = vld [vmem:[%s1 + $0x198] sm:$0xf]
  %v140 = vld [vmem:[%s1 + $0x19c] sm:$0xf]
  %v141 = vld [vmem:[%s1 + $0x1a0] sm:$0xf]
  %v142 = vld [vmem:[%s1 + $0x1a4] sm:$0xf]
  %v143 = vld [vmem:[%s1 + $0x1a8] sm:$0xf]
  %v144 = vld [vmem:[%s1 + $0x1ac] sm:$0xf]
  %v145 = vld [vmem:[%s1 + $0x1b0] sm:$0xf]
  %v146 = vld [vmem:[%s1 + $0x1b4] sm:$0xf]
  %v147 = vld [vmem:[%s1 + $0x1b8] sm:$0xf]
  %v148 = vld [vmem:[%s1 + $0x1bc] sm:$0xf]
  %v149 = vld [vmem:[%s1 + $0x1c0] sm:$0xf]
  %v150 = vld [vmem:[%s1 + $0x1c4] sm:$0xf]
  %v151 = vld [vmem:[%s1 + $0x1c8] sm:$0xf]
  %v152 = vld [vmem:[%s1 + $0x1cc] sm:$0xf]
  %v153 = vld [vmem:[%s1 + $0x1d0] sm:$0xf]
  %v154 = vld [vmem:[%s1 + $0x1d4] sm:$0xf]
  %v155 = vld [vmem:[%s1 + $0x1d8] sm:$0xf]
  %v156 = vld [vmem:[%s1 + $0x1dc] sm:$0xf]
  %v157 = vld [vmem:[%s1 + $0x1e0] sm:$0xf]
  %v158 = vld [vmem:[%s1 + $0x1e4] sm:$0xf]
  %v159 = vld [vmem:[%s1 + $0x1e8] sm:$0xf]
  %v160 = vld [vmem:[%s1 + $0x1ec] sm:$0xf]
  %v161 = vld [vmem:[%s1 + $0x1f0] sm:$0xf]
  %v162 = vld [vmem:[%s1 + $0x1f4] sm:$0xf]
  %v163 = vld [vmem:[%s1 + $0x1f8] sm:$0xf]
  %v164 = vld [vmem:[%s1 + $0x1fc] sm:$0xf]
  %v165 = vld [vmem:[%s1 + $0x200] sm:$0xf]
  %v166 = vld [vmem:[%s1 + $0x204] sm:$0xf]
  %v167 = vld [vmem:[%s1 + $0x208] sm:$0xf]
  %v168 = vld [vmem:[%s1 + $0x20c] sm:$0xf]
  %v169 = vld [vmem:[%s1 + $0x210] sm:$0xf]
  %v170 = vld [vmem:[%s1 + $0x214] sm:$0xf]
  %v171 = vld [vmem:[%s1 + $0x218] sm:$0xf]
  %v172 = vld [vmem:[%s1 + $0x21c] sm:$0xf]
  %v173 = vld [vmem:[%s1 + $0x220] sm:$0xf]
  %v174 = vld [vmem:[%s1 + $0x224] sm:$0xf]
  %v175 = vld [vmem:[%s1 + $0x228] sm:$0xf]
  %v176 = vld [vmem:[%s1 + $0x22c] sm:$0xf]
  %v177 = vld [vmem:[%s1 + $0x230] sm:$0xf]
  %v178 = vld [vmem:[%s1 + $0x234] sm:$0xf]
  %v179 = vld [vmem:[%s1 + $0x238] sm:$0xf]
  %v180 = vld [vmem:[%s1 + $0x23c] sm:$0xf]
  %v181 = vld [vmem:[%s1 + $0x240] sm:$0xf]
  %v182 = vld [vmem:[%s1 + $0x244] sm:$0xf]
  %v183 = vld [vmem:[%s1 + $0x248] sm:$0xf]
  %v184 = vld [vmem:[%s1 + $0x24c] sm:$0xf]
  %v185 = vld [vmem:[%s1 + $0x250] sm:$0xf]
  %v186 = vld [vmem:[%s1 + $0x254] sm:$0xf]
  %v187 = vld [vmem:[%s1 + $0x258] sm:$0xf]
  %v188 = vld [vmem:[%s1 + $0x25c] sm:$0xf]
  %v189 = vld [vmem:[%s1 + $0x260] sm:$0xf]
  %v190 = vld [vmem:[%s1 + $0x264] sm:$0xf]
  %v191 = vld [vmem:[%s1 + $0x268] sm:$0xf]
  %v192 = vld [vmem:[%s1 + $0x26c] sm:$0xf]
  %v193 = vld [vmem:[%s1 + $0x270] sm:$0xf]
  %v194 = vld [vmem:[%s1 + $0x274] sm:$0xf]
  %v195 = vld [vmem:[%s1 + $0x278] sm:$0xf]
  %v196 = vld [vmem:[%s1 + $0x27c] sm:$0xf]
  %v197 = vld [vmem:[%s1 + $0x280] sm:$0xf]
  %v198 = vld [vmem:[%s1 + $0x284] sm:$0xf]
  %v199 = vld [vmem:[%s1 + $0x288] sm:$0xf]
  %v200 = vld [vmem:[%s1 + $0x28c] sm:$0xf]
  %v201 = vld [vmem:[%s1 + $0x290] sm:$0xf]
  %v202 = vld [vmem:[%s1 + $0x294] sm:$0xf]
  %v203 = vld [vmem:[%s1 + $0x298] sm:$0xf]
  %v204 = vld [vmem:[%s1 + $0x29c] sm:$0xf]
  %v205 = vld [vmem:[%s1 + $0x2a0] sm:$0xf]
  %v206 = vld [vmem:[%s1 + $0x2a4] sm:$0xf]
  %v207 = vld [vmem:[%s1 + $0x2a8] sm:$0xf]
  %v208 = vld [vmem:[%s1 + $0x2ac] sm:$0xf]
  %v209 = vld [vmem:[%s1 + $0x2b0] sm:$0xf]
  %v210 = vld [vmem:[%s1 + $0x2b4] sm:$0xf]
  %v211 = vld [vmem:[%s1 + $0x2b8] sm:$0xf]
  %v212 = vld [vmem:[%s1 + $0x2bc] sm:$0xf]
  %v213 = vld [vmem:[%s1 + $0x2c0] sm:$0xf]
  %v214 = vld [vmem:[%s1 + $0x2c4] sm:$0xf]
  %v215 = vld [vmem:[%s1 + $0x2c8] sm:$0xf]
  %v216 = vld [vmem:[%s1 + $0x2cc] sm:$0xf]
  %v217 = vld [vmem:[%s1 + $0x2d0] sm:$0xf]
  %v218 = vld [vmem:[%s1 + $0x2d4] sm:$0xf]
  %v219 = vld [vmem:[%s1 + $0x2d8] sm:$0xf]
  %v220 = vld [vmem:[%s1 + $0x2dc] sm:$0xf]
  %v221 = vld [vmem:[%s1 + $0x2e0] sm:$0xf]
  %v222 = vld [vmem:[%s1 + $0x2e4] sm:$0xf]
  %v223 = vld [vmem:[%s1 + $0x2e8] sm:$0xf]
  %v224 = vld [vmem:[%s1 + $0x2ec] sm:$0xf]
  %v225 = vld [vmem:[%s1 + $0x2f0] sm:$0xf]
  %v226 = vld [vmem:[%s1 + $0x2f4] sm:$0xf]
  %v227 = vld [vmem:[%s1 + $0x2f8] sm:$0xf]
  %v228 = vld [vmem:[%s1 + $0x2fc] sm:$0xf]
  %v229 = vld [vmem:[%s1 + $0x300] sm:$0xf]
  %v230 = vld [vmem:[%s1 + $0x304] sm:$0xf]
  %v231 = vld [vmem:[%s1 + $0x308] sm:$0xf]
  %v232 = vld [vmem:[%s1 + $0x30c] sm:$0xf]
  %v233 = vld [vmem:[%s1 + $0x310] sm:$0xf]
  %v234 = vld [vmem:[%s1 + $0x314] sm:$0xf]
  %v235 = vld [vmem:[%s1 + $0x318] sm:$0xf]
  %v236 = vld [vmem:[%s1 + $0x31c] sm:$0xf]
  %v237 = vld [vmem:[%s1 + $0x320] sm:$0xf]
  %v238 = vld [vmem:[%s1 + $0x324] sm:$0xf]
  %v239 = vld [vmem:[%s1 + $0x328] sm:$0xf]
  %v240 = vld [vmem:[%s1 + $0x32c] sm:$0xf]
  %v241 = vld [vmem:[%s1 + $0x330] sm:$0xf]
  %v242 = vld [vmem:[%s1 + $0x334] sm:$0xf]
  %v243 = vld [vmem:[%s1 + $0x338] sm:$0xf]
  %v244 = vld [vmem:[%s1 + $0x33c] sm:$0xf]
  %v245 = vld [vmem:[%s1 + $0x340] sm:$0xf]
  %v246 = vld [vmem:[%s1 + $0x344] sm:$0xf]
  %v247 = vld [vmem:[%s1 + $0x348] sm:$0xf]
  %v248 = vld [vmem:[%s1 + $0x34c] sm:$0xf]
  %v249 = vld [vmem:[%s1 + $0x350] sm:$0xf]
  %v250 = vld [vmem:[%s1 + $0x354] sm:$0xf]
  %v251 = vld [vmem:[%s1 + $0x358] sm:$0xf]
  %v252 = vld [vmem:[%s1 + $0x35c] sm:$0xf]
  %v253 = vld [vmem:[%s1 + $0x360] sm:$0xf]
  %v254 = vld [vmem:[%s1 + $0x364] sm:$0xf]
  %v255 = vld [vmem:[%s1 + $0x368] sm:$0xf]
  %v256 = vld [vmem:[%s1 + $0x36c] sm:$0xf]
  %v257 = vld [vmem:[%s1 + $0x370] sm:$0xf]
  %v258 = vld [vmem:[%s1 + $0x374] sm:$0xf]
  %v259 = vld [vmem:[%s1 + $0x378] sm:$0xf]
  %v260 = vld [vmem:[%s1 + $0x37c] sm:$0xf]
  %v261 = vld [vmem:[%s1 + $0x380] sm:$0xf]
  %v262 = vld [vmem:[%s1 + $0x384] sm:$0xf]
  %v263 = vld [vmem:[%s1 + $0x388] sm:$0xf]
  %v264 = vld [vmem:[%s1 + $0x38c] sm:$0xf]
  %v265 = vld [vmem:[%s1 + $0x390] sm:$0xf]
  %v266 = vld [vmem:[%s1 + $0x394] sm:$0xf]
  %v267 = vld [vmem:[%s1 + $0x398] sm:$0xf]
  %v268 = vld [vmem:[%s1 + $0x39c] sm:$0xf]
  %v269 = vld [vmem:[%s1 + $0x3a0] sm:$0xf]
  %v270 = vld [vmem:[%s1 + $0x3a4] sm:$0xf]
  %v271 = vld [vmem:[%s1 + $0x3a8] sm:$0xf]
  %v272 = vld [vmem:[%s1 + $0x3ac] sm:$0xf]
  %v273 = vld [vmem:[%s1 + $0x3b0] sm:$0xf]
  %v274 = vld [vmem:[%s1 + $0x3b4] sm:$0xf]
  %v275 = vld [vmem:[%s1 + $0x3b8] sm:$0xf]
  %v276 = vld [vmem:[%s1 + $0x3bc] sm:$0xf]
  %v277 = vld [vmem:[%s1 + $0x3c0] sm:$0xf]
  %v278 = vld [vmem:[%s1 + $0x3c4] sm:$0xf]
  %v279 = vld [vmem:[%s1 + $0x3c8] sm:$0xf]
  %v280 = vld [vmem:[%s1 + $0x3cc] sm:$0xf]
  %v281 = vld [vmem:[%s1 + $0x3d0] sm:$0xf]
  %v282 = vld [vmem:[%s1 + $0x3d4] sm:$0xf]
  %v283 = vld [vmem:[%s1 + $0x3d8] sm:$0xf]
  %v284 = vld [vmem:[%s1 + $0x3dc] sm:$0xf]
  %v285 = vld [vmem:[%s1 + $0x3e0] sm:$0xf]
  %v286 = vld [vmem:[%s1 + $0x3e4] sm:$0xf]
  %v287 = vld [vmem:[%s1 + $0x3e8] sm:$0xf]
  %v288 = vld [vmem:[%s1 + $0x3ec] sm:$0xf]
  %v289 = vld [vmem:[%s1 + $0x3f0] sm:$0xf]
  %v290 = vld [vmem:[%s1 + $0x3f4] sm:$0xf]
  %v291 = vld [vmem:[%s1 + $0x3f8] sm:$0xf]
  %v292 = vld [vmem:[%s1 + $0x3fc] sm:$0xf]
  %v293 = vld [vmem:[%s2] sm:$0x1]
  %v295 = vlaneseq
  %v296 = vshrl.u32 %v295, 7
  %v297 = vsub.s32 0, %v296
  %v298 = vrot.slane %v293, %v297
  %v316 = vunpack.c.l.b16 %v21
  %v317 = vunpack.c.h.b16 %v21
  %v318 = vunpack.c.l.b16 %v22
  %v319 = vunpack.c.h.b16 %v22
  %v320 = vunpack.c.l.b16 %v23
  %v321 = vunpack.c.h.b16 %v23
  %v322 = vunpack.c.l.b16 %v24
  %v323 = vunpack.c.h.b16 %v24
  %v324 = vunpack.c.l.b16 %v25
  %v325 = vunpack.c.h.b16 %v25
  %v326 = vunpack.c.l.b16 %v26
  %v327 = vunpack.c.h.b16 %v26
  %v328 = vunpack.c.l.b16 %v27
  %v329 = vunpack.c.h.b16 %v27
  %v330 = vunpack.c.l.b16 %v28
  %v331 = vunpack.c.h.b16 %v28
  %v332 = vunpack.c.l.b16 %v29
  %v333 = vunpack.c.h.b16 %v29
  %v334 = vunpack.c.l.b16 %v30
  %v335 = vunpack.c.h.b16 %v30
  %v336 = vunpack.c.l.b16 %v31
  %v337 = vunpack.c.h.b16 %v31
  %v338 = vunpack.c.l.b16 %v32
  %v339 = vunpack.c.h.b16 %v32
  %v340 = vunpack.c.l.b16 %v33
  %v341 = vunpack.c.h.b16 %v33
  %v342 = vunpack.c.l.b16 %v34
  %v343 = vunpack.c.h.b16 %v34
  %v344 = vunpack.c.l.b16 %v35
  %v345 = vunpack.c.h.b16 %v35
  %v346 = vunpack.c.l.b16 %v36
  %v347 = vunpack.c.h.b16 %v36
  %v348 = vpack.c.b16 %v332, %v316
  %v349 = vpack.c.b16 %v333, %v317
  %v350 = vpack.c.b16 %v334, %v318
  %v351 = vpack.c.b16 %v335, %v319
  %v352 = vpack.c.b16 %v336, %v320
  %v353 = vpack.c.b16 %v337, %v321
  %v354 = vpack.c.b16 %v338, %v322
  %v355 = vpack.c.b16 %v339, %v323
  %v356 = vpack.c.b16 %v340, %v324
  %v357 = vpack.c.b16 %v341, %v325
  %v358 = vpack.c.b16 %v342, %v326
  %v359 = vpack.c.b16 %v343, %v327
  %v360 = vpack.c.b16 %v344, %v328
  %v361 = vpack.c.b16 %v345, %v329
  %v362 = vpack.c.b16 %v346, %v330
  %v363 = vpack.c.b16 %v347, %v331
  %v636 = vunpack.c.l.b16 %v37
  %v637 = vunpack.c.l.b16 %v38
  %v638 = vunpack.c.l.b16 %v39
  %v639 = vunpack.c.l.b16 %v40
  %v640 = vunpack.c.l.b16 %v41
  %v641 = vunpack.c.l.b16 %v42
  %v642 = vunpack.c.l.b16 %v43
  %v643 = vunpack.c.l.b16 %v44
  %v644 = vunpack.c.l.b16 %v45
  %v645 = vunpack.c.l.b16 %v46
  %v646 = vunpack.c.l.b16 %v47
  %v647 = vunpack.c.l.b16 %v48
  %v648 = vunpack.c.l.b16 %v49
  %v649 = vunpack.c.l.b16 %v50
  %v650 = vunpack.c.l.b16 %v51
  %v651 = vunpack.c.l.b16 %v52
  %v652 = vunpack.c.l.b16 %v53
  %v653 = vunpack.c.l.b16 %v54
  %v654 = vunpack.c.l.b16 %v55
  %v655 = vunpack.c.l.b16 %v56
  %v656 = vunpack.c.l.b16 %v57
  %v657 = vunpack.c.l.b16 %v58
  %v658 = vunpack.c.l.b16 %v59
  %v659 = vunpack.c.l.b16 %v60
  %v660 = vunpack.c.l.b16 %v61
  %v661 = vunpack.c.l.b16 %v62
  %v662 = vunpack.c.l.b16 %v63
  %v663 = vunpack.c.l.b16 %v64
  %v664 = vunpack.c.l.b16 %v65
  %v665 = vunpack.c.l.b16 %v66
  %v666 = vunpack.c.l.b16 %v67
  %v667 = vunpack.c.l.b16 %v68
  %v668 = vunpack.c.l.b16 %v69
  %v669 = vunpack.c.l.b16 %v70
  %v670 = vunpack.c.l.b16 %v71
  %v671 = vunpack.c.l.b16 %v72
  %v672 = vunpack.c.l.b16 %v73
  %v673 = vunpack.c.l.b16 %v74
  %v674 = vunpack.c.l.b16 %v75
  %v675 = vunpack.c.l.b16 %v76
  %v676 = vunpack.c.l.b16 %v77
  %v677 = vunpack.c.l.b16 %v78
  %v678 = vunpack.c.l.b16 %v79
  %v679 = vunpack.c.l.b16 %v80
  %v680 = vunpack.c.l.b16 %v81
  %v681 = vunpack.c.l.b16 %v82
  %v682 = vunpack.c.l.b16 %v83
  %v683 = vunpack.c.l.b16 %v84
  %v684 = vunpack.c.l.b16 %v85
  %v685 = vunpack.c.l.b16 %v86
  %v686 = vunpack.c.l.b16 %v87
  %v687 = vunpack.c.l.b16 %v88
  %v688 = vunpack.c.l.b16 %v89
  %v689 = vunpack.c.l.b16 %v90
  %v690 = vunpack.c.l.b16 %v91
  %v691 = vunpack.c.l.b16 %v92
  %v692 = vunpack.c.l.b16 %v93
  %v693 = vunpack.c.l.b16 %v94
  %v694 = vunpack.c.l.b16 %v95
  %v695 = vunpack.c.l.b16 %v96
  %v696 = vunpack.c.l.b16 %v97
  %v697 = vunpack.c.l.b16 %v98
  %v698 = vunpack.c.l.b16 %v99
  %v699 = vunpack.c.l.b16 %v100
  %v700 = vunpack.c.l.b16 %v101
  %v701 = vunpack.c.l.b16 %v102
  %v702 = vunpack.c.l.b16 %v103
  %v703 = vunpack.c.l.b16 %v104
  %v704 = vunpack.c.l.b16 %v105
  %v705 = vunpack.c.l.b16 %v106
  %v706 = vunpack.c.l.b16 %v107
  %v707 = vunpack.c.l.b16 %v108
  %v708 = vunpack.c.l.b16 %v109
  %v709 = vunpack.c.l.b16 %v110
  %v710 = vunpack.c.l.b16 %v111
  %v711 = vunpack.c.l.b16 %v112
  %v712 = vunpack.c.l.b16 %v113
  %v713 = vunpack.c.l.b16 %v114
  %v714 = vunpack.c.l.b16 %v115
  %v715 = vunpack.c.l.b16 %v116
  %v716 = vunpack.c.l.b16 %v117
  %v717 = vunpack.c.l.b16 %v118
  %v718 = vunpack.c.l.b16 %v119
  %v719 = vunpack.c.l.b16 %v120
  %v720 = vunpack.c.l.b16 %v121
  %v721 = vunpack.c.l.b16 %v122
  %v722 = vunpack.c.l.b16 %v123
  %v723 = vunpack.c.l.b16 %v124
  %v724 = vunpack.c.l.b16 %v125
  %v725 = vunpack.c.l.b16 %v126
  %v726 = vunpack.c.l.b16 %v127
  %v727 = vunpack.c.l.b16 %v128
  %v728 = vunpack.c.l.b16 %v129
  %v729 = vunpack.c.l.b16 %v130
  %v730 = vunpack.c.l.b16 %v131
  %v731 = vunpack.c.l.b16 %v132
  %v732 = vunpack.c.l.b16 %v133
  %v733 = vunpack.c.l.b16 %v134
  %v734 = vunpack.c.l.b16 %v135
  %v735 = vunpack.c.l.b16 %v136
  %v736 = vunpack.c.l.b16 %v137
  %v737 = vunpack.c.l.b16 %v138
  %v738 = vunpack.c.l.b16 %v139
  %v739 = vunpack.c.l.b16 %v140
  %v740 = vunpack.c.l.b16 %v141
  %v741 = vunpack.c.l.b16 %v142
  %v742 = vunpack.c.l.b16 %v143
  %v743 = vunpack.c.l.b16 %v144
  %v744 = vunpack.c.l.b16 %v145
  %v745 = vunpack.c.l.b16 %v146
  %v746 = vunpack.c.l.b16 %v147
  %v747 = vunpack.c.l.b16 %v148
  %v748 = vunpack.c.l.b16 %v149
  %v749 = vunpack.c.l.b16 %v150
  %v750 = vunpack.c.l.b16 %v151
  %v751 = vunpack.c.l.b16 %v152
  %v752 = vunpack.c.l.b16 %v153
  %v753 = vunpack.c.l.b16 %v154
  %v754 = vunpack.c.l.b16 %v155
  %v755 = vunpack.c.l.b16 %v156
  %v756 = vunpack.c.l.b16 %v157
  %v757 = vunpack.c.l.b16 %v158
  %v758 = vunpack.c.l.b16 %v159
  %v759 = vunpack.c.l.b16 %v160
  %v760 = vunpack.c.l.b16 %v161
  %v761 = vunpack.c.l.b16 %v162
  %v762 = vunpack.c.l.b16 %v163
  %v763 = vunpack.c.l.b16 %v164
  %v764 = vunpack.c.l.b16 %v165
  %v765 = vunpack.c.l.b16 %v166
  %v766 = vunpack.c.l.b16 %v167
  %v767 = vunpack.c.l.b16 %v168
  %v768 = vunpack.c.l.b16 %v169
  %v769 = vunpack.c.l.b16 %v170
  %v770 = vunpack.c.l.b16 %v171
  %v771 = vunpack.c.l.b16 %v172
  %v772 = vunpack.c.l.b16 %v173
  %v773 = vunpack.c.l.b16 %v174
  %v774 = vunpack.c.l.b16 %v175
  %v775 = vunpack.c.l.b16 %v176
  %v776 = vunpack.c.l.b16 %v177
  %v777 = vunpack.c.l.b16 %v178
  %v778 = vunpack.c.l.b16 %v179
  %v779 = vunpack.c.l.b16 %v180
  %v780 = vunpack.c.l.b16 %v181
  %v781 = vunpack.c.l.b16 %v182
  %v782 = vunpack.c.l.b16 %v183
  %v783 = vunpack.c.l.b16 %v184
  %v784 = vunpack.c.l.b16 %v185
  %v785 = vunpack.c.l.b16 %v186
  %v786 = vunpack.c.l.b16 %v187
  %v787 = vunpack.c.l.b16 %v188
  %v788 = vunpack.c.l.b16 %v189
  %v789 = vunpack.c.l.b16 %v190
  %v790 = vunpack.c.l.b16 %v191
  %v791 = vunpack.c.l.b16 %v192
  %v792 = vunpack.c.l.b16 %v193
  %v793 = vunpack.c.l.b16 %v194
  %v794 = vunpack.c.l.b16 %v195
  %v795 = vunpack.c.l.b16 %v196
  %v796 = vunpack.c.l.b16 %v197
  %v797 = vunpack.c.l.b16 %v198
  %v798 = vunpack.c.l.b16 %v199
  %v799 = vunpack.c.l.b16 %v200
  %v800 = vunpack.c.l.b16 %v201
  %v801 = vunpack.c.l.b16 %v202
  %v802 = vunpack.c.l.b16 %v203
  %v803 = vunpack.c.l.b16 %v204
  %v804 = vunpack.c.l.b16 %v205
  %v805 = vunpack.c.l.b16 %v206
  %v806 = vunpack.c.l.b16 %v207
  %v807 = vunpack.c.l.b16 %v208
  %v808 = vunpack.c.l.b16 %v209
  %v809 = vunpack.c.l.b16 %v210
  %v810 = vunpack.c.l.b16 %v211
  %v811 = vunpack.c.l.b16 %v212
  %v812 = vunpack.c.l.b16 %v213
  %v813 = vunpack.c.l.b16 %v214
  %v814 = vunpack.c.l.b16 %v215
  %v815 = vunpack.c.l.b16 %v216
  %v816 = vunpack.c.l.b16 %v217
  %v817 = vunpack.c.l.b16 %v218
  %v818 = vunpack.c.l.b16 %v219
  %v819 = vunpack.c.l.b16 %v220
  %v820 = vunpack.c.l.b16 %v221
  %v821 = vunpack.c.l.b16 %v222
  %v822 = vunpack.c.l.b16 %v223
  %v823 = vunpack.c.l.b16 %v224
  %v824 = vunpack.c.l.b16 %v225
  %v825 = vunpack.c.l.b16 %v226
  %v826 = vunpack.c.l.b16 %v227
  %v827 = vunpack.c.l.b16 %v228
  %v828 = vunpack.c.l.b16 %v229
  %v829 = vunpack.c.l.b16 %v230
  %v830 = vunpack.c.l.b16 %v231
  %v831 = vunpack.c.l.b16 %v232
  %v832 = vunpack.c.l.b16 %v233
  %v833 = vunpack.c.l.b16 %v234
  %v834 = vunpack.c.l.b16 %v235
  %v835 = vunpack.c.l.b16 %v236
  %v836 = vunpack.c.l.b16 %v237
  %v837 = vunpack.c.l.b16 %v238
  %v838 = vunpack.c.l.b16 %v239
  %v839 = vunpack.c.l.b16 %v240
  %v840 = vunpack.c.l.b16 %v241
  %v841 = vunpack.c.l.b16 %v242
  %v842 = vunpack.c.l.b16 %v243
  %v843 = vunpack.c.l.b16 %v244
  %v844 = vunpack.c.l.b16 %v245
  %v845 = vunpack.c.l.b16 %v246
  %v846 = vunpack.c.l.b16 %v247
  %v847 = vunpack.c.l.b16 %v248
  %v848 = vunpack.c.l.b16 %v249
  %v849 = vunpack.c.l.b16 %v250
  %v850 = vunpack.c.l.b16 %v251
  %v851 = vunpack.c.l.b16 %v252
  %v852 = vunpack.c.l.b16 %v253
  %v853 = vunpack.c.l.b16 %v254
  %v854 = vunpack.c.l.b16 %v255
  %v855 = vunpack.c.l.b16 %v256
  %v856 = vunpack.c.l.b16 %v257
  %v857 = vunpack.c.l.b16 %v258
  %v858 = vunpack.c.l.b16 %v259
  %v859 = vunpack.c.l.b16 %v260
  %v860 = vunpack.c.l.b16 %v261
  %v861 = vunpack.c.l.b16 %v262
  %v862 = vunpack.c.l.b16 %v263
  %v863 = vunpack.c.l.b16 %v264
  %v864 = vunpack.c.l.b16 %v265
  %v865 = vunpack.c.l.b16 %v266
  %v866 = vunpack.c.l.b16 %v267
  %v867 = vunpack.c.l.b16 %v268
  %v868 = vunpack.c.l.b16 %v269
  %v869 = vunpack.c.l.b16 %v270
  %v870 = vunpack.c.l.b16 %v271
  %v871 = vunpack.c.l.b16 %v272
  %v872 = vunpack.c.l.b16 %v273
  %v873 = vunpack.c.l.b16 %v274
  %v874 = vunpack.c.l.b16 %v275
  %v875 = vunpack.c.l.b16 %v276
  %v876 = vunpack.c.l.b16 %v277
  %v877 = vunpack.c.l.b16 %v278
  %v878 = vunpack.c.l.b16 %v279
  %v879 = vunpack.c.l.b16 %v280
  %v880 = vunpack.c.l.b16 %v281
  %v881 = vunpack.c.l.b16 %v282
  %v882 = vunpack.c.l.b16 %v283
  %v883 = vunpack.c.l.b16 %v284
  %v884 = vunpack.c.l.b16 %v285
  %v885 = vunpack.c.l.b16 %v286
  %v886 = vunpack.c.l.b16 %v287
  %v887 = vunpack.c.l.b16 %v288
  %v888 = vunpack.c.l.b16 %v289
  %v889 = vunpack.c.l.b16 %v290
  %v890 = vunpack.c.l.b16 %v291
  %v891 = vunpack.c.l.b16 %v292
  %v892 = vpack.c.b16 %v637, %v636
  %v893 = vpack.c.b16 %v639, %v638
  %v894 = vpack.c.b16 %v641, %v640
  %v895 = vpack.c.b16 %v643, %v642
  %v896 = vpack.c.b16 %v645, %v644
  %v897 = vpack.c.b16 %v647, %v646
  %v898 = vpack.c.b16 %v649, %v648
  %v899 = vpack.c.b16 %v651, %v650
  %v900 = vpack.c.b16 %v653, %v652
  %v901 = vpack.c.b16 %v655, %v654
  %v902 = vpack.c.b16 %v657, %v656
  %v903 = vpack.c.b16 %v659, %v658
  %v904 = vpack.c.b16 %v661, %v660
  %v905 = vpack.c.b16 %v663, %v662
  %v906 = vpack.c.b16 %v665, %v664
  %v907 = vpack.c.b16 %v667, %v666
  %v908 = vpack.c.b16 %v669, %v668
  %v909 = vpack.c.b16 %v671, %v670
  %v910 = vpack.c.b16 %v673, %v672
  %v911 = vpack.c.b16 %v675, %v674
  %v912 = vpack.c.b16 %v677, %v676
  %v913 = vpack.c.b16 %v679, %v678
  %v914 = vpack.c.b16 %v681, %v680
  %v915 = vpack.c.b16 %v683, %v682
  %v916 = vpack.c.b16 %v685, %v684
  %v917 = vpack.c.b16 %v687, %v686
  %v918 = vpack.c.b16 %v689, %v688
  %v919 = vpack.c.b16 %v691, %v690
  %v920 = vpack.c.b16 %v693, %v692
  %v921 = vpack.c.b16 %v695, %v694
  %v922 = vpack.c.b16 %v697, %v696
  %v923 = vpack.c.b16 %v699, %v698
  %v924 = vpack.c.b16 %v701, %v700
  %v925 = vpack.c.b16 %v703, %v702
  %v926 = vpack.c.b16 %v705, %v704
  %v927 = vpack.c.b16 %v707, %v706
  %v928 = vpack.c.b16 %v709, %v708
  %v929 = vpack.c.b16 %v711, %v710
  %v930 = vpack.c.b16 %v713, %v712
  %v931 = vpack.c.b16 %v715, %v714
  %v932 = vpack.c.b16 %v717, %v716
  %v933 = vpack.c.b16 %v719, %v718
  %v934 = vpack.c.b16 %v721, %v720
  %v935 = vpack.c.b16 %v723, %v722
  %v936 = vpack.c.b16 %v725, %v724
  %v937 = vpack.c.b16 %v727, %v726
  %v938 = vpack.c.b16 %v729, %v728
  %v939 = vpack.c.b16 %v731, %v730
  %v940 = vpack.c.b16 %v733, %v732
  %v941 = vpack.c.b16 %v735, %v734
  %v942 = vpack.c.b16 %v737, %v736
  %v943 = vpack.c.b16 %v739, %v738
  %v944 = vpack.c.b16 %v741, %v740
  %v945 = vpack.c.b16 %v743, %v742
  %v946 = vpack.c.b16 %v745, %v744
  %v947 = vpack.c.b16 %v747, %v746
  %v948 = vpack.c.b16 %v749, %v748
  %v949 = vpack.c.b16 %v751, %v750
  %v950 = vpack.c.b16 %v753, %v752
  %v951 = vpack.c.b16 %v755, %v754
  %v952 = vpack.c.b16 %v757, %v756
  %v953 = vpack.c.b16 %v759, %v758
  %v954 = vpack.c.b16 %v761, %v760
  %v955 = vpack.c.b16 %v763, %v762
  %v956 = vpack.c.b16 %v765, %v764
  %v957 = vpack.c.b16 %v767, %v766
  %v958 = vpack.c.b16 %v769, %v768
  %v959 = vpack.c.b16 %v771, %v770
  %v960 = vpack.c.b16 %v773, %v772
  %v961 = vpack.c.b16 %v775, %v774
  %v962 = vpack.c.b16 %v777, %v776
  %v963 = vpack.c.b16 %v779, %v778
  %v964 = vpack.c.b16 %v781, %v780
  %v965 = vpack.c.b16 %v783, %v782
  %v966 = vpack.c.b16 %v785, %v784
  %v967 = vpack.c.b16 %v787, %v786
  %v968 = vpack.c.b16 %v789, %v788
  %v969 = vpack.c.b16 %v791, %v790
  %v970 = vpack.c.b16 %v793, %v792
  %v971 = vpack.c.b16 %v795, %v794
  %v972 = vpack.c.b16 %v797, %v796
  %v973 = vpack.c.b16 %v799, %v798
  %v974 = vpack.c.b16 %v801, %v800
  %v975 = vpack.c.b16 %v803, %v802
  %v976 = vpack.c.b16 %v805, %v804
  %v977 = vpack.c.b16 %v807, %v806
  %v978 = vpack.c.b16 %v809, %v808
  %v979 = vpack.c.b16 %v811, %v810
  %v980 = vpack.c.b16 %v813, %v812
  %v981 = vpack.c.b16 %v815, %v814
  %v982 = vpack.c.b16 %v817, %v816
  %v983 = vpack.c.b16 %v819, %v818
  %v984 = vpack.c.b16 %v821, %v820
  %v985 = vpack.c.b16 %v823, %v822
  %v986 = vpack.c.b16 %v825, %v824
  %v987 = vpack.c.b16 %v827, %v826
  %v988 = vpack.c.b16 %v829, %v828
  %v989 = vpack.c.b16 %v831, %v830
  %v990 = vpack.c.b16 %v833, %v832
  %v991 = vpack.c.b16 %v835, %v834
  %v992 = vpack.c.b16 %v837, %v836
  %v993 = vpack.c.b16 %v839, %v838
  %v994 = vpack.c.b16 %v841, %v840
  %v995 = vpack.c.b16 %v843, %v842
  %v996 = vpack.c.b16 %v845, %v844
  %v997 = vpack.c.b16 %v847, %v846
  %v998 = vpack.c.b16 %v849, %v848
  %v999 = vpack.c.b16 %v851, %v850
  %v1000 = vpack.c.b16 %v853, %v852
  %v1001 = vpack.c.b16 %v855, %v854
  %v1002 = vpack.c.b16 %v857, %v856
  %v1003 = vpack.c.b16 %v859, %v858
  %v1004 = vpack.c.b16 %v861, %v860
  %v1005 = vpack.c.b16 %v863, %v862
  %v1006 = vpack.c.b16 %v865, %v864
  %v1007 = vpack.c.b16 %v867, %v866
  %v1008 = vpack.c.b16 %v869, %v868
  %v1009 = vpack.c.b16 %v871, %v870
  %v1010 = vpack.c.b16 %v873, %v872
  %v1011 = vpack.c.b16 %v875, %v874
  %v1012 = vpack.c.b16 %v877, %v876
  %v1013 = vpack.c.b16 %v879, %v878
  %v1014 = vpack.c.b16 %v881, %v880
  %v1015 = vpack.c.b16 %v883, %v882
  %v1016 = vpack.c.b16 %v885, %v884
  %v1017 = vpack.c.b16 %v887, %v886
  %v1018 = vpack.c.b16 %v889, %v888
  %v1019 = vpack.c.b16 %v891, %v890
  %1148 = vmatprep.subr.bf16.mxu0 0
  %1149 = vmatpush1.bf16.msra.mxu0 %v899
  %1150 = vmatprep.subr.bf16.mxu0 0
  %1151 = vmatpush1.bf16.msra.mxu0 %v898
  %1152 = vmatprep.subr.bf16.mxu0 0
  %1153 = vmatpush1.bf16.msra.mxu0 %v897
  %1154 = vmatprep.subr.bf16.mxu0 0
  %1155 = vmatpush1.bf16.msra.mxu0 %v896
  %1156 = vmatprep.subr.bf16.mxu0 0
  %1157 = vmatpush1.bf16.msra.mxu0 %v895
  %1158 = vmatprep.subr.bf16.mxu0 0
  %1159 = vmatpush1.bf16.msra.mxu0 %v894
  %1160 = vmatprep.subr.bf16.mxu0 0
  %1161 = vmatpush1.bf16.msra.mxu0 %v893
  %1162 = vmatprep.subr.bf16.mxu0 0
  %1163 = vmatpush1.bf16.msra.mxu0 %v892
  %1164 = vmatprep.subr.bf16.mxu0 0
  %1165 = vmatpush2.bf16.msra.mxu0 %v907
  %1166 = vmatprep.subr.bf16.mxu0 0
  %1167 = vmatpush2.bf16.msra.mxu0 %v906
  %1168 = vmatprep.subr.bf16.mxu0 0
  %1169 = vmatpush2.bf16.msra.mxu0 %v905
  %1170 = vmatprep.subr.bf16.mxu0 0
  %1171 = vmatpush2.bf16.msra.mxu0 %v904
  %1172 = vmatprep.subr.bf16.mxu0 0
  %1173 = vmatpush2.bf16.msra.mxu0 %v903
  %1174 = vmatprep.subr.bf16.mxu0 0
  %1175 = vmatpush2.bf16.msra.mxu0 %v902
  %1176 = vmatprep.subr.bf16.mxu0 0
  %1177 = vmatpush2.bf16.msra.mxu0 %v901
  %1178 = vmatprep.subr.bf16.mxu0 0
  %1179 = vmatpush2.bf16.msra.mxu0 %v900
  %1180 = vmatprep.mubr.bf16.mxu0 %v349
  %1181 = vmatmul.mubr.bf16.gmra.mxu0 %v348
  %v1182 = vpop.f32.mrf.mxu0
  %v1183 = vadd.f32 %v298, %v1182
  %v1184 = vpop.f32.mrf.mxu0
  %v1185 = vpop.f32.mrf.mxu0
  %v1186 = vadd.f32 %v298, %v1185
  %v1187 = vpop.f32.mrf.mxu0
  %1188 = vdwg.mxu0
  %1189 = vmatprep.subr.bf16.mxu0 0
  %1190 = vmatpush1.bf16.msra.mxu0 %v915
  %1191 = vmatprep.subr.bf16.mxu0 0
  %1192 = vmatpush1.bf16.msra.mxu0 %v914
  %1193 = vmatprep.subr.bf16.mxu0 0
  %1194 = vmatpush1.bf16.msra.mxu0 %v913
  %1195 = vmatprep.subr.bf16.mxu0 0
  %1196 = vmatpush1.bf16.msra.mxu0 %v912
  %1197 = vmatprep.subr.bf16.mxu0 0
  %1198 = vmatpush1.bf16.msra.mxu0 %v911
  %1199 = vmatprep.subr.bf16.mxu0 0
  %1200 = vmatpush1.bf16.msra.mxu0 %v910
  %1201 = vmatprep.subr.bf16.mxu0 0
  %1202 = vmatpush1.bf16.msra.mxu0 %v909
  %1203 = vmatprep.subr.bf16.mxu0 0
  %1204 = vmatpush1.bf16.msra.mxu0 %v908
  %1205 = vmatprep.subr.bf16.mxu0 0
  %1206 = vmatpush2.bf16.msra.mxu0 %v923
  %1207 = vmatprep.subr.bf16.mxu0 0
  %1208 = vmatpush2.bf16.msra.mxu0 %v922
  %1209 = vmatprep.subr.bf16.mxu0 0
  %1210 = vmatpush2.bf16.msra.mxu0 %v921
  %1211 = vmatprep.subr.bf16.mxu0 0
  %1212 = vmatpush2.bf16.msra.mxu0 %v920
  %1213 = vmatprep.subr.bf16.mxu0 0
  %1214 = vmatpush2.bf16.msra.mxu0 %v919
  %1215 = vmatprep.subr.bf16.mxu0 0
  %1216 = vmatpush2.bf16.msra.mxu0 %v918
  %1217 = vmatprep.subr.bf16.mxu0 0
  %1218 = vmatpush2.bf16.msra.mxu0 %v917
  %1219 = vmatprep.subr.bf16.mxu0 0
  %1220 = vmatpush2.bf16.msra.mxu0 %v916
  %1221 = vmatprep.mubr.bf16.mxu0 %v351
  %1222 = vmatmul.mubr.bf16.gmra.mxu0 %v350
  %v1223 = vpop.f32.mrf.mxu0
  %v1224 = vadd.f32 %v1183, %v1223
  %v1225 = vpop.f32.mrf.mxu0
  %v1226 = vpop.f32.mrf.mxu0
  %v1227 = vadd.f32 %v1186, %v1226
  %v1228 = vpop.f32.mrf.mxu0
  %1229 = vdwg.mxu0
  %1230 = vmatprep.subr.bf16.mxu0 0
  %1231 = vmatpush1.bf16.msra.mxu0 %v931
  %1232 = vmatprep.subr.bf16.mxu0 0
  %1233 = vmatpush1.bf16.msra.mxu0 %v930
  %1234 = vmatprep.subr.bf16.mxu0 0
  %1235 = vmatpush1.bf16.msra.mxu0 %v929
  %1236 = vmatprep.subr.bf16.mxu0 0
  %1237 = vmatpush1.bf16.msra.mxu0 %v928
  %1238 = vmatprep.subr.bf16.mxu0 0
  %1239 = vmatpush1.bf16.msra.mxu0 %v927
  %1240 = vmatprep.subr.bf16.mxu0 0
  %1241 = vmatpush1.bf16.msra.mxu0 %v926
  %1242 = vmatprep.subr.bf16.mxu0 0
  %1243 = vmatpush1.bf16.msra.mxu0 %v925
  %1244 = vmatprep.subr.bf16.mxu0 0
  %1245 = vmatpush1.bf16.msra.mxu0 %v924
  %1246 = vmatprep.subr.bf16.mxu0 0
  %1247 = vmatpush2.bf16.msra.mxu0 %v939
  %1248 = vmatprep.subr.bf16.mxu0 0
  %1249 = vmatpush2.bf16.msra.mxu0 %v938
  %1250 = vmatprep.subr.bf16.mxu0 0
  %1251 = vmatpush2.bf16.msra.mxu0 %v937
  %1252 = vmatprep.subr.bf16.mxu0 0
  %1253 = vmatpush2.bf16.msra.mxu0 %v936
  %1254 = vmatprep.subr.bf16.mxu0 0
  %1255 = vmatpush2.bf16.msra.mxu0 %v935
  %1256 = vmatprep.subr.bf16.mxu0 0
  %1257 = vmatpush2.bf16.msra.mxu0 %v934
  %1258 = vmatprep.subr.bf16.mxu0 0
  %1259 = vmatpush2.bf16.msra.mxu0 %v933
  %1260 = vmatprep.subr.bf16.mxu0 0
  %1261 = vmatpush2.bf16.msra.mxu0 %v932
  %1262 = vmatprep.mubr.bf16.mxu0 %v353
  %1263 = vmatmul.mubr.bf16.gmra.mxu0 %v352
  %v1264 = vpop.f32.mrf.mxu0
  %v1265 = vadd.f32 %v1224, %v1264
  %v1266 = vpop.f32.mrf.mxu0
  %v1267 = vpop.f32.mrf.mxu0
  %v1268 = vadd.f32 %v1227, %v1267
  %v1269 = vpop.f32.mrf.mxu0
  %1270 = vdwg.mxu0
  %1271 = vmatprep.subr.bf16.mxu0 0
  %1272 = vmatpush1.bf16.msra.mxu0 %v947
  %1273 = vmatprep.subr.bf16.mxu0 0
  %1274 = vmatpush1.bf16.msra.mxu0 %v946
  %1275 = vmatprep.subr.bf16.mxu0 0
  %1276 = vmatpush1.bf16.msra.mxu0 %v945
  %1277 = vmatprep.subr.bf16.mxu0 0
  %1278 = vmatpush1.bf16.msra.mxu0 %v944
  %1279 = vmatprep.subr.bf16.mxu0 0
  %1280 = vmatpush1.bf16.msra.mxu0 %v943
  %1281 = vmatprep.subr.bf16.mxu0 0
  %1282 = vmatpush1.bf16.msra.mxu0 %v942
  %1283 = vmatprep.subr.bf16.mxu0 0
  %1284 = vmatpush1.bf16.msra.mxu0 %v941
  %1285 = vmatprep.subr.bf16.mxu0 0
  %1286 = vmatpush1.bf16.msra.mxu0 %v940
  %1287 = vmatprep.subr.bf16.mxu0 0
  %1288 = vmatpush2.bf16.msra.mxu0 %v955
  %1289 = vmatprep.subr.bf16.mxu0 0
  %1290 = vmatpush2.bf16.msra.mxu0 %v954
  %1291 = vmatprep.subr.bf16.mxu0 0
  %1292 = vmatpush2.bf16.msra.mxu0 %v953
  %1293 = vmatprep.subr.bf16.mxu0 0
  %1294 = vmatpush2.bf16.msra.mxu0 %v952
  %1295 = vmatprep.subr.bf16.mxu0 0
  %1296 = vmatpush2.bf16.msra.mxu0 %v951
  %1297 = vmatprep.subr.bf16.mxu0 0
  %1298 = vmatpush2.bf16.msra.mxu0 %v950
  %1299 = vmatprep.subr.bf16.mxu0 0
  %1300 = vmatpush2.bf16.msra.mxu0 %v949
  %1301 = vmatprep.subr.bf16.mxu0 0
  %1302 = vmatpush2.bf16.msra.mxu0 %v948
  %1303 = vmatprep.mubr.bf16.mxu0 %v355
  %1304 = vmatmul.mubr.bf16.gmra.mxu0 %v354
  %v1305 = vpop.f32.mrf.mxu0
  %v1306 = vadd.f32 %v1265, %v1305
  %v1307 = vpop.f32.mrf.mxu0
  %v1308 = vpop.f32.mrf.mxu0
  %v1309 = vadd.f32 %v1268, %v1308
  %v1310 = vpop.f32.mrf.mxu0
  %1311 = vdwg.mxu0
  %1312 = vmatprep.subr.bf16.mxu0 0
  %1313 = vmatpush1.bf16.msra.mxu0 %v963
  %1314 = vmatprep.subr.bf16.mxu0 0
  %1315 = vmatpush1.bf16.msra.mxu0 %v962
  %1316 = vmatprep.subr.bf16.mxu0 0
  %1317 = vmatpush1.bf16.msra.mxu0 %v961
  %1318 = vmatprep.subr.bf16.mxu0 0
  %1319 = vmatpush1.bf16.msra.mxu0 %v960
  %1320 = vmatprep.subr.bf16.mxu0 0
  %1321 = vmatpush1.bf16.msra.mxu0 %v959
  %1322 = vmatprep.subr.bf16.mxu0 0
  %1323 = vmatpush1.bf16.msra.mxu0 %v958
  %1324 = vmatprep.subr.bf16.mxu0 0
  %1325 = vmatpush1.bf16.msra.mxu0 %v957
  %1326 = vmatprep.subr.bf16.mxu0 0
  %1327 = vmatpush1.bf16.msra.mxu0 %v956
  %1328 = vmatprep.subr.bf16.mxu0 0
  %1329 = vmatpush2.bf16.msra.mxu0 %v971
  %1330 = vmatprep.subr.bf16.mxu0 0
  %1331 = vmatpush2.bf16.msra.mxu0 %v970
  %1332 = vmatprep.subr.bf16.mxu0 0
  %1333 = vmatpush2.bf16.msra.mxu0 %v969
  %1334 = vmatprep.subr.bf16.mxu0 0
  %1335 = vmatpush2.bf16.msra.mxu0 %v968
  %1336 = vmatprep.subr.bf16.mxu0 0
  %1337 = vmatpush2.bf16.msra.mxu0 %v967
  %1338 = vmatprep.subr.bf16.mxu0 0
  %1339 = vmatpush2.bf16.msra.mxu0 %v966
  %1340 = vmatprep.subr.bf16.mxu0 0
  %1341 = vmatpush2.bf16.msra.mxu0 %v965
  %1342 = vmatprep.subr.bf16.mxu0 0
  %1343 = vmatpush2.bf16.msra.mxu0 %v964
  %1344 = vmatprep.mubr.bf16.mxu0 %v357
  %1345 = vmatmul.mubr.bf16.gmra.mxu0 %v356
  %v1346 = vpop.f32.mrf.mxu0
  %v1347 = vadd.f32 %v1306, %v1346
  %v1348 = vpop.f32.mrf.mxu0
  %v1349 = vpop.f32.mrf.mxu0
  %v1350 = vadd.f32 %v1309, %v1349
  %v1351 = vpop.f32.mrf.mxu0
  %1352 = vdwg.mxu0
  %1353 = vmatprep.subr.bf16.mxu0 0
  %1354 = vmatpush1.bf16.msra.mxu0 %v979
  %1355 = vmatprep.subr.bf16.mxu0 0
  %1356 = vmatpush1.bf16.msra.mxu0 %v978
  %1357 = vmatprep.subr.bf16.mxu0 0
  %1358 = vmatpush1.bf16.msra.mxu0 %v977
  %1359 = vmatprep.subr.bf16.mxu0 0
  %1360 = vmatpush1.bf16.msra.mxu0 %v976
  %1361 = vmatprep.subr.bf16.mxu0 0
  %1362 = vmatpush1.bf16.msra.mxu0 %v975
  %1363 = vmatprep.subr.bf16.mxu0 0
  %1364 = vmatpush1.bf16.msra.mxu0 %v974
  %1365 = vmatprep.subr.bf16.mxu0 0
  %1366 = vmatpush1.bf16.msra.mxu0 %v973
  %1367 = vmatprep.subr.bf16.mxu0 0
  %1368 = vmatpush1.bf16.msra.mxu0 %v972
  %1369 = vmatprep.subr.bf16.mxu0 0
  %1370 = vmatpush2.bf16.msra.mxu0 %v987
  %1371 = vmatprep.subr.bf16.mxu0 0
  %1372 = vmatpush2.bf16.msra.mxu0 %v986
  %1373 = vmatprep.subr.bf16.mxu0 0
  %1374 = vmatpush2.bf16.msra.mxu0 %v985
  %1375 = vmatprep.subr.bf16.mxu0 0
  %1376 = vmatpush2.bf16.msra.mxu0 %v984
  %1377 = vmatprep.subr.bf16.mxu0 0
  %1378 = vmatpush2.bf16.msra.mxu0 %v983
  %1379 = vmatprep.subr.bf16.mxu0 0
  %1380 = vmatpush2.bf16.msra.mxu0 %v982
  %1381 = vmatprep.subr.bf16.mxu0 0
  %1382 = vmatpush2.bf16.msra.mxu0 %v981
  %1383 = vmatprep.subr.bf16.mxu0 0
  %1384 = vmatpush2.bf16.msra.mxu0 %v980
  %1385 = vmatprep.mubr.bf16.mxu0 %v359
  %1386 = vmatmul.mubr.bf16.gmra.mxu0 %v358
  %v1387 = vpop.f32.mrf.mxu0
  %v1388 = vadd.f32 %v1347, %v1387
  %v1389 = vpop.f32.mrf.mxu0
  %v1390 = vpop.f32.mrf.mxu0
  %v1391 = vadd.f32 %v1350, %v1390
  %v1392 = vpop.f32.mrf.mxu0
  %1393 = vdwg.mxu0
  %1394 = vmatprep.subr.bf16.mxu0 0
  %1395 = vmatpush1.bf16.msra.mxu0 %v995
  %1396 = vmatprep.subr.bf16.mxu0 0
  %1397 = vmatpush1.bf16.msra.mxu0 %v994
  %1398 = vmatprep.subr.bf16.mxu0 0
  %1399 = vmatpush1.bf16.msra.mxu0 %v993
  %1400 = vmatprep.subr.bf16.mxu0 0
  %1401 = vmatpush1.bf16.msra.mxu0 %v992
  %1402 = vmatprep.subr.bf16.mxu0 0
  %1403 = vmatpush1.bf16.msra.mxu0 %v991
  %1404 = vmatprep.subr.bf16.mxu0 0
  %1405 = vmatpush1.bf16.msra.mxu0 %v990
  %1406 = vmatprep.subr.bf16.mxu0 0
  %1407 = vmatpush1.bf16.msra.mxu0 %v989
  %1408 = vmatprep.subr.bf16.mxu0 0
  %1409 = vmatpush1.bf16.msra.mxu0 %v988
  %1410 = vmatprep.subr.bf16.mxu0 0
  %1411 = vmatpush2.bf16.msra.mxu0 %v1003
  %1412 = vmatprep.subr.bf16.mxu0 0
  %1413 = vmatpush2.bf16.msra.mxu0 %v1002
  %1414 = vmatprep.subr.bf16.mxu0 0
  %1415 = vmatpush2.bf16.msra.mxu0 %v1001
  %1416 = vmatprep.subr.bf16.mxu0 0
  %1417 = vmatpush2.bf16.msra.mxu0 %v1000
  %1418 = vmatprep.subr.bf16.mxu0 0
  %1419 = vmatpush2.bf16.msra.mxu0 %v999
  %1420 = vmatprep.subr.bf16.mxu0 0
  %1421 = vmatpush2.bf16.msra.mxu0 %v998
  %1422 = vmatprep.subr.bf16.mxu0 0
  %1423 = vmatpush2.bf16.msra.mxu0 %v997
  %1424 = vmatprep.subr.bf16.mxu0 0
  %1425 = vmatpush2.bf16.msra.mxu0 %v996
  %1426 = vmatprep.mubr.bf16.mxu0 %v361
  %1427 = vmatmul.mubr.bf16.gmra.mxu0 %v360
  %v1428 = vpop.f32.mrf.mxu0
  %v1429 = vadd.f32 %v1388, %v1428
  %v1430 = vpop.f32.mrf.mxu0
  %v1431 = vpop.f32.mrf.mxu0
  %v1432 = vadd.f32 %v1391, %v1431
  %v1433 = vpop.f32.mrf.mxu0
  %1434 = vdwg.mxu0
  %1435 = vmatprep.subr.bf16.mxu0 0
  %1436 = vmatpush1.bf16.msra.mxu0 %v1011
  %1437 = vmatprep.subr.bf16.mxu0 0
  %1438 = vmatpush1.bf16.msra.mxu0 %v1010
  %1439 = vmatprep.subr.bf16.mxu0 0
  %1440 = vmatpush1.bf16.msra.mxu0 %v1009
  %1441 = vmatprep.subr.bf16.mxu0 0
  %1442 = vmatpush1.bf16.msra.mxu0 %v1008
  %1443 = vmatprep.subr.bf16.mxu0 0
  %1444 = vmatpush1.bf16.msra.mxu0 %v1007
  %1445 = vmatprep.subr.bf16.mxu0 0
  %1446 = vmatpush1.bf16.msra.mxu0 %v1006
  %1447 = vmatprep.subr.bf16.mxu0 0
  %1448 = vmatpush1.bf16.msra.mxu0 %v1005
  %1449 = vmatprep.subr.bf16.mxu0 0
  %1450 = vmatpush1.bf16.msra.mxu0 %v1004
  %1451 = vmatprep.subr.bf16.mxu0 0
  %1452 = vmatpush2.bf16.msra.mxu0 %v1019
  %1453 = vmatprep.subr.bf16.mxu0 0
  %1454 = vmatpush2.bf16.msra.mxu0 %v1018
  %1455 = vmatprep.subr.bf16.mxu0 0
  %1456 = vmatpush2.bf16.msra.mxu0 %v1017
  %1457 = vmatprep.subr.bf16.mxu0 0
  %1458 = vmatpush2.bf16.msra.mxu0 %v1016
  %1459 = vmatprep.subr.bf16.mxu0 0
  %1460 = vmatpush2.bf16.msra.mxu0 %v1015
  %1461 = vmatprep.subr.bf16.mxu0 0
  %1462 = vmatpush2.bf16.msra.mxu0 %v1014
  %1463 = vmatprep.subr.bf16.mxu0 0
  %1464 = vmatpush2.bf16.msra.mxu0 %v1013
  %1465 = vmatprep.subr.bf16.mxu0 0
  %1466 = vmatpush2.bf16.msra.mxu0 %v1012
  %1467 = vmatprep.mubr.bf16.mxu0 %v363
  %1468 = vmatmul.mubr.bf16.gmra.mxu0 %v362
  %v1469 = vpop.f32.mrf.mxu0
  %v1470 = vadd.f32 %v1429, %v1469
  %v1471 = vpop.f32.mrf.mxu0
  %v1472 = vpop.f32.mrf.mxu0
  %v1473 = vadd.f32 %v1432, %v1472
  %v1474 = vpop.f32.mrf.mxu0
  %1475 = vdwg.mxu0
  %v1476 = vmax.f32 %v1470, 0.0
  %v1477 = vmax.f32 %v1473, 0.0
  %v1478 = vld [vmem:[%s3] sm:$0xff]
  %v1479 = vld [vmem:[%s3 + $0x8] sm:$0xff]
  %v1480 = vld [vmem:[%s3 + $0x10] sm:$0xff]
  %v1481 = vld [vmem:[%s3 + $0x18] sm:$0xff]
  %v1482 = vld [vmem:[%s3 + $0x20] sm:$0xff]
  %v1483 = vld [vmem:[%s3 + $0x28] sm:$0xff]
  %v1484 = vld [vmem:[%s3 + $0x30] sm:$0xff]
  %v1485 = vld [vmem:[%s3 + $0x38] sm:$0xff]
  %v1486 = vld [vmem:[%s3 + $0x40] sm:$0xff]
  %v1487 = vld [vmem:[%s3 + $0x48] sm:$0xff]
  %v1488 = vld [vmem:[%s3 + $0x50] sm:$0xff]
  %v1489 = vld [vmem:[%s3 + $0x58] sm:$0xff]
  %v1490 = vld [vmem:[%s3 + $0x60] sm:$0xff]
  %v1491 = vld [vmem:[%s3 + $0x68] sm:$0xff]
  %v1492 = vld [vmem:[%s3 + $0x70] sm:$0xff]
  %v1493 = vld [vmem:[%s3 + $0x78] sm:$0xff]
  %v1494 = vld [vmem:[%s4] sm:$0x1]
  %v1496 = vlaneseq
  %v1497 = vshrl.u32 %v1496, 7
  %v1498 = vsub.s32 0, %v1497
  %v1499 = vrot.slane %v1494, %v1498
  %1501 = vmatprep.subr.mxu0 0.0
  %1502 = vmatpush1.msra.mxu0 %v1493
  %1503 = vmatprep.subr.mxu0 0.0
  %1504 = vmatpush1.msra.mxu0 %v1492
  %1505 = vmatprep.subr.mxu0 0.0
  %1506 = vmatpush1.msra.mxu0 %v1491
  %1507 = vmatprep.subr.mxu0 0.0
  %1508 = vmatpush1.msra.mxu0 %v1490
  %1509 = vmatprep.subr.mxu0 0.0
  %1510 = vmatpush1.msra.mxu0 %v1489
  %1511 = vmatprep.subr.mxu0 0.0
  %1512 = vmatpush1.msra.mxu0 %v1488
  %1513 = vmatprep.subr.mxu0 0.0
  %1514 = vmatpush1.msra.mxu0 %v1487
  %1515 = vmatprep.subr.mxu0 0.0
  %1516 = vmatpush1.msra.mxu0 %v1486
  %1517 = vmatprep.subr.mxu0 0.0
  %1518 = vmatpush1.msra.mxu0 %v1485
  %1519 = vmatprep.subr.mxu0 0.0
  %1520 = vmatpush1.msra.mxu0 %v1484
  %1521 = vmatprep.subr.mxu0 0.0
  %1522 = vmatpush1.msra.mxu0 %v1483
  %1523 = vmatprep.subr.mxu0 0.0
  %1524 = vmatpush1.msra.mxu0 %v1482
  %1525 = vmatprep.subr.mxu0 0.0
  %1526 = vmatpush1.msra.mxu0 %v1481
  %1527 = vmatprep.subr.mxu0 0.0
  %1528 = vmatpush1.msra.mxu0 %v1480
  %1529 = vmatprep.subr.mxu0 0.0
  %1530 = vmatpush1.msra.mxu0 %v1479
  %1531 = vmatprep.subr.mxu0 0.0
  %1532 = vmatpush1.msra.mxu0 %v1478
  %1533 = vmatprep.subr.mxu0 0.0
  %1534 = vmatpush2.msra.mxu0 0.0
  %1535 = vmatprep.subr.mxu0 0.0
  %1536 = vmatpush2.msra.mxu0 0.0
  %1537 = vmatprep.subr.mxu0 0.0
  %1538 = vmatpush2.msra.mxu0 0.0
  %1539 = vmatprep.subr.mxu0 0.0
  %1540 = vmatpush2.msra.mxu0 0.0
  %1541 = vmatprep.subr.mxu0 0.0
  %1542 = vmatpush2.msra.mxu0 0.0
  %1543 = vmatprep.subr.mxu0 0.0
  %1544 = vmatpush2.msra.mxu0 0.0
  %1545 = vmatprep.subr.mxu0 0.0
  %1546 = vmatpush2.msra.mxu0 0.0
  %1547 = vmatprep.subr.mxu0 0.0
  %1548 = vmatpush2.msra.mxu0 0.0
  %1549 = vmatprep.subr.mxu0 0.0
  %1550 = vmatpush2.msra.mxu0 0.0
  %1551 = vmatprep.subr.mxu0 0.0
  %1552 = vmatpush2.msra.mxu0 0.0
  %1553 = vmatprep.subr.mxu0 0.0
  %1554 = vmatpush2.msra.mxu0 0.0
  %1555 = vmatprep.subr.mxu0 0.0
  %1556 = vmatpush2.msra.mxu0 0.0
  %1557 = vmatprep.subr.mxu0 0.0
  %1558 = vmatpush2.msra.mxu0 0.0
  %1559 = vmatprep.subr.mxu0 0.0
  %1560 = vmatpush2.msra.mxu0 0.0
  %1561 = vmatprep.subr.mxu0 0.0
  %1562 = vmatpush2.msra.mxu0 0.0
  %1563 = vmatprep.subr.mxu0 0.0
  %1564 = vmatpush2.msra.mxu0 0.0
  %1565 = vmatprep.mubr.f32.mxu0 0.0
  %1566 = vmatmul.mubr.f32.gmra.mxu0 %v1476
  %v1567 = vpop.f32.mrf.mxu0
  %v1568 = vadd.f32 %v1499, %v1567
  %v1569 = vpop.f32.mrf.mxu0
  %1570 = vmatprep.mubr.f32.mxu0 0.0
  %1571 = vmatmul.mubr.f32.gmra.mxu0 %v1477
  %v1572 = vpop.f32.mrf.mxu0
  %v1573 = vadd.f32 %v1499, %v1572
  %v1574 = vpop.f32.mrf.mxu0
  %1575 = vdwg.mxu0
  %1576 = vst [vmem:[%s5] sm:$0xff] %v1568
  %1577 = vst [vmem:[%s5 + $0x8] sm:$0xff] %v1573
  // Predicated region
  $region22: #{net_entk_forward.7} parent=0 // pred_check
    _
  $region23: #{net_entk_forward.7} parent=0 // pred_check_branch
    %1579 = sbr.rel (0) target = $region25
  $region24: #{net_entk_forward.7} parent=0 // pred_region
    _
  $region25: #{net_entk_forward.7} parent=0 // pred_fallthru
    _
  // Predicated region
  $region26: #{net_entk_forward.7} parent=0 // pred_check
    _
  $region27: #{net_entk_forward.7} parent=0 // pred_check_branch
    %1581 = sbr.rel (0) target = $region29
  $region28: #{net_entk_forward.7} parent=0 // pred_region
    _
  $region29: #{net_entk_forward.7} parent=0 // pred_fallthru
    _

</llo_original>
